<compile_context>
chip_gen: v7x
topology: tpu7x:2x2x1
jax: 0.10.0
libtpu: 0.0.40
codegen_flags: <defaults>
</compile_context>

<pallas_src>
import functools

import jax
import jax.numpy as jnp
from jax.experimental import pallas as pl
from jax.experimental.pallas import tpu as pltpu


def _round_up(x, m):
    return ((x + m - 1) // m) * m


def _postnet_fused_kernel(x_hbm, w_ref, scale_ref, bias_ref, o_ref,
                          buf0, buf1, dma_sem, *,
                          n_conv, K, T, t_tile, win, halo, guard):
    """Fused Conv1d+BN(+tanh) stack for one (batch, time-tile) grid point.

    x_hbm:     (B, Lp, C) bf16 in HBM (ANY)  - time/channel zero-padded input
    w_ref:     (n_conv, K, C, C) bf16        - conv taps, (tap, Cin, Cout) layout
    scale_ref: (n_conv, 1, C) f32            - gamma / sqrt(var + eps)   (0 on padded ch)
    bias_ref:  (n_conv, 1, C) f32            - beta + (conv_b - mean) * scale
    o_ref:     (1, t_tile, C)                - output tile
    buf0/buf1: (win + 2*guard, C) bf16       - VMEM ping-pong activation buffers
    """
    C = w_ref.shape[-1]
    pad = (K - 1) // 2

    b = pl.program_id(0)
    t0 = pl.multiple_of(pl.program_id(1) * t_tile, 8)

    # Fetch this tile's input window (tile + fused halo) straight from HBM.
    cp = pltpu.make_async_copy(
        x_hbm.at[b, pl.ds(t0, win), :],
        buf0.at[pl.ds(guard, win), :],
        dma_sem.at[0],
    )
    cp.start()

    # Zero the guard rows of both buffers (disjoint from the DMA destination rows).
    zero_g = jnp.zeros((guard, C), buf0.dtype)
    buf0[0:guard, :] = zero_g
    buf0[guard + win:, :] = zero_g
    buf1[0:guard, :] = zero_g
    buf1[guard + win:, :] = zero_g

    # Mask of window rows that lie inside the real sequence [0, T): used to re-apply the
    # per-layer zero padding at the sequence boundaries to every intermediate.
    rows = jax.lax.broadcasted_iota(jnp.int32, (win, 1), 0)
    tpos = t0 - halo + rows
    in_seq = (tpos >= 0) & (tpos < T)

    cp.wait()

    bufs = (buf0, buf1)
    for l in range(n_conv):
        src = bufs[l % 2]
        acc = jnp.zeros((win, C), jnp.float32)
        # Conv1d as K shifted matmuls (K is small & static -> fully unrolled MXU pushes).
        for k in range(K):
            start = guard - pad + k
            acc = acc + jnp.dot(src[start:start + win, :], w_ref[l, k],
                                preferred_element_type=jnp.float32)
        y = acc * scale_ref[l] + bias_ref[l]          # folded conv-bias + BatchNorm (f32)
        if l < n_conv - 1:
            y = jnp.tanh(y)
            y = jnp.where(in_seq, y, 0.0)             # zero padding for the next conv
            bufs[(l + 1) % 2][guard:guard + win, :] = y.astype(buf0.dtype)
        else:
            # dropout(p=0.5, training=False) == identity.
            o_ref[0, :, :] = y[halo:halo + t_tile, :].astype(o_ref.dtype)


def postnet_forward(x, params, *, kernel_size, eps=1e-5, time_tile=256):
    """x: (B, T, n_mel) -> (B, T, n_mel). Matches Postnet.forward in eval mode."""
    B, T, n_mel_in = x.shape
    K = kernel_size
    pad = (K - 1) // 2
    n_conv = len(params)
    n_mel_out = params[-1]["w"].shape[0]

    # Common lane-padded channel width.
    dims = [n_mel_in] + [p["w"].shape[0] for p in params]
    C = max(_round_up(d, 128) for d in dims)

    # Time tiling: tile size multiple of 8, halo covers the whole fused conv stack (+margin).
    t_tile = min(_round_up(time_tile, 8), _round_up(T, 8))
    nT = pl.cdiv(T, t_tile)
    halo = pad * (n_conv + 1)          # >= pad*n_conv needed; +pad safety margin
    guard = max(8, _round_up(pad, 8))  # sublane-aligned zero guard rows on each buffer edge
    win = t_tile + 2 * halo
    buf_rows = win + 2 * guard

    # Fold conv bias + BN(eval) into per-channel scale/bias; zero-pad channels; bf16 weights.
    w_all = jnp.zeros((n_conv, K, C, C), jnp.float32)
    scale_all = jnp.zeros((n_conv, 1, C), jnp.float32)
    bias_all = jnp.zeros((n_conv, 1, C), jnp.float32)
    for i, p in enumerate(params):
        cout, cin, _ = p["w"].shape
        w = jnp.transpose(p["w"], (2, 1, 0))            # (K, Cin, Cout)
        scale = p["gamma"] / jnp.sqrt(p["var"] + eps)
        bias = p["beta"] + (p["conv_b"] - p["mean"]) * scale
        w_all = w_all.at[i, :, :cin, :cout].set(w)
        scale_all = scale_all.at[i, 0, :cout].set(scale)
        bias_all = bias_all.at[i, 0, :cout].set(bias)
    w_all = w_all.astype(jnp.bfloat16)

    # Single, cheap zero-pad of the *narrow* raw input (time halo + lane pad), cast to bf16.
    Lp = (nT - 1) * t_tile + win
    x_pad = jnp.zeros((B, Lp, C), jnp.bfloat16)
    x_pad = x_pad.at[:, halo:halo + T, :n_mel_in].set(x.astype(jnp.bfloat16))

    kernel = functools.partial(
        _postnet_fused_kernel,
        n_conv=n_conv, K=K, T=T, t_tile=t_tile, win=win, halo=halo, guard=guard)

    # VMEM budget: double-buffered weights/scale/bias/out block + 2 activation buffers.
    est = (2 * (w_all.size * 2 + (scale_all.size + bias_all.size) * 4 + t_tile * C * 4)
           + 2 * buf_rows * C * 2 + (4 << 20))
    vmem_limit = int(min(max(est, 32 << 20), 46 << 20))   # stays within v7x's 64 MiB VMEM

    out_pad = pl.pallas_call(
        kernel,
        out_shape=jax.ShapeDtypeStruct((B, nT * t_tile, C), x.dtype),
        grid_spec=pltpu.PrefetchScalarGridSpec(
            num_scalar_prefetch=0,
            grid=(B, nT),
            in_specs=[
                pl.BlockSpec(memory_space=pl.ANY),                          # x_pad (HBM)
                pl.BlockSpec((n_conv, K, C, C), lambda b, t: (0, 0, 0, 0)),  # VMEM-resident
                pl.BlockSpec((n_conv, 1, C), lambda b, t: (0, 0, 0)),
                pl.BlockSpec((n_conv, 1, C), lambda b, t: (0, 0, 0)),
            ],
            out_specs=pl.BlockSpec((1, t_tile, C), lambda b, t: (b, t, 0)),
            scratch_shapes=[
                pltpu.VMEM((buf_rows, C), jnp.bfloat16),
                pltpu.VMEM((buf_rows, C), jnp.bfloat16),
                pltpu.SemaphoreType.DMA((1,)),
            ],
        ),
        compiler_params=pltpu.CompilerParams(
            dimension_semantics=("parallel", "parallel"),
            vmem_limit_bytes=vmem_limit,
        ),
    )(x_pad, w_all, scale_all, bias_all)

    return out_pad[:, :T, :n_mel_out]


def make_postnet_params(key, n_mel, emb_dim, kernel_size, n_conv):
    """Deterministic synthetic parameters matching the PyTorch module shapes."""
    params = []
    for i in range(n_conv):
        in_dim = n_mel if i == 0 else emb_dim
        out_dim = emb_dim if i < n_conv - 1 else n_mel
        key, kw, kb, kg, kbeta, km, kv = jax.random.split(key, 7)
        w = jax.random.normal(kw, (out_dim, in_dim, kernel_size), jnp.float32) * 0.1
        conv_b = jax.random.normal(kb, (out_dim,), jnp.float32) * 0.1
        gamma = 1.0 + 0.1 * jax.random.normal(kg, (out_dim,), jnp.float32)
        beta = 0.1 * jax.random.normal(kbeta, (out_dim,), jnp.float32)
        mean = 0.1 * jax.random.normal(km, (out_dim,), jnp.float32)
        var = 1.0 + 0.1 * jax.random.uniform(kv, (out_dim,), jnp.float32)
        params.append(dict(w=w, conv_b=conv_b, gamma=gamma, beta=beta,
                           mean=mean, var=var))
    return params


def postnet_reference(x, params, *, kernel_size, eps=1e-5):
    """Pure-JAX f32 reference (lax conv), same semantics, for verification."""
    n_conv = len(params)
    y = jnp.transpose(x, (0, 2, 1))  # (B, C, T)
    pad = (kernel_size - 1) // 2
    for i, p in enumerate(params):
        y = jax.lax.conv_general_dilated(
            y, p["w"], window_strides=(1,), padding=[(pad, pad)],
            dimension_numbers=("NCH", "OIH", "NCH"),
        ) + p["conv_b"][None, :, None]
        scale = p["gamma"] / jnp.sqrt(p["var"] + eps)
        y = (y - p["mean"][None, :, None]) * scale[None, :, None] + p["beta"][None, :, None]
        if i < n_conv - 1:
            y = jnp.tanh(y)
    return jnp.transpose(y, (0, 2, 1))


if __name__ == "__main__":
    # Small hparams consistent with the module definition.
    B, T = 2, 40
    n_mel_channels = 8
    postnet_embedding_dim = 32
    postnet_kernel_size = 5
    postnet_n_convolutions = 5

    key = jax.random.PRNGKey(0)
    key, kx = jax.random.split(key)
    x = jax.random.normal(kx, (B, T, n_mel_channels), jnp.float32)

    params = make_postnet_params(
        key, n_mel_channels, postnet_embedding_dim,
        postnet_kernel_size, postnet_n_convolutions,
    )

    # time_tile=16 -> 3 time tiles: exercises the fused halo / boundary-masking path.
    out = postnet_forward(x, params, kernel_size=postnet_kernel_size, time_tile=16)
    out = jax.block_until_ready(out)

    ref = jax.block_until_ready(
        postnet_reference(x, params, kernel_size=postnet_kernel_size)
    )
    assert out.shape == (B, T, n_mel_channels), out.shape
    max_err = float(jnp.max(jnp.abs(out - ref)))
    # bf16 matmul operands vs f32 reference -> loose-but-meaningful tolerance.
    assert jnp.allclose(out, ref, atol=5e-2, rtol=5e-2), max_err

    print("KERNEL_OK")
</pallas_src>

<mosaic_0001>
module attributes {stable_mosaic.version = 11 : i64} {
  func.func @_postnet_fused_kernel(%arg0: i32, %arg1: i32, %arg2: memref<2x72x128xbf16, #tpu.memory_space<any>>, %arg3: memref<5x5x128x128xbf16, #tpu.memory_space<vmem>>, %arg4: memref<5x1x128xf32, #tpu.memory_space<vmem>>, %arg5: memref<5x1x128xf32, #tpu.memory_space<vmem>>, %arg6: memref<1x16x128xf32, #tpu.memory_space<vmem>>, %arg7: memref<56x128xbf16, #tpu.memory_space<vmem>>, %arg8: memref<56x128xbf16, #tpu.memory_space<vmem>>, %arg9: memref<1x!tpu.dma_semaphore, #tpu.memory_space<semaphore_mem>>) attributes {dimension_semantics = [#tpu.dimension_semantics<parallel>, #tpu.dimension_semantics<parallel>], iteration_bounds = array<i64: 2, 3>, scalar_prefetch = 0 : i64, scratch_operands = 3 : i64, tpu.core_type = #tpu.core_type<tc>, window_params = [{}, {pipeline_mode = #tpu.pipeline_mode<synchronous>, transform_indices = @transform_1, window_bounds = array<i64: 5, 5, 128, 128>}, {pipeline_mode = #tpu.pipeline_mode<synchronous>, transform_indices = @transform_2, window_bounds = array<i64: 5, 1, 128>}, {pipeline_mode = #tpu.pipeline_mode<synchronous>, transform_indices = @transform_3, window_bounds = array<i64: 5, 1, 128>}, {transform_indices = @transform_4, window_bounds = array<i64: 1, 16, 128>}]} {
    %c16_i32 = arith.constant 16 : i32
    %0 = arith.muli %arg1, %c16_i32 : i32
    %1 = tpu.assume_multiple %0, 8 : i32
    %c0_i32 = arith.constant 0 : i32
    %c0_i32_0 = arith.constant 0 : i32
    %2 = tpu.memref_slice %arg2[%arg0, %1, %c0_i32_0] : memref<2x72x128xbf16, #tpu.memory_space<any>> -> memref<1x40x128xbf16, #tpu.memory_space<any>>
    %3 = tpu.memref_squeeze %2 : memref<1x40x128xbf16, #tpu.memory_space<any>> -> memref<40x128xbf16, #tpu.memory_space<any>>
    %c8_i32 = arith.constant 8 : i32
    %c0_i32_1 = arith.constant 0 : i32
    %4 = tpu.memref_slice %arg7[%c8_i32, %c0_i32_1] : memref<56x128xbf16, #tpu.memory_space<vmem>> -> memref<40x128xbf16, #tpu.memory_space<vmem>>
    %5 = tpu.memref_slice %arg9[%c0_i32] : memref<1x!tpu.dma_semaphore, #tpu.memory_space<semaphore_mem>> -> memref<1x!tpu.dma_semaphore, #tpu.memory_space<semaphore_mem>>
    %6 = tpu.memref_squeeze %5 : memref<1x!tpu.dma_semaphore, #tpu.memory_space<semaphore_mem>> -> memref<!tpu.dma_semaphore, #tpu.memory_space<semaphore_mem>>
    tpu.enqueue_dma source(%3 : memref<40x128xbf16, #tpu.memory_space<any>>) target(%4 : memref<40x128xbf16, #tpu.memory_space<vmem>>) target_semaphore(%6 : memref<!tpu.dma_semaphore, #tpu.memory_space<semaphore_mem>>)
    %cst = arith.constant 0.000000e+00 : bf16
    %7 = vector.broadcast %cst : bf16 to vector<8x128xbf16>
    %c0 = arith.constant 0 : index
    %c0_2 = arith.constant 0 : index
    %8 = vector.load %arg7[%c0, %c0_2] : memref<56x128xbf16, #tpu.memory_space<vmem>>, vector<8x128xbf16>
    tpu.vector_store %arg7[%c0, %c0_2], %7 {strides = array<i32>} : memref<56x128xbf16, #tpu.memory_space<vmem>>, vector<8x128xbf16>,
    %c48 = arith.constant 48 : index
    %c0_3 = arith.constant 0 : index
    %9 = vector.load %arg7[%c48, %c0_3] : memref<56x128xbf16, #tpu.memory_space<vmem>>, vector<8x128xbf16>
    tpu.vector_store %arg7[%c48, %c0_3], %7 {strides = array<i32>} : memref<56x128xbf16, #tpu.memory_space<vmem>>, vector<8x128xbf16>,
    %c0_4 = arith.constant 0 : index
    %c0_5 = arith.constant 0 : index
    %10 = vector.load %arg8[%c0_4, %c0_5] : memref<56x128xbf16, #tpu.memory_space<vmem>>, vector<8x128xbf16>
    tpu.vector_store %arg8[%c0_4, %c0_5], %7 {strides = array<i32>} : memref<56x128xbf16, #tpu.memory_space<vmem>>, vector<8x128xbf16>,
    %c48_6 = arith.constant 48 : index
    %c0_7 = arith.constant 0 : index
    %11 = vector.load %arg8[%c48_6, %c0_7] : memref<56x128xbf16, #tpu.memory_space<vmem>>, vector<8x128xbf16>
    tpu.vector_store %arg8[%c48_6, %c0_7], %7 {strides = array<i32>} : memref<56x128xbf16, #tpu.memory_space<vmem>>, vector<8x128xbf16>,
    %12 = tpu.iota {dimensions = array<i32: 0>} : vector<40x1xi32>
    %c12_i32 = arith.constant 12 : i32
    %13 = arith.subi %1, %c12_i32 : i32
    %14 = vector.broadcast %13 : i32 to vector<40x1xi32>
    %15 = arith.addi %14, %12 : vector<40x1xi32>
    %c0_i32_8 = arith.constant 0 : i32
    %16 = vector.broadcast %c0_i32_8 : i32 to vector<40x1xi32>
    %17 = arith.cmpi sge, %15, %16 : vector<40x1xi32>
    %c40_i32 = arith.constant 40 : i32
    %18 = vector.broadcast %c40_i32 : i32 to vector<40x1xi32>
    %19 = arith.cmpi slt, %15, %18 : vector<40x1xi32>
    %20 = arith.andi %17, %19 : vector<40x1xi1>
    %c0_i32_9 = arith.constant 0 : i32
    %c0_i32_10 = arith.constant 0 : i32
    %21 = tpu.memref_slice %arg2[%arg0, %1, %c0_i32_10] : memref<2x72x128xbf16, #tpu.memory_space<any>> -> memref<1x40x128xbf16, #tpu.memory_space<any>>
    %22 = tpu.memref_squeeze %21 : memref<1x40x128xbf16, #tpu.memory_space<any>> -> memref<40x128xbf16, #tpu.memory_space<any>>
    %c8_i32_11 = arith.constant 8 : i32
    %c0_i32_12 = arith.constant 0 : i32
    %23 = tpu.memref_slice %arg7[%c8_i32_11, %c0_i32_12] : memref<56x128xbf16, #tpu.memory_space<vmem>> -> memref<40x128xbf16, #tpu.memory_space<vmem>>
    %24 = tpu.memref_slice %arg9[%c0_i32_9] : memref<1x!tpu.dma_semaphore, #tpu.memory_space<semaphore_mem>> -> memref<1x!tpu.dma_semaphore, #tpu.memory_space<semaphore_mem>>
    %25 = tpu.memref_squeeze %24 : memref<1x!tpu.dma_semaphore, #tpu.memory_space<semaphore_mem>> -> memref<!tpu.dma_semaphore, #tpu.memory_space<semaphore_mem>>
    tpu.wait_dma2 semaphore(%25 : memref<!tpu.dma_semaphore, #tpu.memory_space<semaphore_mem>>) src(%22 : memref<40x128xbf16, #tpu.memory_space<any>>) dst(%23 : memref<40x128xbf16, #tpu.memory_space<vmem>>)
    %cst_13 = arith.constant 0.000000e+00 : f32
    %26 = vector.broadcast %cst_13 : f32 to vector<40x128xf32>
    %c6 = arith.constant 6 : index
    %c0_14 = arith.constant 0 : index
    %27 = vector.load %arg7[%c6, %c0_14] : memref<56x128xbf16, #tpu.memory_space<vmem>>, vector<40x128xbf16>
    %c0_15 = arith.constant 0 : index
    %c0_16 = arith.constant 0 : index
    %c0_17 = arith.constant 0 : index
    %c0_18 = arith.constant 0 : index
    %28 = vector.load %arg3[%c0_15, %c0_16, %c0_17, %c0_18] : memref<5x5x128x128xbf16, #tpu.memory_space<vmem>>, vector<1x1x128x128xbf16>
    %29 = vector.shape_cast %28 : vector<1x1x128x128xbf16> to vector<128x128xbf16>
    %cst_19 = arith.constant dense<0.000000e+00> : vector<40x128xf32>
    %30 = tpu.matmul %27, %29, %cst_19 {dimension_numbers = #tpu.dot_dimension_numbers<[1], [0], [0], [1], [0, 0, 1, 1], [], []>} : vector<40x128xbf16>, vector<128x128xbf16>, vector<40x128xf32> -> vector<40x128xf32>
    %31 = arith.addf %26, %30 : vector<40x128xf32>
    %c7 = arith.constant 7 : index
    %c0_20 = arith.constant 0 : index
    %32 = vector.load %arg7[%c7, %c0_20] : memref<56x128xbf16, #tpu.memory_space<vmem>>, vector<40x128xbf16>
    %c0_21 = arith.constant 0 : index
    %c1 = arith.constant 1 : index
    %c0_22 = arith.constant 0 : index
    %c0_23 = arith.constant 0 : index
    %33 = vector.load %arg3[%c0_21, %c1, %c0_22, %c0_23] : memref<5x5x128x128xbf16, #tpu.memory_space<vmem>>, vector<1x1x128x128xbf16>
    %34 = vector.shape_cast %33 : vector<1x1x128x128xbf16> to vector<128x128xbf16>
    %cst_24 = arith.constant dense<0.000000e+00> : vector<40x128xf32>
    %35 = tpu.matmul %32, %34, %cst_24 {dimension_numbers = #tpu.dot_dimension_numbers<[1], [0], [0], [1], [0, 0, 1, 1], [], []>} : vector<40x128xbf16>, vector<128x128xbf16>, vector<40x128xf32> -> vector<40x128xf32>
    %36 = arith.addf %31, %35 : vector<40x128xf32>
    %c8 = arith.constant 8 : index
    %c0_25 = arith.constant 0 : index
    %37 = vector.load %arg7[%c8, %c0_25] : memref<56x128xbf16, #tpu.memory_space<vmem>>, vector<40x128xbf16>
    %c0_26 = arith.constant 0 : index
    %c2 = arith.constant 2 : index
    %c0_27 = arith.constant 0 : index
    %c0_28 = arith.constant 0 : index
    %38 = vector.load %arg3[%c0_26, %c2, %c0_27, %c0_28] : memref<5x5x128x128xbf16, #tpu.memory_space<vmem>>, vector<1x1x128x128xbf16>
    %39 = vector.shape_cast %38 : vector<1x1x128x128xbf16> to vector<128x128xbf16>
    %cst_29 = arith.constant dense<0.000000e+00> : vector<40x128xf32>
    %40 = tpu.matmul %37, %39, %cst_29 {dimension_numbers = #tpu.dot_dimension_numbers<[1], [0], [0], [1], [0, 0, 1, 1], [], []>} : vector<40x128xbf16>, vector<128x128xbf16>, vector<40x128xf32> -> vector<40x128xf32>
    %41 = arith.addf %36, %40 : vector<40x128xf32>
    %c9 = arith.constant 9 : index
    %c0_30 = arith.constant 0 : index
    %42 = vector.load %arg7[%c9, %c0_30] : memref<56x128xbf16, #tpu.memory_space<vmem>>, vector<40x128xbf16>
    %c0_31 = arith.constant 0 : index
    %c3 = arith.constant 3 : index
    %c0_32 = arith.constant 0 : index
    %c0_33 = arith.constant 0 : index
    %43 = vector.load %arg3[%c0_31, %c3, %c0_32, %c0_33] : memref<5x5x128x128xbf16, #tpu.memory_space<vmem>>, vector<1x1x128x128xbf16>
    %44 = vector.shape_cast %43 : vector<1x1x128x128xbf16> to vector<128x128xbf16>
    %cst_34 = arith.constant dense<0.000000e+00> : vector<40x128xf32>
    %45 = tpu.matmul %42, %44, %cst_34 {dimension_numbers = #tpu.dot_dimension_numbers<[1], [0], [0], [1], [0, 0, 1, 1], [], []>} : vector<40x128xbf16>, vector<128x128xbf16>, vector<40x128xf32> -> vector<40x128xf32>
    %46 = arith.addf %41, %45 : vector<40x128xf32>
    %c10 = arith.constant 10 : index
    %c0_35 = arith.constant 0 : index
    %47 = vector.load %arg7[%c10, %c0_35] : memref<56x128xbf16, #tpu.memory_space<vmem>>, vector<40x128xbf16>
    %c0_36 = arith.constant 0 : index
    %c4 = arith.constant 4 : index
    %c0_37 = arith.constant 0 : index
    %c0_38 = arith.constant 0 : index
    %48 = vector.load %arg3[%c0_36, %c4, %c0_37, %c0_38] : memref<5x5x128x128xbf16, #tpu.memory_space<vmem>>, vector<1x1x128x128xbf16>
    %49 = vector.shape_cast %48 : vector<1x1x128x128xbf16> to vector<128x128xbf16>
    %cst_39 = arith.constant dense<0.000000e+00> : vector<40x128xf32>
    %50 = tpu.matmul %47, %49, %cst_39 {dimension_numbers = #tpu.dot_dimension_numbers<[1], [0], [0], [1], [0, 0, 1, 1], [], []>} : vector<40x128xbf16>, vector<128x128xbf16>, vector<40x128xf32> -> vector<40x128xf32>
    %51 = arith.addf %46, %50 : vector<40x128xf32>
    %c0_40 = arith.constant 0 : index
    %c0_41 = arith.constant 0 : index
    %c0_42 = arith.constant 0 : index
    %52 = vector.load %arg4[%c0_40, %c0_41, %c0_42] : memref<5x1x128xf32, #tpu.memory_space<vmem>>, vector<1x1x128xf32>
    %53 = vector.shape_cast %52 : vector<1x1x128xf32> to vector<1x128xf32>
    %54 = vector.broadcast %53 : vector<1x128xf32> to vector<40x128xf32>
    %55 = arith.mulf %51, %54 : vector<40x128xf32>
    %c0_43 = arith.constant 0 : index
    %c0_44 = arith.constant 0 : index
    %c0_45 = arith.constant 0 : index
    %56 = vector.load %arg5[%c0_43, %c0_44, %c0_45] : memref<5x1x128xf32, #tpu.memory_space<vmem>>, vector<1x1x128xf32>
    %57 = vector.shape_cast %56 : vector<1x1x128xf32> to vector<1x128xf32>
    %58 = vector.broadcast %57 : vector<1x128xf32> to vector<40x128xf32>
    %59 = arith.addf %55, %58 : vector<40x128xf32>
    %60 = math.tanh %59 : vector<40x128xf32>
    %cst_46 = arith.constant 0.000000e+00 : f32
    %61 = vector.shape_cast %20 : vector<40x1xi1> to vector<40x1xi1>
    %62 = vector.broadcast %61 : vector<40x1xi1> to vector<40x128xi1>
    %63 = vector.broadcast %cst_46 : f32 to vector<40x128xf32>
    %64 = arith.select %62, %60, %63 : vector<40x128xi1>, vector<40x128xf32>
    %65 = arith.truncf %64 : vector<40x128xf32> to vector<40x128xbf16>
    %c8_47 = arith.constant 8 : index
    %c0_48 = arith.constant 0 : index
    %66 = vector.load %arg8[%c8_47, %c0_48] : memref<56x128xbf16, #tpu.memory_space<vmem>>, vector<40x128xbf16>
    tpu.vector_store %arg8[%c8_47, %c0_48], %65 {strides = array<i32>} : memref<56x128xbf16, #tpu.memory_space<vmem>>, vector<40x128xbf16>,
    %cst_49 = arith.constant 0.000000e+00 : f32
    %67 = vector.broadcast %cst_49 : f32 to vector<40x128xf32>
    %c6_50 = arith.constant 6 : index
    %c0_51 = arith.constant 0 : index
    %68 = vector.load %arg8[%c6_50, %c0_51] : memref<56x128xbf16, #tpu.memory_space<vmem>>, vector<40x128xbf16>
    %c1_52 = arith.constant 1 : index
    %c0_53 = arith.constant 0 : index
    %c0_54 = arith.constant 0 : index
    %c0_55 = arith.constant 0 : index
    %69 = vector.load %arg3[%c1_52, %c0_53, %c0_54, %c0_55] : memref<5x5x128x128xbf16, #tpu.memory_space<vmem>>, vector<1x1x128x128xbf16>
    %70 = vector.shape_cast %69 : vector<1x1x128x128xbf16> to vector<128x128xbf16>
    %cst_56 = arith.constant dense<0.000000e+00> : vector<40x128xf32>
    %71 = tpu.matmul %68, %70, %cst_56 {dimension_numbers = #tpu.dot_dimension_numbers<[1], [0], [0], [1], [0, 0, 1, 1], [], []>} : vector<40x128xbf16>, vector<128x128xbf16>, vector<40x128xf32> -> vector<40x128xf32>
    %72 = arith.addf %67, %71 : vector<40x128xf32>
    %c7_57 = arith.constant 7 : index
    %c0_58 = arith.constant 0 : index
    %73 = vector.load %arg8[%c7_57, %c0_58] : memref<56x128xbf16, #tpu.memory_space<vmem>>, vector<40x128xbf16>
    %c1_59 = arith.constant 1 : index
    %c1_60 = arith.constant 1 : index
    %c0_61 = arith.constant 0 : index
    %c0_62 = arith.constant 0 : index
    %74 = vector.load %arg3[%c1_59, %c1_60, %c0_61, %c0_62] : memref<5x5x128x128xbf16, #tpu.memory_space<vmem>>, vector<1x1x128x128xbf16>
    %75 = vector.shape_cast %74 : vector<1x1x128x128xbf16> to vector<128x128xbf16>
    %cst_63 = arith.constant dense<0.000000e+00> : vector<40x128xf32>
    %76 = tpu.matmul %73, %75, %cst_63 {dimension_numbers = #tpu.dot_dimension_numbers<[1], [0], [0], [1], [0, 0, 1, 1], [], []>} : vector<40x128xbf16>, vector<128x128xbf16>, vector<40x128xf32> -> vector<40x128xf32>
    %77 = arith.addf %72, %76 : vector<40x128xf32>
    %c8_64 = arith.constant 8 : index
    %c0_65 = arith.constant 0 : index
    %78 = vector.load %arg8[%c8_64, %c0_65] : memref<56x128xbf16, #tpu.memory_space<vmem>>, vector<40x128xbf16>
    %c1_66 = arith.constant 1 : index
    %c2_67 = arith.constant 2 : index
    %c0_68 = arith.constant 0 : index
    %c0_69 = arith.constant 0 : index
    %79 = vector.load %arg3[%c1_66, %c2_67, %c0_68, %c0_69] : memref<5x5x128x128xbf16, #tpu.memory_space<vmem>>, vector<1x1x128x128xbf16>
    %80 = vector.shape_cast %79 : vector<1x1x128x128xbf16> to vector<128x128xbf16>
    %cst_70 = arith.constant dense<0.000000e+00> : vector<40x128xf32>
    %81 = tpu.matmul %78, %80, %cst_70 {dimension_numbers = #tpu.dot_dimension_numbers<[1], [0], [0], [1], [0, 0, 1, 1], [], []>} : vector<40x128xbf16>, vector<128x128xbf16>, vector<40x128xf32> -> vector<40x128xf32>
    %82 = arith.addf %77, %81 : vector<40x128xf32>
    %c9_71 = arith.constant 9 : index
    %c0_72 = arith.constant 0 : index
    %83 = vector.load %arg8[%c9_71, %c0_72] : memref<56x128xbf16, #tpu.memory_space<vmem>>, vector<40x128xbf16>
    %c1_73 = arith.constant 1 : index
    %c3_74 = arith.constant 3 : index
    %c0_75 = arith.constant 0 : index
    %c0_76 = arith.constant 0 : index
    %84 = vector.load %arg3[%c1_73, %c3_74, %c0_75, %c0_76] : memref<5x5x128x128xbf16, #tpu.memory_space<vmem>>, vector<1x1x128x128xbf16>
    %85 = vector.shape_cast %84 : vector<1x1x128x128xbf16> to vector<128x128xbf16>
    %cst_77 = arith.constant dense<0.000000e+00> : vector<40x128xf32>
    %86 = tpu.matmul %83, %85, %cst_77 {dimension_numbers = #tpu.dot_dimension_numbers<[1], [0], [0], [1], [0, 0, 1, 1], [], []>} : vector<40x128xbf16>, vector<128x128xbf16>, vector<40x128xf32> -> vector<40x128xf32>
    %87 = arith.addf %82, %86 : vector<40x128xf32>
    %c10_78 = arith.constant 10 : index
    %c0_79 = arith.constant 0 : index
    %88 = vector.load %arg8[%c10_78, %c0_79] : memref<56x128xbf16, #tpu.memory_space<vmem>>, vector<40x128xbf16>
    %c1_80 = arith.constant 1 : index
    %c4_81 = arith.constant 4 : index
    %c0_82 = arith.constant 0 : index
    %c0_83 = arith.constant 0 : index
    %89 = vector.load %arg3[%c1_80, %c4_81, %c0_82, %c0_83] : memref<5x5x128x128xbf16, #tpu.memory_space<vmem>>, vector<1x1x128x128xbf16>
    %90 = vector.shape_cast %89 : vector<1x1x128x128xbf16> to vector<128x128xbf16>
    %cst_84 = arith.constant dense<0.000000e+00> : vector<40x128xf32>
    %91 = tpu.matmul %88, %90, %cst_84 {dimension_numbers = #tpu.dot_dimension_numbers<[1], [0], [0], [1], [0, 0, 1, 1], [], []>} : vector<40x128xbf16>, vector<128x128xbf16>, vector<40x128xf32> -> vector<40x128xf32>
    %92 = arith.addf %87, %91 : vector<40x128xf32>
    %c1_85 = arith.constant 1 : index
    %c0_86 = arith.constant 0 : index
    %c0_87 = arith.constant 0 : index
    %93 = vector.load %arg4[%c1_85, %c0_86, %c0_87] : memref<5x1x128xf32, #tpu.memory_space<vmem>>, vector<1x1x128xf32>
    %94 = vector.shape_cast %93 : vector<1x1x128xf32> to vector<1x128xf32>
    %95 = vector.broadcast %94 : vector<1x128xf32> to vector<40x128xf32>
    %96 = arith.mulf %92, %95 : vector<40x128xf32>
    %c1_88 = arith.constant 1 : index
    %c0_89 = arith.constant 0 : index
    %c0_90 = arith.constant 0 : index
    %97 = vector.load %arg5[%c1_88, %c0_89, %c0_90] : memref<5x1x128xf32, #tpu.memory_space<vmem>>, vector<1x1x128xf32>
    %98 = vector.shape_cast %97 : vector<1x1x128xf32> to vector<1x128xf32>
    %99 = vector.broadcast %98 : vector<1x128xf32> to vector<40x128xf32>
    %100 = arith.addf %96, %99 : vector<40x128xf32>
    %101 = math.tanh %100 : vector<40x128xf32>
    %cst_91 = arith.constant 0.000000e+00 : f32
    %102 = vector.shape_cast %20 : vector<40x1xi1> to vector<40x1xi1>
    %103 = vector.broadcast %102 : vector<40x1xi1> to vector<40x128xi1>
    %104 = vector.broadcast %cst_91 : f32 to vector<40x128xf32>
    %105 = arith.select %103, %101, %104 : vector<40x128xi1>, vector<40x128xf32>
    %106 = arith.truncf %105 : vector<40x128xf32> to vector<40x128xbf16>
    %c8_92 = arith.constant 8 : index
    %c0_93 = arith.constant 0 : index
    %107 = vector.load %arg7[%c8_92, %c0_93] : memref<56x128xbf16, #tpu.memory_space<vmem>>, vector<40x128xbf16>
    tpu.vector_store %arg7[%c8_92, %c0_93], %106 {strides = array<i32>} : memref<56x128xbf16, #tpu.memory_space<vmem>>, vector<40x128xbf16>,
    %cst_94 = arith.constant 0.000000e+00 : f32
    %108 = vector.broadcast %cst_94 : f32 to vector<40x128xf32>
    %c6_95 = arith.constant 6 : index
    %c0_96 = arith.constant 0 : index
    %109 = vector.load %arg7[%c6_95, %c0_96] : memref<56x128xbf16, #tpu.memory_space<vmem>>, vector<40x128xbf16>
    %c2_97 = arith.constant 2 : index
    %c0_98 = arith.constant 0 : index
    %c0_99 = arith.constant 0 : index
    %c0_100 = arith.constant 0 : index
    %110 = vector.load %arg3[%c2_97, %c0_98, %c0_99, %c0_100] : memref<5x5x128x128xbf16, #tpu.memory_space<vmem>>, vector<1x1x128x128xbf16>
    %111 = vector.shape_cast %110 : vector<1x1x128x128xbf16> to vector<128x128xbf16>
    %cst_101 = arith.constant dense<0.000000e+00> : vector<40x128xf32>
    %112 = tpu.matmul %109, %111, %cst_101 {dimension_numbers = #tpu.dot_dimension_numbers<[1], [0], [0], [1], [0, 0, 1, 1], [], []>} : vector<40x128xbf16>, vector<128x128xbf16>, vector<40x128xf32> -> vector<40x128xf32>
    %113 = arith.addf %108, %112 : vector<40x128xf32>
    %c7_102 = arith.constant 7 : index
    %c0_103 = arith.constant 0 : index
    %114 = vector.load %arg7[%c7_102, %c0_103] : memref<56x128xbf16, #tpu.memory_space<vmem>>, vector<40x128xbf16>
    %c2_104 = arith.constant 2 : index
    %c1_105 = arith.constant 1 : index
    %c0_106 = arith.constant 0 : index
    %c0_107 = arith.constant 0 : index
    %115 = vector.load %arg3[%c2_104, %c1_105, %c0_106, %c0_107] : memref<5x5x128x128xbf16, #tpu.memory_space<vmem>>, vector<1x1x128x128xbf16>
    %116 = vector.shape_cast %115 : vector<1x1x128x128xbf16> to vector<128x128xbf16>
    %cst_108 = arith.constant dense<0.000000e+00> : vector<40x128xf32>
    %117 = tpu.matmul %114, %116, %cst_108 {dimension_numbers = #tpu.dot_dimension_numbers<[1], [0], [0], [1], [0, 0, 1, 1], [], []>} : vector<40x128xbf16>, vector<128x128xbf16>, vector<40x128xf32> -> vector<40x128xf32>
    %118 = arith.addf %113, %117 : vector<40x128xf32>
    %c8_109 = arith.constant 8 : index
    %c0_110 = arith.constant 0 : index
    %119 = vector.load %arg7[%c8_109, %c0_110] : memref<56x128xbf16, #tpu.memory_space<vmem>>, vector<40x128xbf16>
    %c2_111 = arith.constant 2 : index
    %c2_112 = arith.constant 2 : index
    %c0_113 = arith.constant 0 : index
    %c0_114 = arith.constant 0 : index
    %120 = vector.load %arg3[%c2_111, %c2_112, %c0_113, %c0_114] : memref<5x5x128x128xbf16, #tpu.memory_space<vmem>>, vector<1x1x128x128xbf16>
    %121 = vector.shape_cast %120 : vector<1x1x128x128xbf16> to vector<128x128xbf16>
    %cst_115 = arith.constant dense<0.000000e+00> : vector<40x128xf32>
    %122 = tpu.matmul %119, %121, %cst_115 {dimension_numbers = #tpu.dot_dimension_numbers<[1], [0], [0], [1], [0, 0, 1, 1], [], []>} : vector<40x128xbf16>, vector<128x128xbf16>, vector<40x128xf32> -> vector<40x128xf32>
    %123 = arith.addf %118, %122 : vector<40x128xf32>
    %c9_116 = arith.constant 9 : index
    %c0_117 = arith.constant 0 : index
    %124 = vector.load %arg7[%c9_116, %c0_117] : memref<56x128xbf16, #tpu.memory_space<vmem>>, vector<40x128xbf16>
    %c2_118 = arith.constant 2 : index
    %c3_119 = arith.constant 3 : index
    %c0_120 = arith.constant 0 : index
    %c0_121 = arith.constant 0 : index
    %125 = vector.load %arg3[%c2_118, %c3_119, %c0_120, %c0_121] : memref<5x5x128x128xbf16, #tpu.memory_space<vmem>>, vector<1x1x128x128xbf16>
    %126 = vector.shape_cast %125 : vector<1x1x128x128xbf16> to vector<128x128xbf16>
    %cst_122 = arith.constant dense<0.000000e+00> : vector<40x128xf32>
    %127 = tpu.matmul %124, %126, %cst_122 {dimension_numbers = #tpu.dot_dimension_numbers<[1], [0], [0], [1], [0, 0, 1, 1], [], []>} : vector<40x128xbf16>, vector<128x128xbf16>, vector<40x128xf32> -> vector<40x128xf32>
    %128 = arith.addf %123, %127 : vector<40x128xf32>
    %c10_123 = arith.constant 10 : index
    %c0_124 = arith.constant 0 : index
    %129 = vector.load %arg7[%c10_123, %c0_124] : memref<56x128xbf16, #tpu.memory_space<vmem>>, vector<40x128xbf16>
    %c2_125 = arith.constant 2 : index
    %c4_126 = arith.constant 4 : index
    %c0_127 = arith.constant 0 : index
    %c0_128 = arith.constant 0 : index
    %130 = vector.load %arg3[%c2_125, %c4_126, %c0_127, %c0_128] : memref<5x5x128x128xbf16, #tpu.memory_space<vmem>>, vector<1x1x128x128xbf16>
    %131 = vector.shape_cast %130 : vector<1x1x128x128xbf16> to vector<128x128xbf16>
    %cst_129 = arith.constant dense<0.000000e+00> : vector<40x128xf32>
    %132 = tpu.matmul %129, %131, %cst_129 {dimension_numbers = #tpu.dot_dimension_numbers<[1], [0], [0], [1], [0, 0, 1, 1], [], []>} : vector<40x128xbf16>, vector<128x128xbf16>, vector<40x128xf32> -> vector<40x128xf32>
    %133 = arith.addf %128, %132 : vector<40x128xf32>
    %c2_130 = arith.constant 2 : index
    %c0_131 = arith.constant 0 : index
    %c0_132 = arith.constant 0 : index
    %134 = vector.load %arg4[%c2_130, %c0_131, %c0_132] : memref<5x1x128xf32, #tpu.memory_space<vmem>>, vector<1x1x128xf32>
    %135 = vector.shape_cast %134 : vector<1x1x128xf32> to vector<1x128xf32>
    %136 = vector.broadcast %135 : vector<1x128xf32> to vector<40x128xf32>
    %137 = arith.mulf %133, %136 : vector<40x128xf32>
    %c2_133 = arith.constant 2 : index
    %c0_134 = arith.constant 0 : index
    %c0_135 = arith.constant 0 : index
    %138 = vector.load %arg5[%c2_133, %c0_134, %c0_135] : memref<5x1x128xf32, #tpu.memory_space<vmem>>, vector<1x1x128xf32>
    %139 = vector.shape_cast %138 : vector<1x1x128xf32> to vector<1x128xf32>
    %140 = vector.broadcast %139 : vector<1x128xf32> to vector<40x128xf32>
    %141 = arith.addf %137, %140 : vector<40x128xf32>
    %142 = math.tanh %141 : vector<40x128xf32>
    %cst_136 = arith.constant 0.000000e+00 : f32
    %143 = vector.shape_cast %20 : vector<40x1xi1> to vector<40x1xi1>
    %144 = vector.broadcast %143 : vector<40x1xi1> to vector<40x128xi1>
    %145 = vector.broadcast %cst_136 : f32 to vector<40x128xf32>
    %146 = arith.select %144, %142, %145 : vector<40x128xi1>, vector<40x128xf32>
    %147 = arith.truncf %146 : vector<40x128xf32> to vector<40x128xbf16>
    %c8_137 = arith.constant 8 : index
    %c0_138 = arith.constant 0 : index
    %148 = vector.load %arg8[%c8_137, %c0_138] : memref<56x128xbf16, #tpu.memory_space<vmem>>, vector<40x128xbf16>
    tpu.vector_store %arg8[%c8_137, %c0_138], %147 {strides = array<i32>} : memref<56x128xbf16, #tpu.memory_space<vmem>>, vector<40x128xbf16>,
    %cst_139 = arith.constant 0.000000e+00 : f32
    %149 = vector.broadcast %cst_139 : f32 to vector<40x128xf32>
    %c6_140 = arith.constant 6 : index
    %c0_141 = arith.constant 0 : index
    %150 = vector.load %arg8[%c6_140, %c0_141] : memref<56x128xbf16, #tpu.memory_space<vmem>>, vector<40x128xbf16>
    %c3_142 = arith.constant 3 : index
    %c0_143 = arith.constant 0 : index
    %c0_144 = arith.constant 0 : index
    %c0_145 = arith.constant 0 : index
    %151 = vector.load %arg3[%c3_142, %c0_143, %c0_144, %c0_145] : memref<5x5x128x128xbf16, #tpu.memory_space<vmem>>, vector<1x1x128x128xbf16>
    %152 = vector.shape_cast %151 : vector<1x1x128x128xbf16> to vector<128x128xbf16>
    %cst_146 = arith.constant dense<0.000000e+00> : vector<40x128xf32>
    %153 = tpu.matmul %150, %152, %cst_146 {dimension_numbers = #tpu.dot_dimension_numbers<[1], [0], [0], [1], [0, 0, 1, 1], [], []>} : vector<40x128xbf16>, vector<128x128xbf16>, vector<40x128xf32> -> vector<40x128xf32>
    %154 = arith.addf %149, %153 : vector<40x128xf32>
    %c7_147 = arith.constant 7 : index
    %c0_148 = arith.constant 0 : index
    %155 = vector.load %arg8[%c7_147, %c0_148] : memref<56x128xbf16, #tpu.memory_space<vmem>>, vector<40x128xbf16>
    %c3_149 = arith.constant 3 : index
    %c1_150 = arith.constant 1 : index
    %c0_151 = arith.constant 0 : index
    %c0_152 = arith.constant 0 : index
    %156 = vector.load %arg3[%c3_149, %c1_150, %c0_151, %c0_152] : memref<5x5x128x128xbf16, #tpu.memory_space<vmem>>, vector<1x1x128x128xbf16>
    %157 = vector.shape_cast %156 : vector<1x1x128x128xbf16> to vector<128x128xbf16>
    %cst_153 = arith.constant dense<0.000000e+00> : vector<40x128xf32>
    %158 = tpu.matmul %155, %157, %cst_153 {dimension_numbers = #tpu.dot_dimension_numbers<[1], [0], [0], [1], [0, 0, 1, 1], [], []>} : vector<40x128xbf16>, vector<128x128xbf16>, vector<40x128xf32> -> vector<40x128xf32>
    %159 = arith.addf %154, %158 : vector<40x128xf32>
    %c8_154 = arith.constant 8 : index
    %c0_155 = arith.constant 0 : index
    %160 = vector.load %arg8[%c8_154, %c0_155] : memref<56x128xbf16, #tpu.memory_space<vmem>>, vector<40x128xbf16>
    %c3_156 = arith.constant 3 : index
    %c2_157 = arith.constant 2 : index
    %c0_158 = arith.constant 0 : index
    %c0_159 = arith.constant 0 : index
    %161 = vector.load %arg3[%c3_156, %c2_157, %c0_158, %c0_159] : memref<5x5x128x128xbf16, #tpu.memory_space<vmem>>, vector<1x1x128x128xbf16>
    %162 = vector.shape_cast %161 : vector<1x1x128x128xbf16> to vector<128x128xbf16>
    %cst_160 = arith.constant dense<0.000000e+00> : vector<40x128xf32>
    %163 = tpu.matmul %160, %162, %cst_160 {dimension_numbers = #tpu.dot_dimension_numbers<[1], [0], [0], [1], [0, 0, 1, 1], [], []>} : vector<40x128xbf16>, vector<128x128xbf16>, vector<40x128xf32> -> vector<40x128xf32>
    %164 = arith.addf %159, %163 : vector<40x128xf32>
    %c9_161 = arith.constant 9 : index
    %c0_162 = arith.constant 0 : index
    %165 = vector.load %arg8[%c9_161, %c0_162] : memref<56x128xbf16, #tpu.memory_space<vmem>>, vector<40x128xbf16>
    %c3_163 = arith.constant 3 : index
    %c3_164 = arith.constant 3 : index
    %c0_165 = arith.constant 0 : index
    %c0_166 = arith.constant 0 : index
    %166 = vector.load %arg3[%c3_163, %c3_164, %c0_165, %c0_166] : memref<5x5x128x128xbf16, #tpu.memory_space<vmem>>, vector<1x1x128x128xbf16>
    %167 = vector.shape_cast %166 : vector<1x1x128x128xbf16> to vector<128x128xbf16>
    %cst_167 = arith.constant dense<0.000000e+00> : vector<40x128xf32>
    %168 = tpu.matmul %165, %167, %cst_167 {dimension_numbers = #tpu.dot_dimension_numbers<[1], [0], [0], [1], [0, 0, 1, 1], [], []>} : vector<40x128xbf16>, vector<128x128xbf16>, vector<40x128xf32> -> vector<40x128xf32>
    %169 = arith.addf %164, %168 : vector<40x128xf32>
    %c10_168 = arith.constant 10 : index
    %c0_169 = arith.constant 0 : index
    %170 = vector.load %arg8[%c10_168, %c0_169] : memref<56x128xbf16, #tpu.memory_space<vmem>>, vector<40x128xbf16>
    %c3_170 = arith.constant 3 : index
    %c4_171 = arith.constant 4 : index
    %c0_172 = arith.constant 0 : index
    %c0_173 = arith.constant 0 : index
    %171 = vector.load %arg3[%c3_170, %c4_171, %c0_172, %c0_173] : memref<5x5x128x128xbf16, #tpu.memory_space<vmem>>, vector<1x1x128x128xbf16>
    %172 = vector.shape_cast %171 : vector<1x1x128x128xbf16> to vector<128x128xbf16>
    %cst_174 = arith.constant dense<0.000000e+00> : vector<40x128xf32>
    %173 = tpu.matmul %170, %172, %cst_174 {dimension_numbers = #tpu.dot_dimension_numbers<[1], [0], [0], [1], [0, 0, 1, 1], [], []>} : vector<40x128xbf16>, vector<128x128xbf16>, vector<40x128xf32> -> vector<40x128xf32>
    %174 = arith.addf %169, %173 : vector<40x128xf32>
    %c3_175 = arith.constant 3 : index
    %c0_176 = arith.constant 0 : index
    %c0_177 = arith.constant 0 : index
    %175 = vector.load %arg4[%c3_175, %c0_176, %c0_177] : memref<5x1x128xf32, #tpu.memory_space<vmem>>, vector<1x1x128xf32>
    %176 = vector.shape_cast %175 : vector<1x1x128xf32> to vector<1x128xf32>
    %177 = vector.broadcast %176 : vector<1x128xf32> to vector<40x128xf32>
    %178 = arith.mulf %174, %177 : vector<40x128xf32>
    %c3_178 = arith.constant 3 : index
    %c0_179 = arith.constant 0 : index
    %c0_180 = arith.constant 0 : index
    %179 = vector.load %arg5[%c3_178, %c0_179, %c0_180] : memref<5x1x128xf32, #tpu.memory_space<vmem>>, vector<1x1x128xf32>
    %180 = vector.shape_cast %179 : vector<1x1x128xf32> to vector<1x128xf32>
    %181 = vector.broadcast %180 : vector<1x128xf32> to vector<40x128xf32>
    %182 = arith.addf %178, %181 : vector<40x128xf32>
    %183 = math.tanh %182 : vector<40x128xf32>
    %cst_181 = arith.constant 0.000000e+00 : f32
    %184 = vector.shape_cast %20 : vector<40x1xi1> to vector<40x1xi1>
    %185 = vector.broadcast %184 : vector<40x1xi1> to vector<40x128xi1>
    %186 = vector.broadcast %cst_181 : f32 to vector<40x128xf32>
    %187 = arith.select %185, %183, %186 : vector<40x128xi1>, vector<40x128xf32>
    %188 = arith.truncf %187 : vector<40x128xf32> to vector<40x128xbf16>
    %c8_182 = arith.constant 8 : index
    %c0_183 = arith.constant 0 : index
    %189 = vector.load %arg7[%c8_182, %c0_183] : memref<56x128xbf16, #tpu.memory_space<vmem>>, vector<40x128xbf16>
    tpu.vector_store %arg7[%c8_182, %c0_183], %188 {strides = array<i32>} : memref<56x128xbf16, #tpu.memory_space<vmem>>, vector<40x128xbf16>,
    %cst_184 = arith.constant 0.000000e+00 : f32
    %190 = vector.broadcast %cst_184 : f32 to vector<40x128xf32>
    %c6_185 = arith.constant 6 : index
    %c0_186 = arith.constant 0 : index
    %191 = vector.load %arg7[%c6_185, %c0_186] : memref<56x128xbf16, #tpu.memory_space<vmem>>, vector<40x128xbf16>
    %c4_187 = arith.constant 4 : index
    %c0_188 = arith.constant 0 : index
    %c0_189 = arith.constant 0 : index
    %c0_190 = arith.constant 0 : index
    %192 = vector.load %arg3[%c4_187, %c0_188, %c0_189, %c0_190] : memref<5x5x128x128xbf16, #tpu.memory_space<vmem>>, vector<1x1x128x128xbf16>
    %193 = vector.shape_cast %192 : vector<1x1x128x128xbf16> to vector<128x128xbf16>
    %cst_191 = arith.constant dense<0.000000e+00> : vector<40x128xf32>
    %194 = tpu.matmul %191, %193, %cst_191 {dimension_numbers = #tpu.dot_dimension_numbers<[1], [0], [0], [1], [0, 0, 1, 1], [], []>} : vector<40x128xbf16>, vector<128x128xbf16>, vector<40x128xf32> -> vector<40x128xf32>
    %195 = arith.addf %190, %194 : vector<40x128xf32>
    %c7_192 = arith.constant 7 : index
    %c0_193 = arith.constant 0 : index
    %196 = vector.load %arg7[%c7_192, %c0_193] : memref<56x128xbf16, #tpu.memory_space<vmem>>, vector<40x128xbf16>
    %c4_194 = arith.constant 4 : index
    %c1_195 = arith.constant 1 : index
    %c0_196 = arith.constant 0 : index
    %c0_197 = arith.constant 0 : index
    %197 = vector.load %arg3[%c4_194, %c1_195, %c0_196, %c0_197] : memref<5x5x128x128xbf16, #tpu.memory_space<vmem>>, vector<1x1x128x128xbf16>
    %198 = vector.shape_cast %197 : vector<1x1x128x128xbf16> to vector<128x128xbf16>
    %cst_198 = arith.constant dense<0.000000e+00> : vector<40x128xf32>
    %199 = tpu.matmul %196, %198, %cst_198 {dimension_numbers = #tpu.dot_dimension_numbers<[1], [0], [0], [1], [0, 0, 1, 1], [], []>} : vector<40x128xbf16>, vector<128x128xbf16>, vector<40x128xf32> -> vector<40x128xf32>
    %200 = arith.addf %195, %199 : vector<40x128xf32>
    %c8_199 = arith.constant 8 : index
    %c0_200 = arith.constant 0 : index
    %201 = vector.load %arg7[%c8_199, %c0_200] : memref<56x128xbf16, #tpu.memory_space<vmem>>, vector<40x128xbf16>
    %c4_201 = arith.constant 4 : index
    %c2_202 = arith.constant 2 : index
    %c0_203 = arith.constant 0 : index
    %c0_204 = arith.constant 0 : index
    %202 = vector.load %arg3[%c4_201, %c2_202, %c0_203, %c0_204] : memref<5x5x128x128xbf16, #tpu.memory_space<vmem>>, vector<1x1x128x128xbf16>
    %203 = vector.shape_cast %202 : vector<1x1x128x128xbf16> to vector<128x128xbf16>
    %cst_205 = arith.constant dense<0.000000e+00> : vector<40x128xf32>
    %204 = tpu.matmul %201, %203, %cst_205 {dimension_numbers = #tpu.dot_dimension_numbers<[1], [0], [0], [1], [0, 0, 1, 1], [], []>} : vector<40x128xbf16>, vector<128x128xbf16>, vector<40x128xf32> -> vector<40x128xf32>
    %205 = arith.addf %200, %204 : vector<40x128xf32>
    %c9_206 = arith.constant 9 : index
    %c0_207 = arith.constant 0 : index
    %206 = vector.load %arg7[%c9_206, %c0_207] : memref<56x128xbf16, #tpu.memory_space<vmem>>, vector<40x128xbf16>
    %c4_208 = arith.constant 4 : index
    %c3_209 = arith.constant 3 : index
    %c0_210 = arith.constant 0 : index
    %c0_211 = arith.constant 0 : index
    %207 = vector.load %arg3[%c4_208, %c3_209, %c0_210, %c0_211] : memref<5x5x128x128xbf16, #tpu.memory_space<vmem>>, vector<1x1x128x128xbf16>
    %208 = vector.shape_cast %207 : vector<1x1x128x128xbf16> to vector<128x128xbf16>
    %cst_212 = arith.constant dense<0.000000e+00> : vector<40x128xf32>
    %209 = tpu.matmul %206, %208, %cst_212 {dimension_numbers = #tpu.dot_dimension_numbers<[1], [0], [0], [1], [0, 0, 1, 1], [], []>} : vector<40x128xbf16>, vector<128x128xbf16>, vector<40x128xf32> -> vector<40x128xf32>
    %210 = arith.addf %205, %209 : vector<40x128xf32>
    %c10_213 = arith.constant 10 : index
    %c0_214 = arith.constant 0 : index
    %211 = vector.load %arg7[%c10_213, %c0_214] : memref<56x128xbf16, #tpu.memory_space<vmem>>, vector<40x128xbf16>
    %c4_215 = arith.constant 4 : index
    %c4_216 = arith.constant 4 : index
    %c0_217 = arith.constant 0 : index
    %c0_218 = arith.constant 0 : index
    %212 = vector.load %arg3[%c4_215, %c4_216, %c0_217, %c0_218] : memref<5x5x128x128xbf16, #tpu.memory_space<vmem>>, vector<1x1x128x128xbf16>
    %213 = vector.shape_cast %212 : vector<1x1x128x128xbf16> to vector<128x128xbf16>
    %cst_219 = arith.constant dense<0.000000e+00> : vector<40x128xf32>
    %214 = tpu.matmul %211, %213, %cst_219 {dimension_numbers = #tpu.dot_dimension_numbers<[1], [0], [0], [1], [0, 0, 1, 1], [], []>} : vector<40x128xbf16>, vector<128x128xbf16>, vector<40x128xf32> -> vector<40x128xf32>
    %215 = arith.addf %210, %214 : vector<40x128xf32>
    %c4_220 = arith.constant 4 : index
    %c0_221 = arith.constant 0 : index
    %c0_222 = arith.constant 0 : index
    %216 = vector.load %arg4[%c4_220, %c0_221, %c0_222] : memref<5x1x128xf32, #tpu.memory_space<vmem>>, vector<1x1x128xf32>
    %217 = vector.shape_cast %216 : vector<1x1x128xf32> to vector<1x128xf32>
    %218 = vector.broadcast %217 : vector<1x128xf32> to vector<40x128xf32>
    %219 = arith.mulf %215, %218 : vector<40x128xf32>
    %c4_223 = arith.constant 4 : index
    %c0_224 = arith.constant 0 : index
    %c0_225 = arith.constant 0 : index
    %220 = vector.load %arg5[%c4_223, %c0_224, %c0_225] : memref<5x1x128xf32, #tpu.memory_space<vmem>>, vector<1x1x128xf32>
    %221 = vector.shape_cast %220 : vector<1x1x128xf32> to vector<1x128xf32>
    %222 = vector.broadcast %221 : vector<1x128xf32> to vector<40x128xf32>
    %223 = arith.addf %219, %222 : vector<40x128xf32>
    %224 = vector.extract_strided_slice %223 {offsets = [12, 0], sizes = [16, 128], strides = [1, 1]} : vector<40x128xf32> to vector<16x128xf32>
    %c0_226 = arith.constant 0 : index
    %c0_227 = arith.constant 0 : index
    %c0_228 = arith.constant 0 : index
    %225 = vector.load %arg6[%c0_226, %c0_227, %c0_228] : memref<1x16x128xf32, #tpu.memory_space<vmem>>, vector<1x16x128xf32>
    %226 = vector.shape_cast %225 : vector<1x16x128xf32> to vector<16x128xf32>
    %227 = vector.shape_cast %224 : vector<16x128xf32> to vector<1x16x128xf32>
    tpu.vector_store %arg6[%c0_226, %c0_227, %c0_228], %227 {strides = array<i32>} : memref<1x16x128xf32, #tpu.memory_space<vmem>>, vector<1x16x128xf32>,
    return
  }
  func.func @transform_1(%arg0: i32, %arg1: i32) -> (i32, i32, i32, i32) {
    %c0_i32 = arith.constant 0 : i32
    %c0_i32_0 = arith.constant 0 : i32
    %c0_i32_1 = arith.constant 0 : i32
    %c0_i32_2 = arith.constant 0 : i32
    %c0_i32_3 = arith.constant 0 : i32
    return %c0_i32, %c0_i32_0, %c0_i32_1, %c0_i32_2 : i32, i32, i32, i32
  }
  func.func @transform_2(%arg0: i32, %arg1: i32) -> (i32, i32, i32) {
    %c0_i32 = arith.constant 0 : i32
    %c0_i32_0 = arith.constant 0 : i32
    %c0_i32_1 = arith.constant 0 : i32
    %c0_i32_2 = arith.constant 0 : i32
    return %c0_i32, %c0_i32_0, %c0_i32_1 : i32, i32, i32
  }
  func.func @transform_3(%arg0: i32, %arg1: i32) -> (i32, i32, i32) {
    %c0_i32 = arith.constant 0 : i32
    %c0_i32_0 = arith.constant 0 : i32
    %c0_i32_1 = arith.constant 0 : i32
    %c0_i32_2 = arith.constant 0 : i32
    return %c0_i32, %c0_i32_0, %c0_i32_1 : i32, i32, i32
  }
  func.func @transform_4(%arg0: i32, %arg1: i32) -> (i32, i32, i32) {
    %c0_i32 = arith.constant 0 : i32
    %c0_i32_0 = arith.constant 0 : i32
    return %arg0, %arg1, %c0_i32 : i32, i32, i32
  }
}

</mosaic_0001>

<llo_original>
// kernel: tpu_custom_call.1
$region0: #{tpu_custom_call.1}
  #allocation0 [shape = 'u32[]', space=smem, size = 0x4, offset = 0x4, fixed_abs, tag = 'smem constant byte address 0x4 - core index']
  #allocation1 [shape = 'u32[144,128]{1,0:T(1,128)}', space=vmem, size = 0x12000, scoped, tag = 'internal scratch']
  #allocation2 [shape = 'bf16[56,128]{1,0:T(8,128)(2,1)}', space=vmem, size = 0x3800, scoped, tag = 'scratch operand']
  #allocation3 [shape = 'bf16[56,128]{1,0:T(8,128)(2,1)}', space=vmem, size = 0x3800, scoped, tag = 'scratch operand']
  #allocation4 [shape = 's32[1]{0}', space=sflag, size = 0x4, scoped, tag = 'scratch operand']
  #allocation9 [shape = 's32[]', space=sflag, size = 0x4, offset = 0, fixed_abs, tag = 'sflag constant byte address 0x0 - dummy sync flag']
  #allocation10 [shape = 's32[]', space=sflag, size = 0x4, offset = 0, fixed_abs, tag = 'sflag constant byte address 0x0 - dummy sync flag']
  #allocation11 [shape = 'u32[]', space=smem, size = 0x4, offset = 0x44, fixed_abs, tag = 'smem constant byte address 0x44 - assertion arg 0']
  #allocation12 [shape = 'u32[]', space=smem, size = 0x4, offset = 0x48, fixed_abs, tag = 'smem constant byte address 0x48 - assertion arg 1']
  %s0 = inlined_call_operand.hbm [shape: bf16[2,72,128], index: 0, kind: input, shape index: {}]
  %s1 = inlined_call_operand.hbm [shape: bf16[5,5,128,128], index: 1, kind: input, shape index: {}]
  %s2 = inlined_call_operand.vmem [shape: f32[5,1,128], index: 2, kind: input, shape index: {}]
  %s3 = inlined_call_operand.vmem [shape: f32[5,1,128], index: 3, kind: input, shape index: {}]
  %s4 = inlined_call_operand.hbm [shape: f32[2,48,128], index: 4, kind: output, shape index: {}]
  %s5 = sld [smem:[#allocation0]]
  $region53: #{tpu_custom_call.1} parent=0
    _
  %s7 = ssub.s32 1, %s5
  %s8 = scalar_select 0, %s7, %s5
  $region1: #{tpu_custom_call.1} parent=0
    #allocation5 [shape = 'u8[819200]{0}', space=vmem, size = 0xc8000, scoped, tag = 'input window, operand 1, single buffered']
    #allocation6 [shape = 's32[2]{0}', space=sflag, size = 0x8, scoped, tag = 'scoped memory for tpu_custom_call.1']
    #allocation7 [shape = 's32[2]{0}', space=sflag, size = 0x8, scoped, tag = 'scoped memory for tpu_custom_call.1']
    #allocation8 [shape = 'u8[16384]{0}', space=vmem, size = 0x4000, scoped, tag = 'output window, operand 0']
    %9 = vsyncpa [#allocation6], 0
    %10 = vsyncpa [#allocation7], 0
    %s11 = scalar_lea.sflag [#allocation7], 1
    %12 = vsyncpa %s11, 0
    loop: start=0, step=1, limit=8
    $region2: #{tpu_custom_call.1} parent=1 // loop_pre_header
      _
    $region3: #{tpu_custom_call.1} parent=1 // loop_header
      %s14 = sphi 0, %s18
      %p15 = scmp.ge.s32.totalorder %s14, 8
      %s21 = sphi 0, %s33
      %s22 = sphi 0, %s29
      %s23 = sphi 0, %s21
      %s24 = sphi 0, %s22
      %s25 = sphi 0, %s23
      %s26 = sphi 0, %s24
      %s34 = sphi 0, %s34
      %s36 = sphi 0, %s34
      %s37 = sphi 0, %s36
      %s51 = sphi 0, %s37
      %s55 = sphi 0, %s55
      %s57 = sphi 0, %s55
      %s58 = sphi 0, %s57
      %s72 = sphi 0, %s58
      %s76 = sphi 0, %s76
      %s78 = sphi 0, %s76
      %s79 = sphi 0, %s78
      %s93 = sphi 0, %s79
      %s101 = sphi 0, %s103
      %s104 = sphi 0, %s101
      %s105 = sphi 0, %s104
      %s121 = sphi 0, %s105
    $region4: #{tpu_custom_call.1} parent=1 // loop_header_branch
      %17 = sbr.rel (%p15) target = $region8
    $region5: #{tpu_custom_call.1} parent=1 // loop_body
      %s19 = ssub.s32 %s14, 1
      %s20 = ssub.s32 %s14, 2
      %s27 = sadd.s32 1, %s22
      %p28 = scmp.ge.s32.totalorder %s27, 3
      %s29 = scalar_select %p28, 0, %s27
      %s30 = sadd.s32 1, %s21
      %s31 = scalar_select %p28, %s30, %s21
      %p32 = scmp.ge.s32.totalorder %s31, 2
      %s33 = scalar_select %p32, 0, %s31
      %s35 = sadd.s32 %s34, 1
      %p38 = scmp.eq.s32.totalorder %s14, 5
      %p39 = scmp.ne.s32.totalorder %s34, %s36
      %p40 = scmp.eq.s32.totalorder %s14, 0
      %p41 = por %p39, %p40
      %p42 = scmp.ne.s32.totalorder %s34, %s36
      %p43 = scmp.eq.s32.totalorder %s19, 5
      %p44 = por %p42, %p43
      %p45 = scmp.ne.s32.totalorder %s36, %s37
      %p46 = scmp.eq.s32.totalorder %s19, 0
      %p47 = por %p45, %p46
      %p48 = scmp.ne.s32.totalorder %s36, %s37
      %p49 = scmp.eq.s32.totalorder %s20, 5
      %p50 = por %p48, %p49
      %p52 = scmp.ne.s32.totalorder %s37, %s51
      %p53 = scmp.eq.s32.totalorder %s20, 0
      %p54 = por %p52, %p53
      %s56 = sadd.s32 %s55, 1
      %p59 = scmp.eq.s32.totalorder %s14, 5
      %p60 = scmp.ne.s32.totalorder %s55, %s57
      %p61 = scmp.eq.s32.totalorder %s14, 0
      %p62 = por %p60, %p61
      %p63 = scmp.ne.s32.totalorder %s55, %s57
      %p64 = scmp.eq.s32.totalorder %s19, 5
      %p65 = por %p63, %p64
      %p66 = scmp.ne.s32.totalorder %s57, %s58
      %p67 = scmp.eq.s32.totalorder %s19, 0
      %p68 = por %p66, %p67
      %p69 = scmp.ne.s32.totalorder %s57, %s58
      %p70 = scmp.eq.s32.totalorder %s20, 5
      %p71 = por %p69, %p70
      %p73 = scmp.ne.s32.totalorder %s58, %s72
      %p74 = scmp.eq.s32.totalorder %s20, 0
      %p75 = por %p73, %p74
      %s77 = sadd.s32 %s76, 1
      %p80 = scmp.eq.s32.totalorder %s14, 5
      %p81 = scmp.ne.s32.totalorder %s76, %s78
      %p82 = scmp.eq.s32.totalorder %s14, 0
      %p83 = por %p81, %p82
      %p84 = scmp.ne.s32.totalorder %s76, %s78
      %p85 = scmp.eq.s32.totalorder %s19, 5
      %p86 = por %p84, %p85
      %p87 = scmp.ne.s32.totalorder %s78, %s79
      %p88 = scmp.eq.s32.totalorder %s19, 0
      %p89 = por %p87, %p88
      %p90 = scmp.ne.s32.totalorder %s78, %s79
      %p91 = scmp.eq.s32.totalorder %s20, 5
      %p92 = por %p90, %p91
      %p94 = scmp.ne.s32.totalorder %s79, %s93
      %p95 = scmp.eq.s32.totalorder %s20, 0
      %p96 = por %p94, %p95
      %s97 = ssub.s32 %s21, %s33
      %s98 = ssub.s32 %s22, %s29
      %s99 = sor.u32 %s97, %s98
      %p100 = scmp.eq.s32.totalorder %s99, 0
      %s102 = sadd.s32 %s101, 1
      %s103 = scalar_select %p100, %s101, %s102
      %p106 = pneg %p100
      %p107 = scmp.eq.s32.totalorder %s14, 5
      %p108 = por %p106, %p107
      %p109 = scmp.ne.s32.totalorder %s101, %s104
      %p110 = scmp.eq.s32.totalorder %s14, 0
      %p111 = por %p109, %p110
      %p112 = scmp.ne.s32.totalorder %s101, %s104
      %p113 = scmp.eq.s32.totalorder %s19, 5
      %p114 = por %p112, %p113
      %p115 = scmp.ne.s32.totalorder %s104, %s105
      %p116 = scmp.eq.s32.totalorder %s19, 0
      %p117 = por %p115, %p116
      %p118 = scmp.ne.s32.totalorder %s104, %s105
      %p119 = scmp.eq.s32.totalorder %s20, 5
      %p120 = por %p118, %p119
      %p122 = scmp.ne.s32.totalorder %s105, %s121
      %p123 = scmp.eq.s32.totalorder %s20, 0
      %p124 = por %p122, %p123
      %p125 = scmp.le.s32.totalorder 1, %s14
      %p126 = scmp.lt.s32.totalorder %s14, 7
      %p127 = pnand %p125, %p126
      %p128 = pneg %p127
      // Predicated region
      $region9: #{tpu_custom_call.1} parent=5 // pred_check
        _
      $region10: #{tpu_custom_call.1} parent=5 // pred_check_branch
        %130 = sbr.rel (%p127) target = $region12
      $region11: #{tpu_custom_call.1} parent=5 // pred_region
        %s131 = ssub.s32 %s14, 1
        // Predicated region
        $region13: #{tpu_custom_call.1} parent=11 // pred_check
          %p132 = pneg %p47
        $region14: #{tpu_custom_call.1} parent=11 // pred_check_branch
          %134 = sbr.rel (%p132) target = $region16
        $region15: #{tpu_custom_call.1} parent=11 // pred_region
          %s136 = ssub.s32 25600, 25600
          %137 = vsyncadd [#allocation6], %s136
          %s138 = sshll.u32 [#allocation5], 4
          %s139 = int_to_ptr.vmem [resolvable:$true] %s138
          %144 = dma.hbm_to_vmem [thread:$0]  %s1, 25600, %s139, [#allocation6], 64, 64, 4
        $region16: #{tpu_custom_call.1} parent=11 // pred_fallthru
          _
        // Predicated region
        $region17: #{tpu_custom_call.1} parent=11 // pred_check
          %p145 = pneg %p68
        $region18: #{tpu_custom_call.1} parent=11 // pred_check_branch
          %147 = sbr.rel (%p145) target = $region20
        $region19: #{tpu_custom_call.1} parent=11 // pred_region
          _
        $region20: #{tpu_custom_call.1} parent=11 // pred_fallthru
          _
        // Predicated region
        $region21: #{tpu_custom_call.1} parent=11 // pred_check
          %p148 = pneg %p89
        $region22: #{tpu_custom_call.1} parent=11 // pred_check_branch
          %150 = sbr.rel (%p148) target = $region24
        $region23: #{tpu_custom_call.1} parent=11 // pred_region
          _
        $region24: #{tpu_custom_call.1} parent=11 // pred_fallthru
          _
      $region12: #{tpu_custom_call.1} parent=5 // pred_fallthru
        _
      %p151 = scmp.lt.s32.totalorder %s14, 6
      // Predicated region
      $region25: #{tpu_custom_call.1} parent=5 // pred_check
        %p152 = pneg %p151
      $region26: #{tpu_custom_call.1} parent=5 // pred_check_branch
        %154 = sbr.rel (%p152) target = $region28
      $region27: #{tpu_custom_call.1} parent=5 // pred_region
        _
      $region28: #{tpu_custom_call.1} parent=5 // pred_fallthru
        _
      %p155 = scmp.le.s32.totalorder 1, %s14
      %p156 = scmp.lt.s32.totalorder %s14, 7
      %p157 = pnand %p155, %p156
      %p158 = pneg %p157
      // Predicated region
      $region29: #{tpu_custom_call.1} parent=5 // pred_check
        _
      $region30: #{tpu_custom_call.1} parent=5 // pred_check_branch
        %160 = sbr.rel (%p157) target = $region32
      $region31: #{tpu_custom_call.1} parent=5 // pred_region
        %s161 = ssub.s32 %s14, 1
        // Predicated region
        $region33: #{tpu_custom_call.1} parent=31 // pred_check
          %p162 = pneg %p47
        $region34: #{tpu_custom_call.1} parent=31 // pred_check_branch
          %164 = sbr.rel (%p162) target = $region36
        $region35: #{tpu_custom_call.1} parent=31 // pred_region
          %165 = dma.done [#allocation6], 25600
        $region36: #{tpu_custom_call.1} parent=31 // pred_fallthru
          _
        %p166 = pneg %p47
        %p167 = pneg %p44
        %p168 = pneg %p68
        %p169 = pneg %p65
        %p170 = pneg %p89
        %p171 = pneg %p86
        %p172 = pneg %p117
        %p173 = pneg %p114
        %s174 = sand.u32 %s104, 1
        %s175 = scalar_lea.sflag [#allocation7], %s174
        %s176 = sand.u32 %s104, 1
        %s177 = smul.addr %s176, 16
        %s178 = scalar_lea.vmem [#allocation8], %s177
        %s179 = smul.u32 2, %s24
        %s181 = smul.u32 %s24, 16
        %s182 = sshra.s32 %s181, 3
        %s183 = sand.u32 %s181, 7
        %s184 = smul.u32 %s23, 9
        %s185 = sadd.s32 %s182, %s184
        %s186 = smul.addr %s185, 64
        %s187 = scalar_lea.hbm %s0, %s186
        %s188 = scalar_lea.vmem [#allocation2], 4
        // Predicated region
        $region37: #{tpu_custom_call.1} parent=31 // pred_check
          _
        $region38: #{tpu_custom_call.1} parent=31 // pred_check_branch
          %190 = sbr.rel target = $region40
        $region39: #{tpu_custom_call.1} parent=31 // pred_region
          %191 = sst [smem:[#allocation11]] [#allocation10]
          %192 = sst [smem:[#allocation12]] [#allocation9]
        $region40: #{tpu_custom_call.1} parent=31 // pred_fallthru
          _
        %194 = shalt.err (0)
        %s196 = sshll.u32 %s188, 4
        %s197 = int_to_ptr.vmem [resolvable:$true] %s196
        %199 = dma.hbm_to_vmem [thread:$0]  %s187, 320, %s197, [#allocation4]
        %200 = vst [vmem:[#allocation2] sm:$0xf] 0
        %201 = vst [vmem:[#allocation2 + $0x18] sm:$0xf] 0
        %202 = vst [vmem:[#allocation3] sm:$0xf] 0
        %203 = vst [vmem:[#allocation3 + $0x18] sm:$0xf] 0
        %v204 = vlaneseq
        %v205 = vshrl.u32 %v204, 7
        %v206 = vadd.s32 %v205, 8
        %v207 = vadd.s32 %v205, 16
        %v208 = vadd.s32 %v205, 24
        %v209 = vadd.s32 %v205, 32
        %s210 = ssub.s32 %s181, 12
        %v211 = vstv %s210
        %v212 = vadd.s32 %v211, %v205
        %v213 = vadd.s32 %v211, %v206
        %v214 = vadd.s32 %v211, %v207
        %v215 = vadd.s32 %v211, %v208
        %v216 = vadd.s32 %v211, %v209
        %vm217 = vcmp.ge.s32.totalorder %v212, 0
        %vm218 = vcmp.ge.s32.totalorder %v213, 0
        %vm219 = vcmp.ge.s32.totalorder %v214, 0
        %vm220 = vcmp.ge.s32.totalorder %v215, 0
        %vm221 = vcmp.ge.s32.totalorder %v216, 0
        %vm222 = vcmp.lt.s32.totalorder %v212, 40
        %vm223 = vcmp.lt.s32.totalorder %v213, 40
        %vm224 = vcmp.lt.s32.totalorder %v214, 40
        %vm225 = vcmp.lt.s32.totalorder %v215, 40
        %vm226 = vcmp.lt.s32.totalorder %v216, 40
        %vm227 = vmand %vm217, %vm222
        %vm228 = vmand %vm218, %vm223
        %vm229 = vmand %vm219, %vm224
        %vm230 = vmand %vm220, %vm225
        %vm231 = vmand %vm221, %vm226
        %s232 = smul.u32 4, 5
        %s233 = smul.u32 %s232, 1
        %s234 = sshll.u32 %s233, 4
        %235 = dma.done [#allocation4], %s234
        %v236 = vld [vmem:[#allocation2] sm:$0x8]
        %v237 = vld [vmem:[#allocation2 + $0x4] sm:$0xf]
        %v238 = vld [vmem:[#allocation2 + $0x8] sm:$0xf]
        %v239 = vld [vmem:[#allocation2 + $0xc] sm:$0xf]
        %v240 = vld [vmem:[#allocation2 + $0x10] sm:$0xf]
        %v241 = vld [vmem:[#allocation2 + $0x14] sm:$0x7]
        %v242 = vld [vmem:[#allocation5] sm:$0xf]
        %v243 = vld [vmem:[#allocation5 + $0x4] sm:$0xf]
        %v244 = vld [vmem:[#allocation5 + $0x8] sm:$0xf]
        %v245 = vld [vmem:[#allocation5 + $0xc] sm:$0xf]
        %v246 = vld [vmem:[#allocation5 + $0x10] sm:$0xf]
        %v247 = vld [vmem:[#allocation5 + $0x14] sm:$0xf]
        %v248 = vld [vmem:[#allocation5 + $0x18] sm:$0xf]
        %v249 = vld [vmem:[#allocation5 + $0x1c] sm:$0xf]
        %v250 = vld [vmem:[#allocation5 + $0x20] sm:$0xf]
        %v251 = vld [vmem:[#allocation5 + $0x24] sm:$0xf]
        %v252 = vld [vmem:[#allocation5 + $0x28] sm:$0xf]
        %v253 = vld [vmem:[#allocation5 + $0x2c] sm:$0xf]
        %v254 = vld [vmem:[#allocation5 + $0x30] sm:$0xf]
        %v255 = vld [vmem:[#allocation5 + $0x34] sm:$0xf]
        %v256 = vld [vmem:[#allocation5 + $0x38] sm:$0xf]
        %v257 = vld [vmem:[#allocation5 + $0x3c] sm:$0xf]
        %v258 = vld [vmem:[#allocation2 + $0x14] sm:$0xf]
        %s259 = scalar_lea.vmem [#allocation5], 64
        %v260 = vld [vmem:[%s259] sm:$0xf]
        %v261 = vld [vmem:[%s259 + $0x4] sm:$0xf]
        %v262 = vld [vmem:[%s259 + $0x8] sm:$0xf]
        %v263 = vld [vmem:[%s259 + $0xc] sm:$0xf]
        %v264 = vld [vmem:[%s259 + $0x10] sm:$0xf]
        %v265 = vld [vmem:[%s259 + $0x14] sm:$0xf]
        %v266 = vld [vmem:[%s259 + $0x18] sm:$0xf]
        %v267 = vld [vmem:[%s259 + $0x1c] sm:$0xf]
        %v268 = vld [vmem:[%s259 + $0x20] sm:$0xf]
        %v269 = vld [vmem:[%s259 + $0x24] sm:$0xf]
        %v270 = vld [vmem:[%s259 + $0x28] sm:$0xf]
        %v271 = vld [vmem:[%s259 + $0x2c] sm:$0xf]
        %v272 = vld [vmem:[%s259 + $0x30] sm:$0xf]
        %v273 = vld [vmem:[%s259 + $0x34] sm:$0xf]
        %v274 = vld [vmem:[%s259 + $0x38] sm:$0xf]
        %v275 = vld [vmem:[%s259 + $0x3c] sm:$0xf]
        %v282 = vunpack.c.l.b16 %v236
        %v283 = vunpack.c.l.b16 %v237
        %v284 = vunpack.c.l.b16 %v238
        %v285 = vunpack.c.l.b16 %v239
        %v286 = vunpack.c.l.b16 %v240
        %v287 = vunpack.c.l.b16 %v258
        %v288 = vpack.c.b16 %v283, %v282
        %v289 = vpack.c.b16 %v285, %v284
        %v290 = vpack.c.b16 %v287, %v286
        %vm291 = vsmask.f32 4352
        %v293 = vshrl.u32 %v288, 16
        %v295 = vrot.slane %v293, 3
        %v296 = vshll.u32 %v288, 16
        %v298 = vrot.slane %v296, 4
        %v299 = vor.u32 %v295, %v298
        %v301 = vshrl.u32 %v289, 16
        %v303 = vrot.slane %v301, 3
        %v304 = vshll.u32 %v289, 16
        %v306 = vrot.slane %v304, 4
        %v307 = vor.u32 %v303, %v306
        %v308 = vsel %vm291, %v299, %v307
        %v310 = vshrl.u32 %v290, 16
        %v312 = vrot.slane %v310, 3
        %v313 = vshll.u32 %v290, 16
        %v315 = vrot.slane %v313, 4
        %v316 = vor.u32 %v312, %v315
        %v317 = vsel %vm291, %v307, %v316
        %v337 = vunpack.c.l.b16 %v260
        %v338 = vunpack.c.l.b16 %v261
        %v339 = vunpack.c.l.b16 %v262
        %v340 = vunpack.c.l.b16 %v263
        %v341 = vunpack.c.l.b16 %v264
        %v342 = vunpack.c.l.b16 %v265
        %v343 = vunpack.c.l.b16 %v266
        %v344 = vunpack.c.l.b16 %v267
        %v345 = vunpack.c.l.b16 %v268
        %v346 = vunpack.c.l.b16 %v269
        %v347 = vunpack.c.l.b16 %v270
        %v348 = vunpack.c.l.b16 %v271
        %v349 = vunpack.c.l.b16 %v272
        %v350 = vunpack.c.l.b16 %v273
        %v351 = vunpack.c.l.b16 %v274
        %v352 = vunpack.c.l.b16 %v275
        %v353 = vpack.c.b16 %v338, %v337
        %v354 = vpack.c.b16 %v340, %v339
        %v355 = vpack.c.b16 %v342, %v341
        %v356 = vpack.c.b16 %v344, %v343
        %v357 = vpack.c.b16 %v346, %v345
        %v358 = vpack.c.b16 %v348, %v347
        %v359 = vpack.c.b16 %v350, %v349
        %v360 = vpack.c.b16 %v352, %v351
        %369 = vmatprep.subr.bf16.mxu0 0
        %370 = vmatpush1.bf16.msra.mxu0 %v353
        %371 = vmatprep.subr.bf16.mxu0 0
        %372 = vmatpush1.bf16.msra.mxu0 %v354
        %373 = vmatprep.subr.bf16.mxu0 0
        %374 = vmatpush1.bf16.msra.mxu0 %v355
        %375 = vmatprep.subr.bf16.mxu0 0
        %376 = vmatpush1.bf16.msra.mxu0 %v356
        %377 = vmatprep.subr.bf16.mxu0 0
        %378 = vmatpush1.bf16.msra.mxu0 %v357
        %379 = vmatprep.subr.bf16.mxu0 0
        %380 = vmatpush1.bf16.msra.mxu0 %v358
        %381 = vmatprep.subr.bf16.mxu0 0
        %382 = vmatpush1.bf16.msra.mxu0 %v359
        %383 = vmatprep.subr.bf16.mxu0 0
        %384 = vmatpush1.bf16.msra.mxu0 %v360
        %385 = vmatprep.subr.bf16.mxu0 0
        %386 = vmatpush1.bf16.msra.mxu0 0
        %387 = vmatprep.subr.bf16.mxu0 0
        %388 = vmatpush1.bf16.msra.mxu0 0
        %389 = vmatprep.subr.bf16.mxu0 0
        %390 = vmatpush1.bf16.msra.mxu0 0
        %391 = vmatprep.subr.bf16.mxu0 0
        %392 = vmatpush1.bf16.msra.mxu0 0
        %393 = vmatprep.subr.bf16.mxu0 0
        %394 = vmatpush1.bf16.msra.mxu0 0
        %395 = vmatprep.subr.bf16.mxu0 0
        %396 = vmatpush1.bf16.msra.mxu0 0
        %397 = vmatprep.subr.bf16.mxu0 0
        %398 = vmatpush1.bf16.msra.mxu0 0
        %399 = vmatprep.subr.bf16.mxu0 0
        %400 = vmatpush1.bf16.msra.mxu0 0
        %401 = vmatprep.mubr.bf16.mxu0 0
        %402 = vmatmul.mubr.bf16.gmra.mrb[0].mxu0 %v308
        %v403 = vpop.f32.mrb[0].mxu0
        %v404 = vadd.f32 0.0, %v403
        %v405 = vpop.f32.mrb[0].mxu0
        %v406 = vpop.f32.mrb[0].mxu0
        %v407 = vadd.f32 0.0, %v406
        %v408 = vpop.f32.mrb[0].mxu0
        %409 = vmatprep.mubr.bf16.mxu0 0
        %410 = vmatmul.mubr.bf16.gmra.mrb[0].mxu0 %v317
        %v411 = vpop.f32.mrb[0].mxu0
        %v412 = vadd.f32 0.0, %v411
        %v413 = vpop.f32.mrb[0].mxu0
        %v414 = vpop.f32.mrb[0].mxu0
        %v415 = vadd.f32 0.0, %v414
        %v416 = vpop.f32.mrb[0].mxu0
        %417 = vmatprep.mubr.bf16.mxu0 0
        %418 = vmatmul.mubr.bf16.gmra.mrb[0].mxu0 %v316
        %v419 = vpop.f32.mrb[0].mxu0
        %v420 = vadd.f32 0.0, %v419
        %v421 = vpop.f32.mrb[0].mxu0
        %v422 = vpop.f32.mrb[0].mxu0
        %v423 = vpop.f32.mrb[0].mxu0
        %424 = vdwg.mxu0
        %v426 = vunpack.c.l.b16 %v241
        %v427 = vpack.c.b16 %v426, %v286
        %vm428 = vcmask 1044480
        %v429 = vrot.slane %v288, 3
        %v430 = vrot.slane %v289, 3
        %v431 = vsel %vm428, %v429, %v430
        %v432 = vrot.slane %v427, 3
        %v433 = vsel %vm428, %v430, %v432
        %v453 = vunpack.c.l.b16 %v242
        %v454 = vunpack.c.l.b16 %v243
        %v455 = vunpack.c.l.b16 %v244
        %v456 = vunpack.c.l.b16 %v245
        %v457 = vunpack.c.l.b16 %v246
        %v458 = vunpack.c.l.b16 %v247
        %v459 = vunpack.c.l.b16 %v248
        %v460 = vunpack.c.l.b16 %v249
        %v461 = vunpack.c.l.b16 %v250
        %v462 = vunpack.c.l.b16 %v251
        %v463 = vunpack.c.l.b16 %v252
        %v464 = vunpack.c.l.b16 %v253
        %v465 = vunpack.c.l.b16 %v254
        %v466 = vunpack.c.l.b16 %v255
        %v467 = vunpack.c.l.b16 %v256
        %v468 = vunpack.c.l.b16 %v257
        %v469 = vpack.c.b16 %v454, %v453
        %v470 = vpack.c.b16 %v456, %v455
        %v471 = vpack.c.b16 %v458, %v457
        %v472 = vpack.c.b16 %v460, %v459
        %v473 = vpack.c.b16 %v462, %v461
        %v474 = vpack.c.b16 %v464, %v463
        %v475 = vpack.c.b16 %v466, %v465
        %v476 = vpack.c.b16 %v468, %v467
        %485 = vmatprep.subr.bf16.mxu0 0
        %486 = vmatpush1.bf16.msra.mxu0 %v469
        %487 = vmatprep.subr.bf16.mxu0 0
        %488 = vmatpush1.bf16.msra.mxu0 %v470
        %489 = vmatprep.subr.bf16.mxu0 0
        %490 = vmatpush1.bf16.msra.mxu0 %v471
        %491 = vmatprep.subr.bf16.mxu0 0
        %492 = vmatpush1.bf16.msra.mxu0 %v472
        %493 = vmatprep.subr.bf16.mxu0 0
        %494 = vmatpush1.bf16.msra.mxu0 %v473
        %495 = vmatprep.subr.bf16.mxu0 0
        %496 = vmatpush1.bf16.msra.mxu0 %v474
        %497 = vmatprep.subr.bf16.mxu0 0
        %498 = vmatpush1.bf16.msra.mxu0 %v475
        %499 = vmatprep.subr.bf16.mxu0 0
        %500 = vmatpush1.bf16.msra.mxu0 %v476
        %501 = vmatprep.subr.bf16.mxu0 0
        %502 = vmatpush1.bf16.msra.mxu0 0
        %503 = vmatprep.subr.bf16.mxu0 0
        %504 = vmatpush1.bf16.msra.mxu0 0
        %505 = vmatprep.subr.bf16.mxu0 0
        %506 = vmatpush1.bf16.msra.mxu0 0
        %507 = vmatprep.subr.bf16.mxu0 0
        %508 = vmatpush1.bf16.msra.mxu0 0
        %509 = vmatprep.subr.bf16.mxu0 0
        %510 = vmatpush1.bf16.msra.mxu0 0
        %511 = vmatprep.subr.bf16.mxu0 0
        %512 = vmatpush1.bf16.msra.mxu0 0
        %513 = vmatprep.subr.bf16.mxu0 0
        %514 = vmatpush1.bf16.msra.mxu0 0
        %515 = vmatprep.subr.bf16.mxu0 0
        %516 = vmatpush1.bf16.msra.mxu0 0
        %517 = vmatprep.mubr.bf16.mxu0 0
        %518 = vmatmul.mubr.bf16.gmra.mrb[0].mxu0 %v431
        %v519 = vpop.f32.mrb[0].mxu0
        %v520 = vadd.f32 %v404, %v519
        %v521 = vpop.f32.mrb[0].mxu0
        %v522 = vpop.f32.mrb[0].mxu0
        %v523 = vadd.f32 %v407, %v522
        %v524 = vpop.f32.mrb[0].mxu0
        %525 = vmatprep.mubr.bf16.mxu0 0
        %526 = vmatmul.mubr.bf16.gmra.mrb[0].mxu0 %v433
        %v527 = vpop.f32.mrb[0].mxu0
        %v528 = vadd.f32 %v412, %v527
        %v529 = vpop.f32.mrb[0].mxu0
        %v530 = vpop.f32.mrb[0].mxu0
        %v531 = vadd.f32 %v415, %v530
        %v532 = vpop.f32.mrb[0].mxu0
        %533 = vmatprep.mubr.bf16.mxu0 0
        %534 = vmatmul.mubr.bf16.gmra.mrb[0].mxu0 %v432
        %v535 = vpop.f32.mrb[0].mxu0
        %v536 = vadd.f32 %v420, %v535
        %v537 = vpop.f32.mrb[0].mxu0
        %v538 = vpop.f32.mrb[0].mxu0
        %v539 = vpop.f32.mrb[0].mxu0
        %540 = vdwg.mxu0
        %s541 = scalar_lea.vmem [#allocation5], 128
        %v542 = vld [vmem:[%s541] sm:$0xf]
        %v543 = vld [vmem:[%s541 + $0x4] sm:$0xf]
        %v544 = vld [vmem:[%s541 + $0x8] sm:$0xf]
        %v545 = vld [vmem:[%s541 + $0xc] sm:$0xf]
        %v546 = vld [vmem:[%s541 + $0x10] sm:$0xf]
        %v547 = vld [vmem:[%s541 + $0x14] sm:$0xf]
        %v548 = vld [vmem:[%s541 + $0x18] sm:$0xf]
        %v549 = vld [vmem:[%s541 + $0x1c] sm:$0xf]
        %v550 = vld [vmem:[%s541 + $0x20] sm:$0xf]
        %v551 = vld [vmem:[%s541 + $0x24] sm:$0xf]
        %v552 = vld [vmem:[%s541 + $0x28] sm:$0xf]
        %v553 = vld [vmem:[%s541 + $0x2c] sm:$0xf]
        %v554 = vld [vmem:[%s541 + $0x30] sm:$0xf]
        %v555 = vld [vmem:[%s541 + $0x34] sm:$0xf]
        %v556 = vld [vmem:[%s541 + $0x38] sm:$0xf]
        %v557 = vld [vmem:[%s541 + $0x3c] sm:$0xf]
        %v558 = vpack.c.b16 %v284, %v283
        %v559 = vpack.c.b16 %v286, %v285
        %v560 = vpack.c.b16 %v287, %v287
        %v580 = vunpack.c.l.b16 %v542
        %v581 = vunpack.c.l.b16 %v543
        %v582 = vunpack.c.l.b16 %v544
        %v583 = vunpack.c.l.b16 %v545
        %v584 = vunpack.c.l.b16 %v546
        %v585 = vunpack.c.l.b16 %v547
        %v586 = vunpack.c.l.b16 %v548
        %v587 = vunpack.c.l.b16 %v549
        %v588 = vunpack.c.l.b16 %v550
        %v589 = vunpack.c.l.b16 %v551
        %v590 = vunpack.c.l.b16 %v552
        %v591 = vunpack.c.l.b16 %v553
        %v592 = vunpack.c.l.b16 %v554
        %v593 = vunpack.c.l.b16 %v555
        %v594 = vunpack.c.l.b16 %v556
        %v595 = vunpack.c.l.b16 %v557
        %v596 = vpack.c.b16 %v581, %v580
        %v597 = vpack.c.b16 %v583, %v582
        %v598 = vpack.c.b16 %v585, %v584
        %v599 = vpack.c.b16 %v587, %v586
        %v600 = vpack.c.b16 %v589, %v588
        %v601 = vpack.c.b16 %v591, %v590
        %v602 = vpack.c.b16 %v593, %v592
        %v603 = vpack.c.b16 %v595, %v594
        %612 = vmatprep.subr.bf16.mxu0 0
        %613 = vmatpush1.bf16.msra.mxu0 %v596
        %614 = vmatprep.subr.bf16.mxu0 0
        %615 = vmatpush1.bf16.msra.mxu0 %v597
        %616 = vmatprep.subr.bf16.mxu0 0
        %617 = vmatpush1.bf16.msra.mxu0 %v598
        %618 = vmatprep.subr.bf16.mxu0 0
        %619 = vmatpush1.bf16.msra.mxu0 %v599
        %620 = vmatprep.subr.bf16.mxu0 0
        %621 = vmatpush1.bf16.msra.mxu0 %v600
        %622 = vmatprep.subr.bf16.mxu0 0
        %623 = vmatpush1.bf16.msra.mxu0 %v601
        %624 = vmatprep.subr.bf16.mxu0 0
        %625 = vmatpush1.bf16.msra.mxu0 %v602
        %626 = vmatprep.subr.bf16.mxu0 0
        %627 = vmatpush1.bf16.msra.mxu0 %v603
        %628 = vmatprep.subr.bf16.mxu0 0
        %629 = vmatpush1.bf16.msra.mxu0 0
        %630 = vmatprep.subr.bf16.mxu0 0
        %631 = vmatpush1.bf16.msra.mxu0 0
        %632 = vmatprep.subr.bf16.mxu0 0
        %633 = vmatpush1.bf16.msra.mxu0 0
        %634 = vmatprep.subr.bf16.mxu0 0
        %635 = vmatpush1.bf16.msra.mxu0 0
        %636 = vmatprep.subr.bf16.mxu0 0
        %637 = vmatpush1.bf16.msra.mxu0 0
        %638 = vmatprep.subr.bf16.mxu0 0
        %639 = vmatpush1.bf16.msra.mxu0 0
        %640 = vmatprep.subr.bf16.mxu0 0
        %641 = vmatpush1.bf16.msra.mxu0 0
        %642 = vmatprep.subr.bf16.mxu0 0
        %643 = vmatpush1.bf16.msra.mxu0 0
        %644 = vmatprep.mubr.bf16.mxu0 0
        %645 = vmatmul.mubr.bf16.gmra.mrb[0].mxu0 %v558
        %v646 = vpop.f32.mrb[0].mxu0
        %v647 = vadd.f32 0.0, %v646
        %v648 = vpop.f32.mrb[0].mxu0
        %v649 = vpop.f32.mrb[0].mxu0
        %v650 = vadd.f32 0.0, %v649
        %v651 = vpop.f32.mrb[0].mxu0
        %652 = vmatprep.mubr.bf16.mxu0 0
        %653 = vmatmul.mubr.bf16.gmra.mrb[0].mxu0 %v559
        %v654 = vpop.f32.mrb[0].mxu0
        %v655 = vadd.f32 0.0, %v654
        %v656 = vpop.f32.mrb[0].mxu0
        %v657 = vpop.f32.mrb[0].mxu0
        %v658 = vadd.f32 0.0, %v657
        %v659 = vpop.f32.mrb[0].mxu0
        %660 = vmatprep.mubr.bf16.mxu0 0
        %661 = vmatmul.mubr.bf16.gmra.mrb[0].mxu0 %v560
        %v662 = vpop.f32.mrb[0].mxu0
        %v663 = vadd.f32 0.0, %v662
        %v664 = vpop.f32.mrb[0].mxu0
        %v665 = vpop.f32.mrb[0].mxu0
        %v666 = vpop.f32.mrb[0].mxu0
        %667 = vdwg.mxu0
        %v668 = vadd.f32 %v520, %v647
        %v669 = vadd.f32 %v523, %v650
        %v670 = vadd.f32 %v528, %v655
        %v671 = vadd.f32 %v531, %v658
        %v672 = vadd.f32 %v536, %v663
        %v673 = vld [vmem:[#allocation2 + $0x4] sm:$0xf]
        %v674 = vld [vmem:[#allocation2 + $0x8] sm:$0xf]
        %v675 = vld [vmem:[#allocation2 + $0xc] sm:$0xf]
        %v676 = vld [vmem:[#allocation2 + $0x10] sm:$0xf]
        %v677 = vld [vmem:[#allocation2 + $0x14] sm:$0xf]
        %v678 = vld [vmem:[#allocation2 + $0x18] sm:$0x1]
        %s679 = scalar_lea.vmem [#allocation5], 192
        %v680 = vld [vmem:[%s679] sm:$0xf]
        %v681 = vld [vmem:[%s679 + $0x4] sm:$0xf]
        %v682 = vld [vmem:[%s679 + $0x8] sm:$0xf]
        %v683 = vld [vmem:[%s679 + $0xc] sm:$0xf]
        %v684 = vld [vmem:[%s679 + $0x10] sm:$0xf]
        %v685 = vld [vmem:[%s679 + $0x14] sm:$0xf]
        %v686 = vld [vmem:[%s679 + $0x18] sm:$0xf]
        %v687 = vld [vmem:[%s679 + $0x1c] sm:$0xf]
        %v688 = vld [vmem:[%s679 + $0x20] sm:$0xf]
        %v689 = vld [vmem:[%s679 + $0x24] sm:$0xf]
        %v690 = vld [vmem:[%s679 + $0x28] sm:$0xf]
        %v691 = vld [vmem:[%s679 + $0x2c] sm:$0xf]
        %v692 = vld [vmem:[%s679 + $0x30] sm:$0xf]
        %v693 = vld [vmem:[%s679 + $0x34] sm:$0xf]
        %v694 = vld [vmem:[%s679 + $0x38] sm:$0xf]
        %v695 = vld [vmem:[%s679 + $0x3c] sm:$0xf]
        %v702 = vunpack.c.l.b16 %v673
        %v703 = vunpack.c.l.b16 %v674
        %v704 = vunpack.c.l.b16 %v675
        %v705 = vunpack.c.l.b16 %v676
        %v706 = vunpack.c.l.b16 %v677
        %v707 = vunpack.c.l.b16 %v678
        %v708 = vpack.c.b16 %v703, %v702
        %v709 = vpack.c.b16 %v705, %v704
        %v710 = vpack.c.b16 %v707, %v706
        %vm711 = vsmask.f32 7424
        %v713 = vshrl.u32 %v708, 16
        %v715 = vshll.u32 %v708, 16
        %v717 = vrot.slane %v715, 1
        %v718 = vor.u32 %v713, %v717
        %v720 = vshll.u32 %v709, 16
        %v722 = vrot.slane %v720, 1
        %v723 = vsel %vm711, %v718, %v722
        %v724 = vshrl.u32 %v709, 16
        %v726 = vor.u32 %v724, %v722
        %v728 = vshll.u32 %v710, 16
        %v730 = vrot.slane %v728, 1
        %v731 = vsel %vm711, %v726, %v730
        %v732 = vshrl.u32 %v710, 16
        %v734 = vor.u32 %v732, %v730
        %v754 = vunpack.c.l.b16 %v680
        %v755 = vunpack.c.l.b16 %v681
        %v756 = vunpack.c.l.b16 %v682
        %v757 = vunpack.c.l.b16 %v683
        %v758 = vunpack.c.l.b16 %v684
        %v759 = vunpack.c.l.b16 %v685
        %v760 = vunpack.c.l.b16 %v686
        %v761 = vunpack.c.l.b16 %v687
        %v762 = vunpack.c.l.b16 %v688
        %v763 = vunpack.c.l.b16 %v689
        %v764 = vunpack.c.l.b16 %v690
        %v765 = vunpack.c.l.b16 %v691
        %v766 = vunpack.c.l.b16 %v692
        %v767 = vunpack.c.l.b16 %v693
        %v768 = vunpack.c.l.b16 %v694
        %v769 = vunpack.c.l.b16 %v695
        %v770 = vpack.c.b16 %v755, %v754
        %v771 = vpack.c.b16 %v757, %v756
        %v772 = vpack.c.b16 %v759, %v758
        %v773 = vpack.c.b16 %v761, %v760
        %v774 = vpack.c.b16 %v763, %v762
        %v775 = vpack.c.b16 %v765, %v764
        %v776 = vpack.c.b16 %v767, %v766
        %v777 = vpack.c.b16 %v769, %v768
        %786 = vmatprep.subr.bf16.mxu0 0
        %787 = vmatpush1.bf16.msra.mxu0 %v770
        %788 = vmatprep.subr.bf16.mxu0 0
        %789 = vmatpush1.bf16.msra.mxu0 %v771
        %790 = vmatprep.subr.bf16.mxu0 0
        %791 = vmatpush1.bf16.msra.mxu0 %v772
        %792 = vmatprep.subr.bf16.mxu0 0
        %793 = vmatpush1.bf16.msra.mxu0 %v773
        %794 = vmatprep.subr.bf16.mxu0 0
        %795 = vmatpush1.bf16.msra.mxu0 %v774
        %796 = vmatprep.subr.bf16.mxu0 0
        %797 = vmatpush1.bf16.msra.mxu0 %v775
        %798 = vmatprep.subr.bf16.mxu0 0
        %799 = vmatpush1.bf16.msra.mxu0 %v776
        %800 = vmatprep.subr.bf16.mxu0 0
        %801 = vmatpush1.bf16.msra.mxu0 %v777
        %802 = vmatprep.subr.bf16.mxu0 0
        %803 = vmatpush1.bf16.msra.mxu0 0
        %804 = vmatprep.subr.bf16.mxu0 0
        %805 = vmatpush1.bf16.msra.mxu0 0
        %806 = vmatprep.subr.bf16.mxu0 0
        %807 = vmatpush1.bf16.msra.mxu0 0
        %808 = vmatprep.subr.bf16.mxu0 0
        %809 = vmatpush1.bf16.msra.mxu0 0
        %810 = vmatprep.subr.bf16.mxu0 0
        %811 = vmatpush1.bf16.msra.mxu0 0
        %812 = vmatprep.subr.bf16.mxu0 0
        %813 = vmatpush1.bf16.msra.mxu0 0
        %814 = vmatprep.subr.bf16.mxu0 0
        %815 = vmatpush1.bf16.msra.mxu0 0
        %816 = vmatprep.subr.bf16.mxu0 0
        %817 = vmatpush1.bf16.msra.mxu0 0
        %818 = vmatprep.mubr.bf16.mxu0 0
        %819 = vmatmul.mubr.bf16.gmra.mrb[0].mxu0 %v723
        %v820 = vpop.f32.mrb[0].mxu0
        %v821 = vadd.f32 0.0, %v820
        %v822 = vpop.f32.mrb[0].mxu0
        %v823 = vpop.f32.mrb[0].mxu0
        %v824 = vadd.f32 0.0, %v823
        %v825 = vpop.f32.mrb[0].mxu0
        %826 = vmatprep.mubr.bf16.mxu0 0
        %827 = vmatmul.mubr.bf16.gmra.mrb[0].mxu0 %v731
        %v828 = vpop.f32.mrb[0].mxu0
        %v829 = vadd.f32 0.0, %v828
        %v830 = vpop.f32.mrb[0].mxu0
        %v831 = vpop.f32.mrb[0].mxu0
        %v832 = vadd.f32 0.0, %v831
        %v833 = vpop.f32.mrb[0].mxu0
        %834 = vmatprep.mubr.bf16.mxu0 0
        %835 = vmatmul.mubr.bf16.gmra.mrb[0].mxu0 %v734
        %v836 = vpop.f32.mrb[0].mxu0
        %v837 = vadd.f32 0.0, %v836
        %v838 = vpop.f32.mrb[0].mxu0
        %v839 = vpop.f32.mrb[0].mxu0
        %v840 = vpop.f32.mrb[0].mxu0
        %841 = vdwg.mxu0
        %v842 = vadd.f32 %v668, %v821
        %v843 = vadd.f32 %v669, %v824
        %v844 = vadd.f32 %v670, %v829
        %v845 = vadd.f32 %v671, %v832
        %v846 = vadd.f32 %v672, %v837
        %v847 = vld [vmem:[#allocation2 + $0x4] sm:$0xe]
        %s848 = scalar_lea.vmem [#allocation5], 256
        %v849 = vld [vmem:[%s848] sm:$0xf]
        %v850 = vld [vmem:[%s848 + $0x4] sm:$0xf]
        %v851 = vld [vmem:[%s848 + $0x8] sm:$0xf]
        %v852 = vld [vmem:[%s848 + $0xc] sm:$0xf]
        %v853 = vld [vmem:[%s848 + $0x10] sm:$0xf]
        %v854 = vld [vmem:[%s848 + $0x14] sm:$0xf]
        %v855 = vld [vmem:[%s848 + $0x18] sm:$0xf]
        %v856 = vld [vmem:[%s848 + $0x1c] sm:$0xf]
        %v857 = vld [vmem:[%s848 + $0x20] sm:$0xf]
        %v858 = vld [vmem:[%s848 + $0x24] sm:$0xf]
        %v859 = vld [vmem:[%s848 + $0x28] sm:$0xf]
        %v860 = vld [vmem:[%s848 + $0x2c] sm:$0xf]
        %v861 = vld [vmem:[%s848 + $0x30] sm:$0xf]
        %v862 = vld [vmem:[%s848 + $0x34] sm:$0xf]
        %v863 = vld [vmem:[%s848 + $0x38] sm:$0xf]
        %v864 = vld [vmem:[%s848 + $0x3c] sm:$0xf]
        %v866 = vunpack.c.l.b16 %v847
        %v867 = vpack.c.b16 %v703, %v866
        %vm868 = vcmask 1046528
        %v869 = vrot.slane %v867, 1
        %v870 = vrot.slane %v709, 1
        %v871 = vsel %vm868, %v869, %v870
        %v872 = vrot.slane %v710, 1
        %v873 = vsel %vm868, %v870, %v872
        %v893 = vunpack.c.l.b16 %v849
        %v894 = vunpack.c.l.b16 %v850
        %v895 = vunpack.c.l.b16 %v851
        %v896 = vunpack.c.l.b16 %v852
        %v897 = vunpack.c.l.b16 %v853
        %v898 = vunpack.c.l.b16 %v854
        %v899 = vunpack.c.l.b16 %v855
        %v900 = vunpack.c.l.b16 %v856
        %v901 = vunpack.c.l.b16 %v857
        %v902 = vunpack.c.l.b16 %v858
        %v903 = vunpack.c.l.b16 %v859
        %v904 = vunpack.c.l.b16 %v860
        %v905 = vunpack.c.l.b16 %v861
        %v906 = vunpack.c.l.b16 %v862
        %v907 = vunpack.c.l.b16 %v863
        %v908 = vunpack.c.l.b16 %v864
        %v909 = vpack.c.b16 %v894, %v893
        %v910 = vpack.c.b16 %v896, %v895
        %v911 = vpack.c.b16 %v898, %v897
        %v912 = vpack.c.b16 %v900, %v899
        %v913 = vpack.c.b16 %v902, %v901
        %v914 = vpack.c.b16 %v904, %v903
        %v915 = vpack.c.b16 %v906, %v905
        %v916 = vpack.c.b16 %v908, %v907
        %925 = vmatprep.subr.bf16.mxu0 0
        %926 = vmatpush1.bf16.msra.mxu0 %v909
        %927 = vmatprep.subr.bf16.mxu0 0
        %928 = vmatpush1.bf16.msra.mxu0 %v910
        %929 = vmatprep.subr.bf16.mxu0 0
        %930 = vmatpush1.bf16.msra.mxu0 %v911
        %931 = vmatprep.subr.bf16.mxu0 0
        %932 = vmatpush1.bf16.msra.mxu0 %v912
        %933 = vmatprep.subr.bf16.mxu0 0
        %934 = vmatpush1.bf16.msra.mxu0 %v913
        %935 = vmatprep.subr.bf16.mxu0 0
        %936 = vmatpush1.bf16.msra.mxu0 %v914
        %937 = vmatprep.subr.bf16.mxu0 0
        %938 = vmatpush1.bf16.msra.mxu0 %v915
        %939 = vmatprep.subr.bf16.mxu0 0
        %940 = vmatpush1.bf16.msra.mxu0 %v916
        %941 = vmatprep.subr.bf16.mxu0 0
        %942 = vmatpush1.bf16.msra.mxu0 0
        %943 = vmatprep.subr.bf16.mxu0 0
        %944 = vmatpush1.bf16.msra.mxu0 0
        %945 = vmatprep.subr.bf16.mxu0 0
        %946 = vmatpush1.bf16.msra.mxu0 0
        %947 = vmatprep.subr.bf16.mxu0 0
        %948 = vmatpush1.bf16.msra.mxu0 0
        %949 = vmatprep.subr.bf16.mxu0 0
        %950 = vmatpush1.bf16.msra.mxu0 0
        %951 = vmatprep.subr.bf16.mxu0 0
        %952 = vmatpush1.bf16.msra.mxu0 0
        %953 = vmatprep.subr.bf16.mxu0 0
        %954 = vmatpush1.bf16.msra.mxu0 0
        %955 = vmatprep.subr.bf16.mxu0 0
        %956 = vmatpush1.bf16.msra.mxu0 0
        %957 = vmatprep.mubr.bf16.mxu0 0
        %958 = vmatmul.mubr.bf16.gmra.mrb[0].mxu0 %v871
        %v959 = vpop.f32.mrb[0].mxu0
        %v960 = vadd.f32 0.0, %v959
        %v961 = vpop.f32.mrb[0].mxu0
        %v962 = vpop.f32.mrb[0].mxu0
        %v963 = vadd.f32 0.0, %v962
        %v964 = vpop.f32.mrb[0].mxu0
        %965 = vmatprep.mubr.bf16.mxu0 0
        %966 = vmatmul.mubr.bf16.gmra.mrb[0].mxu0 %v873
        %v967 = vpop.f32.mrb[0].mxu0
        %v968 = vadd.f32 0.0, %v967
        %v969 = vpop.f32.mrb[0].mxu0
        %v970 = vpop.f32.mrb[0].mxu0
        %v971 = vadd.f32 0.0, %v970
        %v972 = vpop.f32.mrb[0].mxu0
        %973 = vmatprep.mubr.bf16.mxu0 0
        %974 = vmatmul.mubr.bf16.gmra.mrb[0].mxu0 %v872
        %v975 = vpop.f32.mrb[0].mxu0
        %v976 = vadd.f32 0.0, %v975
        %v977 = vpop.f32.mrb[0].mxu0
        %v978 = vpop.f32.mrb[0].mxu0
        %v979 = vpop.f32.mrb[0].mxu0
        %980 = vdwg.mxu0
        %v981 = vadd.f32 %v842, %v960
        %v982 = vadd.f32 %v843, %v963
        %v983 = vadd.f32 %v844, %v968
        %v984 = vadd.f32 %v845, %v971
        %v985 = vadd.f32 %v846, %v976
        %v986 = vld [vmem:[%s2] sm:$0x1]
        %v988 = vlaneseq
        %v989 = vshrl.u32 %v988, 7
        %v990 = vsub.s32 0, %v989
        %v991 = vrot.slane %v986, %v990
        %v993 = vmul.f32 %v981, %v991
        %v994 = vmul.f32 %v982, %v991
        %v995 = vmul.f32 %v983, %v991
        %v996 = vmul.f32 %v984, %v991
        %v997 = vmul.f32 %v985, %v991
        %v998 = vld [vmem:[%s3] sm:$0x1]
        %v1000 = vlaneseq
        %v1001 = vshrl.u32 %v1000, 7
        %v1002 = vsub.s32 0, %v1001
        %v1003 = vrot.slane %v998, %v1002
        %v1005 = vadd.f32 %v993, %v1003
        %v1006 = vadd.f32 %v994, %v1003
        %v1007 = vadd.f32 %v995, %v1003
        %v1008 = vadd.f32 %v996, %v1003
        %v1009 = vadd.f32 %v997, %v1003
        %v1010 = vtanh.pop %v1005
        %v1011 = vtanh.pop %v1006
        %v1012 = vtanh.pop %v1007
        %v1013 = vtanh.pop %v1008
        %v1014 = vtanh.pop %v1009
        %v1015 = vsel %vm227, 1, 0
        %v1016 = vsel %vm228, 1, 0
        %v1017 = vsel %vm229, 1, 0
        %v1018 = vsel %vm230, 1, 0
        %v1019 = vsel %vm231, 1, 0
        %vm1020 = vcmp.eq.s32.totalorder %v1015, 1
        %vm1021 = vcmp.eq.s32.totalorder %v1016, 1
        %vm1022 = vcmp.eq.s32.totalorder %v1017, 1
        %vm1023 = vcmp.eq.s32.totalorder %v1018, 1
        %vm1024 = vcmp.eq.s32.totalorder %v1019, 1
        %v1025 = vsel %vm1020, %v1010, 0.0
        %v1026 = vsel %vm1021, %v1011, 0.0
        %v1027 = vsel %vm1022, %v1012, 0.0
        %v1028 = vsel %vm1023, %v1013, 0.0
        %v1029 = vsel %vm1024, %v1014, 0.0
        %v1030 = vpack.c.bf16 %v1026, %v1025
        %v1031 = vpack.c.bf16 %v1028, %v1027
        %v1032 = vpack.c.bf16 %v1029, %v1029
        %v1036 = vunpack.c.l.b16 %v1030
        %v1037 = vunpack.c.h.b16 %v1030
        %v1038 = vunpack.c.l.b16 %v1031
        %v1039 = vunpack.c.h.b16 %v1031
        %v1040 = vunpack.c.l.b16 %v1032
        %v1041 = vpack.c.b16 %v1036, %v1036
        %v1042 = vpack.c.b16 %v1037, %v1037
        %v1043 = vpack.c.b16 %v1038, %v1038
        %v1044 = vpack.c.b16 %v1039, %v1039
        %v1045 = vpack.c.b16 %v1040, %v1040
        %1051 = vst [vmem:[#allocation3 + $0x4] sm:$0xf] %v1041
        %1052 = vst [vmem:[#allocation3 + $0x8] sm:$0xf] %v1042
        %1053 = vst [vmem:[#allocation3 + $0xc] sm:$0xf] %v1043
        %1054 = vst [vmem:[#allocation3 + $0x10] sm:$0xf] %v1044
        %1055 = vst [vmem:[#allocation3 + $0x14] sm:$0xf] %v1045
        %v1056 = vld [vmem:[#allocation3] sm:$0x8]
        %v1057 = vld [vmem:[#allocation3 + $0x4] sm:$0xf]
        %v1058 = vld [vmem:[#allocation3 + $0x8] sm:$0xf]
        %v1059 = vld [vmem:[#allocation3 + $0xc] sm:$0xf]
        %v1060 = vld [vmem:[#allocation3 + $0x10] sm:$0xf]
        %v1061 = vld [vmem:[#allocation3 + $0x14] sm:$0x7]
        %s1062 = scalar_lea.vmem [#allocation5], 320
        %v1063 = vld [vmem:[%s1062] sm:$0xf]
        %v1064 = vld [vmem:[%s1062 + $0x4] sm:$0xf]
        %v1065 = vld [vmem:[%s1062 + $0x8] sm:$0xf]
        %v1066 = vld [vmem:[%s1062 + $0xc] sm:$0xf]
        %v1067 = vld [vmem:[%s1062 + $0x10] sm:$0xf]
        %v1068 = vld [vmem:[%s1062 + $0x14] sm:$0xf]
        %v1069 = vld [vmem:[%s1062 + $0x18] sm:$0xf]
        %v1070 = vld [vmem:[%s1062 + $0x1c] sm:$0xf]
        %v1071 = vld [vmem:[%s1062 + $0x20] sm:$0xf]
        %v1072 = vld [vmem:[%s1062 + $0x24] sm:$0xf]
        %v1073 = vld [vmem:[%s1062 + $0x28] sm:$0xf]
        %v1074 = vld [vmem:[%s1062 + $0x2c] sm:$0xf]
        %v1075 = vld [vmem:[%s1062 + $0x30] sm:$0xf]
        %v1076 = vld [vmem:[%s1062 + $0x34] sm:$0xf]
        %v1077 = vld [vmem:[%s1062 + $0x38] sm:$0xf]
        %v1078 = vld [vmem:[%s1062 + $0x3c] sm:$0xf]
        %v1079 = vld [vmem:[#allocation3 + $0x14] sm:$0xf]
        %s1080 = scalar_lea.vmem [#allocation5], 384
        %v1081 = vld [vmem:[%s1080] sm:$0xf]
        %v1082 = vld [vmem:[%s1080 + $0x4] sm:$0xf]
        %v1083 = vld [vmem:[%s1080 + $0x8] sm:$0xf]
        %v1084 = vld [vmem:[%s1080 + $0xc] sm:$0xf]
        %v1085 = vld [vmem:[%s1080 + $0x10] sm:$0xf]
        %v1086 = vld [vmem:[%s1080 + $0x14] sm:$0xf]
        %v1087 = vld [vmem:[%s1080 + $0x18] sm:$0xf]
        %v1088 = vld [vmem:[%s1080 + $0x1c] sm:$0xf]
        %v1089 = vld [vmem:[%s1080 + $0x20] sm:$0xf]
        %v1090 = vld [vmem:[%s1080 + $0x24] sm:$0xf]
        %v1091 = vld [vmem:[%s1080 + $0x28] sm:$0xf]
        %v1092 = vld [vmem:[%s1080 + $0x2c] sm:$0xf]
        %v1093 = vld [vmem:[%s1080 + $0x30] sm:$0xf]
        %v1094 = vld [vmem:[%s1080 + $0x34] sm:$0xf]
        %v1095 = vld [vmem:[%s1080 + $0x38] sm:$0xf]
        %v1096 = vld [vmem:[%s1080 + $0x3c] sm:$0xf]
        %v1103 = vunpack.c.l.b16 %v1056
        %v1104 = vunpack.c.l.b16 %v1057
        %v1105 = vunpack.c.l.b16 %v1058
        %v1106 = vunpack.c.l.b16 %v1059
        %v1107 = vunpack.c.l.b16 %v1060
        %v1108 = vunpack.c.l.b16 %v1079
        %v1109 = vpack.c.b16 %v1104, %v1103
        %v1110 = vpack.c.b16 %v1106, %v1105
        %v1111 = vpack.c.b16 %v1108, %v1107
        %v1113 = vshrl.u32 %v1109, 16
        %v1115 = vrot.slane %v1113, 3
        %v1116 = vshll.u32 %v1109, 16
        %v1118 = vrot.slane %v1116, 4
        %v1119 = vor.u32 %v1115, %v1118
        %v1121 = vshrl.u32 %v1110, 16
        %v1123 = vrot.slane %v1121, 3
        %v1124 = vshll.u32 %v1110, 16
        %v1126 = vrot.slane %v1124, 4
        %v1127 = vor.u32 %v1123, %v1126
        %v1128 = vsel %vm291, %v1119, %v1127
        %v1130 = vshrl.u32 %v1111, 16
        %v1132 = vrot.slane %v1130, 3
        %v1133 = vshll.u32 %v1111, 16
        %v1135 = vrot.slane %v1133, 4
        %v1136 = vor.u32 %v1132, %v1135
        %v1137 = vsel %vm291, %v1127, %v1136
        %v1157 = vunpack.c.l.b16 %v1081
        %v1158 = vunpack.c.l.b16 %v1082
        %v1159 = vunpack.c.l.b16 %v1083
        %v1160 = vunpack.c.l.b16 %v1084
        %v1161 = vunpack.c.l.b16 %v1085
        %v1162 = vunpack.c.l.b16 %v1086
        %v1163 = vunpack.c.l.b16 %v1087
        %v1164 = vunpack.c.l.b16 %v1088
        %v1165 = vunpack.c.l.b16 %v1089
        %v1166 = vunpack.c.l.b16 %v1090
        %v1167 = vunpack.c.l.b16 %v1091
        %v1168 = vunpack.c.l.b16 %v1092
        %v1169 = vunpack.c.l.b16 %v1093
        %v1170 = vunpack.c.l.b16 %v1094
        %v1171 = vunpack.c.l.b16 %v1095
        %v1172 = vunpack.c.l.b16 %v1096
        %v1173 = vpack.c.b16 %v1158, %v1157
        %v1174 = vpack.c.b16 %v1160, %v1159
        %v1175 = vpack.c.b16 %v1162, %v1161
        %v1176 = vpack.c.b16 %v1164, %v1163
        %v1177 = vpack.c.b16 %v1166, %v1165
        %v1178 = vpack.c.b16 %v1168, %v1167
        %v1179 = vpack.c.b16 %v1170, %v1169
        %v1180 = vpack.c.b16 %v1172, %v1171
        %1189 = vmatprep.subr.bf16.mxu0 0
        %1190 = vmatpush1.bf16.msra.mxu0 %v1173
        %1191 = vmatprep.subr.bf16.mxu0 0
        %1192 = vmatpush1.bf16.msra.mxu0 %v1174
        %1193 = vmatprep.subr.bf16.mxu0 0
        %1194 = vmatpush1.bf16.msra.mxu0 %v1175
        %1195 = vmatprep.subr.bf16.mxu0 0
        %1196 = vmatpush1.bf16.msra.mxu0 %v1176
        %1197 = vmatprep.subr.bf16.mxu0 0
        %1198 = vmatpush1.bf16.msra.mxu0 %v1177
        %1199 = vmatprep.subr.bf16.mxu0 0
        %1200 = vmatpush1.bf16.msra.mxu0 %v1178
        %1201 = vmatprep.subr.bf16.mxu0 0
        %1202 = vmatpush1.bf16.msra.mxu0 %v1179
        %1203 = vmatprep.subr.bf16.mxu0 0
        %1204 = vmatpush1.bf16.msra.mxu0 %v1180
        %1205 = vmatprep.subr.bf16.mxu0 0
        %1206 = vmatpush1.bf16.msra.mxu0 0
        %1207 = vmatprep.subr.bf16.mxu0 0
        %1208 = vmatpush1.bf16.msra.mxu0 0
        %1209 = vmatprep.subr.bf16.mxu0 0
        %1210 = vmatpush1.bf16.msra.mxu0 0
        %1211 = vmatprep.subr.bf16.mxu0 0
        %1212 = vmatpush1.bf16.msra.mxu0 0
        %1213 = vmatprep.subr.bf16.mxu0 0
        %1214 = vmatpush1.bf16.msra.mxu0 0
        %1215 = vmatprep.subr.bf16.mxu0 0
        %1216 = vmatpush1.bf16.msra.mxu0 0
        %1217 = vmatprep.subr.bf16.mxu0 0
        %1218 = vmatpush1.bf16.msra.mxu0 0
        %1219 = vmatprep.subr.bf16.mxu0 0
        %1220 = vmatpush1.bf16.msra.mxu0 0
        %1221 = vmatprep.mubr.bf16.mxu0 0
        %1222 = vmatmul.mubr.bf16.gmra.mrb[0].mxu0 %v1128
        %v1223 = vpop.f32.mrb[0].mxu0
        %v1224 = vadd.f32 0.0, %v1223
        %v1225 = vpop.f32.mrb[0].mxu0
        %v1226 = vpop.f32.mrb[0].mxu0
        %v1227 = vadd.f32 0.0, %v1226
        %v1228 = vpop.f32.mrb[0].mxu0
        %1229 = vmatprep.mubr.bf16.mxu0 0
        %1230 = vmatmul.mubr.bf16.gmra.mrb[0].mxu0 %v1137
        %v1231 = vpop.f32.mrb[0].mxu0
        %v1232 = vadd.f32 0.0, %v1231
        %v1233 = vpop.f32.mrb[0].mxu0
        %v1234 = vpop.f32.mrb[0].mxu0
        %v1235 = vadd.f32 0.0, %v1234
        %v1236 = vpop.f32.mrb[0].mxu0
        %1237 = vmatprep.mubr.bf16.mxu0 0
        %1238 = vmatmul.mubr.bf16.gmra.mrb[0].mxu0 %v1136
        %v1239 = vpop.f32.mrb[0].mxu0
        %v1240 = vadd.f32 0.0, %v1239
        %v1241 = vpop.f32.mrb[0].mxu0
        %v1242 = vpop.f32.mrb[0].mxu0
        %v1243 = vpop.f32.mrb[0].mxu0
        %1244 = vdwg.mxu0
        %v1246 = vunpack.c.l.b16 %v1061
        %v1247 = vpack.c.b16 %v1246, %v1107
        %v1248 = vrot.slane %v1109, 3
        %v1249 = vrot.slane %v1110, 3
        %v1250 = vsel %vm428, %v1248, %v1249
        %v1251 = vrot.slane %v1247, 3
        %v1252 = vsel %vm428, %v1249, %v1251
        %v1272 = vunpack.c.l.b16 %v1063
        %v1273 = vunpack.c.l.b16 %v1064
        %v1274 = vunpack.c.l.b16 %v1065
        %v1275 = vunpack.c.l.b16 %v1066
        %v1276 = vunpack.c.l.b16 %v1067
        %v1277 = vunpack.c.l.b16 %v1068
        %v1278 = vunpack.c.l.b16 %v1069
        %v1279 = vunpack.c.l.b16 %v1070
        %v1280 = vunpack.c.l.b16 %v1071
        %v1281 = vunpack.c.l.b16 %v1072
        %v1282 = vunpack.c.l.b16 %v1073
        %v1283 = vunpack.c.l.b16 %v1074
        %v1284 = vunpack.c.l.b16 %v1075
        %v1285 = vunpack.c.l.b16 %v1076
        %v1286 = vunpack.c.l.b16 %v1077
        %v1287 = vunpack.c.l.b16 %v1078
        %v1288 = vpack.c.b16 %v1273, %v1272
        %v1289 = vpack.c.b16 %v1275, %v1274
        %v1290 = vpack.c.b16 %v1277, %v1276
        %v1291 = vpack.c.b16 %v1279, %v1278
        %v1292 = vpack.c.b16 %v1281, %v1280
        %v1293 = vpack.c.b16 %v1283, %v1282
        %v1294 = vpack.c.b16 %v1285, %v1284
        %v1295 = vpack.c.b16 %v1287, %v1286
        %1304 = vmatprep.subr.bf16.mxu0 0
        %1305 = vmatpush1.bf16.msra.mxu0 %v1288
        %1306 = vmatprep.subr.bf16.mxu0 0
        %1307 = vmatpush1.bf16.msra.mxu0 %v1289
        %1308 = vmatprep.subr.bf16.mxu0 0
        %1309 = vmatpush1.bf16.msra.mxu0 %v1290
        %1310 = vmatprep.subr.bf16.mxu0 0
        %1311 = vmatpush1.bf16.msra.mxu0 %v1291
        %1312 = vmatprep.subr.bf16.mxu0 0
        %1313 = vmatpush1.bf16.msra.mxu0 %v1292
        %1314 = vmatprep.subr.bf16.mxu0 0
        %1315 = vmatpush1.bf16.msra.mxu0 %v1293
        %1316 = vmatprep.subr.bf16.mxu0 0
        %1317 = vmatpush1.bf16.msra.mxu0 %v1294
        %1318 = vmatprep.subr.bf16.mxu0 0
        %1319 = vmatpush1.bf16.msra.mxu0 %v1295
        %1320 = vmatprep.subr.bf16.mxu0 0
        %1321 = vmatpush1.bf16.msra.mxu0 0
        %1322 = vmatprep.subr.bf16.mxu0 0
        %1323 = vmatpush1.bf16.msra.mxu0 0
        %1324 = vmatprep.subr.bf16.mxu0 0
        %1325 = vmatpush1.bf16.msra.mxu0 0
        %1326 = vmatprep.subr.bf16.mxu0 0
        %1327 = vmatpush1.bf16.msra.mxu0 0
        %1328 = vmatprep.subr.bf16.mxu0 0
        %1329 = vmatpush1.bf16.msra.mxu0 0
        %1330 = vmatprep.subr.bf16.mxu0 0
        %1331 = vmatpush1.bf16.msra.mxu0 0
        %1332 = vmatprep.subr.bf16.mxu0 0
        %1333 = vmatpush1.bf16.msra.mxu0 0
        %1334 = vmatprep.subr.bf16.mxu0 0
        %1335 = vmatpush1.bf16.msra.mxu0 0
        %1336 = vmatprep.mubr.bf16.mxu0 0
        %1337 = vmatmul.mubr.bf16.gmra.mrb[0].mxu0 %v1250
        %v1338 = vpop.f32.mrb[0].mxu0
        %v1339 = vadd.f32 %v1224, %v1338
        %v1340 = vpop.f32.mrb[0].mxu0
        %v1341 = vpop.f32.mrb[0].mxu0
        %v1342 = vadd.f32 %v1227, %v1341
        %v1343 = vpop.f32.mrb[0].mxu0
        %1344 = vmatprep.mubr.bf16.mxu0 0
        %1345 = vmatmul.mubr.bf16.gmra.mrb[0].mxu0 %v1252
        %v1346 = vpop.f32.mrb[0].mxu0
        %v1347 = vadd.f32 %v1232, %v1346
        %v1348 = vpop.f32.mrb[0].mxu0
        %v1349 = vpop.f32.mrb[0].mxu0
        %v1350 = vadd.f32 %v1235, %v1349
        %v1351 = vpop.f32.mrb[0].mxu0
        %1352 = vmatprep.mubr.bf16.mxu0 0
        %1353 = vmatmul.mubr.bf16.gmra.mrb[0].mxu0 %v1251
        %v1354 = vpop.f32.mrb[0].mxu0
        %v1355 = vadd.f32 %v1240, %v1354
        %v1356 = vpop.f32.mrb[0].mxu0
        %v1357 = vpop.f32.mrb[0].mxu0
        %v1358 = vpop.f32.mrb[0].mxu0
        %1359 = vdwg.mxu0
        %s1360 = scalar_lea.vmem [#allocation5], 448
        %v1361 = vld [vmem:[%s1360] sm:$0xf]
        %v1362 = vld [vmem:[%s1360 + $0x4] sm:$0xf]
        %v1363 = vld [vmem:[%s1360 + $0x8] sm:$0xf]
        %v1364 = vld [vmem:[%s1360 + $0xc] sm:$0xf]
        %v1365 = vld [vmem:[%s1360 + $0x10] sm:$0xf]
        %v1366 = vld [vmem:[%s1360 + $0x14] sm:$0xf]
        %v1367 = vld [vmem:[%s1360 + $0x18] sm:$0xf]
        %v1368 = vld [vmem:[%s1360 + $0x1c] sm:$0xf]
        %v1369 = vld [vmem:[%s1360 + $0x20] sm:$0xf]
        %v1370 = vld [vmem:[%s1360 + $0x24] sm:$0xf]
        %v1371 = vld [vmem:[%s1360 + $0x28] sm:$0xf]
        %v1372 = vld [vmem:[%s1360 + $0x2c] sm:$0xf]
        %v1373 = vld [vmem:[%s1360 + $0x30] sm:$0xf]
        %v1374 = vld [vmem:[%s1360 + $0x34] sm:$0xf]
        %v1375 = vld [vmem:[%s1360 + $0x38] sm:$0xf]
        %v1376 = vld [vmem:[%s1360 + $0x3c] sm:$0xf]
        %v1377 = vpack.c.b16 %v1105, %v1104
        %v1378 = vpack.c.b16 %v1107, %v1106
        %v1379 = vpack.c.b16 %v1108, %v1108
        %v1399 = vunpack.c.l.b16 %v1361
        %v1400 = vunpack.c.l.b16 %v1362
        %v1401 = vunpack.c.l.b16 %v1363
        %v1402 = vunpack.c.l.b16 %v1364
        %v1403 = vunpack.c.l.b16 %v1365
        %v1404 = vunpack.c.l.b16 %v1366
        %v1405 = vunpack.c.l.b16 %v1367
        %v1406 = vunpack.c.l.b16 %v1368
        %v1407 = vunpack.c.l.b16 %v1369
        %v1408 = vunpack.c.l.b16 %v1370
        %v1409 = vunpack.c.l.b16 %v1371
        %v1410 = vunpack.c.l.b16 %v1372
        %v1411 = vunpack.c.l.b16 %v1373
        %v1412 = vunpack.c.l.b16 %v1374
        %v1413 = vunpack.c.l.b16 %v1375
        %v1414 = vunpack.c.l.b16 %v1376
        %v1415 = vpack.c.b16 %v1400, %v1399
        %v1416 = vpack.c.b16 %v1402, %v1401
        %v1417 = vpack.c.b16 %v1404, %v1403
        %v1418 = vpack.c.b16 %v1406, %v1405
        %v1419 = vpack.c.b16 %v1408, %v1407
        %v1420 = vpack.c.b16 %v1410, %v1409
        %v1421 = vpack.c.b16 %v1412, %v1411
        %v1422 = vpack.c.b16 %v1414, %v1413
        %1431 = vmatprep.subr.bf16.mxu0 0
        %1432 = vmatpush1.bf16.msra.mxu0 %v1415
        %1433 = vmatprep.subr.bf16.mxu0 0
        %1434 = vmatpush1.bf16.msra.mxu0 %v1416
        %1435 = vmatprep.subr.bf16.mxu0 0
        %1436 = vmatpush1.bf16.msra.mxu0 %v1417
        %1437 = vmatprep.subr.bf16.mxu0 0
        %1438 = vmatpush1.bf16.msra.mxu0 %v1418
        %1439 = vmatprep.subr.bf16.mxu0 0
        %1440 = vmatpush1.bf16.msra.mxu0 %v1419
        %1441 = vmatprep.subr.bf16.mxu0 0
        %1442 = vmatpush1.bf16.msra.mxu0 %v1420
        %1443 = vmatprep.subr.bf16.mxu0 0
        %1444 = vmatpush1.bf16.msra.mxu0 %v1421
        %1445 = vmatprep.subr.bf16.mxu0 0
        %1446 = vmatpush1.bf16.msra.mxu0 %v1422
        %1447 = vmatprep.subr.bf16.mxu0 0
        %1448 = vmatpush1.bf16.msra.mxu0 0
        %1449 = vmatprep.subr.bf16.mxu0 0
        %1450 = vmatpush1.bf16.msra.mxu0 0
        %1451 = vmatprep.subr.bf16.mxu0 0
        %1452 = vmatpush1.bf16.msra.mxu0 0
        %1453 = vmatprep.subr.bf16.mxu0 0
        %1454 = vmatpush1.bf16.msra.mxu0 0
        %1455 = vmatprep.subr.bf16.mxu0 0
        %1456 = vmatpush1.bf16.msra.mxu0 0
        %1457 = vmatprep.subr.bf16.mxu0 0
        %1458 = vmatpush1.bf16.msra.mxu0 0
        %1459 = vmatprep.subr.bf16.mxu0 0
        %1460 = vmatpush1.bf16.msra.mxu0 0
        %1461 = vmatprep.subr.bf16.mxu0 0
        %1462 = vmatpush1.bf16.msra.mxu0 0
        %1463 = vmatprep.mubr.bf16.mxu0 0
        %1464 = vmatmul.mubr.bf16.gmra.mrb[0].mxu0 %v1377
        %v1465 = vpop.f32.mrb[0].mxu0
        %v1466 = vadd.f32 0.0, %v1465
        %v1467 = vpop.f32.mrb[0].mxu0
        %v1468 = vpop.f32.mrb[0].mxu0
        %v1469 = vadd.f32 0.0, %v1468
        %v1470 = vpop.f32.mrb[0].mxu0
        %1471 = vmatprep.mubr.bf16.mxu0 0
        %1472 = vmatmul.mubr.bf16.gmra.mrb[0].mxu0 %v1378
        %v1473 = vpop.f32.mrb[0].mxu0
        %v1474 = vadd.f32 0.0, %v1473
        %v1475 = vpop.f32.mrb[0].mxu0
        %v1476 = vpop.f32.mrb[0].mxu0
        %v1477 = vadd.f32 0.0, %v1476
        %v1478 = vpop.f32.mrb[0].mxu0
        %1479 = vmatprep.mubr.bf16.mxu0 0
        %1480 = vmatmul.mubr.bf16.gmra.mrb[0].mxu0 %v1379
        %v1481 = vpop.f32.mrb[0].mxu0
        %v1482 = vadd.f32 0.0, %v1481
        %v1483 = vpop.f32.mrb[0].mxu0
        %v1484 = vpop.f32.mrb[0].mxu0
        %v1485 = vpop.f32.mrb[0].mxu0
        %1486 = vdwg.mxu0
        %v1487 = vadd.f32 %v1339, %v1466
        %v1488 = vadd.f32 %v1342, %v1469
        %v1489 = vadd.f32 %v1347, %v1474
        %v1490 = vadd.f32 %v1350, %v1477
        %v1491 = vadd.f32 %v1355, %v1482
        %v1492 = vld [vmem:[#allocation3 + $0x4] sm:$0xf]
        %v1493 = vld [vmem:[#allocation3 + $0x8] sm:$0xf]
        %v1494 = vld [vmem:[#allocation3 + $0xc] sm:$0xf]
        %v1495 = vld [vmem:[#allocation3 + $0x10] sm:$0xf]
        %v1496 = vld [vmem:[#allocation3 + $0x14] sm:$0xf]
        %v1497 = vld [vmem:[#allocation3 + $0x18] sm:$0x1]
        %s1498 = scalar_lea.vmem [#allocation5], 512
        %v1499 = vld [vmem:[%s1498] sm:$0xf]
        %v1500 = vld [vmem:[%s1498 + $0x4] sm:$0xf]
        %v1501 = vld [vmem:[%s1498 + $0x8] sm:$0xf]
        %v1502 = vld [vmem:[%s1498 + $0xc] sm:$0xf]
        %v1503 = vld [vmem:[%s1498 + $0x10] sm:$0xf]
        %v1504 = vld [vmem:[%s1498 + $0x14] sm:$0xf]
        %v1505 = vld [vmem:[%s1498 + $0x18] sm:$0xf]
        %v1506 = vld [vmem:[%s1498 + $0x1c] sm:$0xf]
        %v1507 = vld [vmem:[%s1498 + $0x20] sm:$0xf]
        %v1508 = vld [vmem:[%s1498 + $0x24] sm:$0xf]
        %v1509 = vld [vmem:[%s1498 + $0x28] sm:$0xf]
        %v1510 = vld [vmem:[%s1498 + $0x2c] sm:$0xf]
        %v1511 = vld [vmem:[%s1498 + $0x30] sm:$0xf]
        %v1512 = vld [vmem:[%s1498 + $0x34] sm:$0xf]
        %v1513 = vld [vmem:[%s1498 + $0x38] sm:$0xf]
        %v1514 = vld [vmem:[%s1498 + $0x3c] sm:$0xf]
        %v1521 = vunpack.c.l.b16 %v1492
        %v1522 = vunpack.c.l.b16 %v1493
        %v1523 = vunpack.c.l.b16 %v1494
        %v1524 = vunpack.c.l.b16 %v1495
        %v1525 = vunpack.c.l.b16 %v1496
        %v1526 = vunpack.c.l.b16 %v1497
        %v1527 = vpack.c.b16 %v1522, %v1521
        %v1528 = vpack.c.b16 %v1524, %v1523
        %v1529 = vpack.c.b16 %v1526, %v1525
        %v1531 = vshrl.u32 %v1527, 16
        %v1533 = vshll.u32 %v1527, 16
        %v1535 = vrot.slane %v1533, 1
        %v1536 = vor.u32 %v1531, %v1535
        %v1538 = vshll.u32 %v1528, 16
        %v1540 = vrot.slane %v1538, 1
        %v1541 = vsel %vm711, %v1536, %v1540
        %v1542 = vshrl.u32 %v1528, 16
        %v1544 = vor.u32 %v1542, %v1540
        %v1546 = vshll.u32 %v1529, 16
        %v1548 = vrot.slane %v1546, 1
        %v1549 = vsel %vm711, %v1544, %v1548
        %v1550 = vshrl.u32 %v1529, 16
        %v1552 = vor.u32 %v1550, %v1548
        %v1572 = vunpack.c.l.b16 %v1499
        %v1573 = vunpack.c.l.b16 %v1500
        %v1574 = vunpack.c.l.b16 %v1501
        %v1575 = vunpack.c.l.b16 %v1502
        %v1576 = vunpack.c.l.b16 %v1503
        %v1577 = vunpack.c.l.b16 %v1504
        %v1578 = vunpack.c.l.b16 %v1505
        %v1579 = vunpack.c.l.b16 %v1506
        %v1580 = vunpack.c.l.b16 %v1507
        %v1581 = vunpack.c.l.b16 %v1508
        %v1582 = vunpack.c.l.b16 %v1509
        %v1583 = vunpack.c.l.b16 %v1510
        %v1584 = vunpack.c.l.b16 %v1511
        %v1585 = vunpack.c.l.b16 %v1512
        %v1586 = vunpack.c.l.b16 %v1513
        %v1587 = vunpack.c.l.b16 %v1514
        %v1588 = vpack.c.b16 %v1573, %v1572
        %v1589 = vpack.c.b16 %v1575, %v1574
        %v1590 = vpack.c.b16 %v1577, %v1576
        %v1591 = vpack.c.b16 %v1579, %v1578
        %v1592 = vpack.c.b16 %v1581, %v1580
        %v1593 = vpack.c.b16 %v1583, %v1582
        %v1594 = vpack.c.b16 %v1585, %v1584
        %v1595 = vpack.c.b16 %v1587, %v1586
        %1604 = vmatprep.subr.bf16.mxu0 0
        %1605 = vmatpush1.bf16.msra.mxu0 %v1588
        %1606 = vmatprep.subr.bf16.mxu0 0
        %1607 = vmatpush1.bf16.msra.mxu0 %v1589
        %1608 = vmatprep.subr.bf16.mxu0 0
        %1609 = vmatpush1.bf16.msra.mxu0 %v1590
        %1610 = vmatprep.subr.bf16.mxu0 0
        %1611 = vmatpush1.bf16.msra.mxu0 %v1591
        %1612 = vmatprep.subr.bf16.mxu0 0
        %1613 = vmatpush1.bf16.msra.mxu0 %v1592
        %1614 = vmatprep.subr.bf16.mxu0 0
        %1615 = vmatpush1.bf16.msra.mxu0 %v1593
        %1616 = vmatprep.subr.bf16.mxu0 0
        %1617 = vmatpush1.bf16.msra.mxu0 %v1594
        %1618 = vmatprep.subr.bf16.mxu0 0
        %1619 = vmatpush1.bf16.msra.mxu0 %v1595
        %1620 = vmatprep.subr.bf16.mxu0 0
        %1621 = vmatpush1.bf16.msra.mxu0 0
        %1622 = vmatprep.subr.bf16.mxu0 0
        %1623 = vmatpush1.bf16.msra.mxu0 0
        %1624 = vmatprep.subr.bf16.mxu0 0
        %1625 = vmatpush1.bf16.msra.mxu0 0
        %1626 = vmatprep.subr.bf16.mxu0 0
        %1627 = vmatpush1.bf16.msra.mxu0 0
        %1628 = vmatprep.subr.bf16.mxu0 0
        %1629 = vmatpush1.bf16.msra.mxu0 0
        %1630 = vmatprep.subr.bf16.mxu0 0
        %1631 = vmatpush1.bf16.msra.mxu0 0
        %1632 = vmatprep.subr.bf16.mxu0 0
        %1633 = vmatpush1.bf16.msra.mxu0 0
        %1634 = vmatprep.subr.bf16.mxu0 0
        %1635 = vmatpush1.bf16.msra.mxu0 0
        %1636 = vmatprep.mubr.bf16.mxu0 0
        %1637 = vmatmul.mubr.bf16.gmra.mrb[0].mxu0 %v1541
        %v1638 = vpop.f32.mrb[0].mxu0
        %v1639 = vadd.f32 0.0, %v1638
        %v1640 = vpop.f32.mrb[0].mxu0
        %v1641 = vpop.f32.mrb[0].mxu0
        %v1642 = vadd.f32 0.0, %v1641
        %v1643 = vpop.f32.mrb[0].mxu0
        %1644 = vmatprep.mubr.bf16.mxu0 0
        %1645 = vmatmul.mubr.bf16.gmra.mrb[0].mxu0 %v1549
        %v1646 = vpop.f32.mrb[0].mxu0
        %v1647 = vadd.f32 0.0, %v1646
        %v1648 = vpop.f32.mrb[0].mxu0
        %v1649 = vpop.f32.mrb[0].mxu0
        %v1650 = vadd.f32 0.0, %v1649
        %v1651 = vpop.f32.mrb[0].mxu0
        %1652 = vmatprep.mubr.bf16.mxu0 0
        %1653 = vmatmul.mubr.bf16.gmra.mrb[0].mxu0 %v1552
        %v1654 = vpop.f32.mrb[0].mxu0
        %v1655 = vadd.f32 0.0, %v1654
        %v1656 = vpop.f32.mrb[0].mxu0
        %v1657 = vpop.f32.mrb[0].mxu0
        %v1658 = vpop.f32.mrb[0].mxu0
        %1659 = vdwg.mxu0
        %v1660 = vadd.f32 %v1487, %v1639
        %v1661 = vadd.f32 %v1488, %v1642
        %v1662 = vadd.f32 %v1489, %v1647
        %v1663 = vadd.f32 %v1490, %v1650
        %v1664 = vadd.f32 %v1491, %v1655
        %v1665 = vld [vmem:[#allocation3 + $0x4] sm:$0xe]
        %s1666 = scalar_lea.vmem [#allocation5], 576
        %v1667 = vld [vmem:[%s1666] sm:$0xf]
        %v1668 = vld [vmem:[%s1666 + $0x4] sm:$0xf]
        %v1669 = vld [vmem:[%s1666 + $0x8] sm:$0xf]
        %v1670 = vld [vmem:[%s1666 + $0xc] sm:$0xf]
        %v1671 = vld [vmem:[%s1666 + $0x10] sm:$0xf]
        %v1672 = vld [vmem:[%s1666 + $0x14] sm:$0xf]
        %v1673 = vld [vmem:[%s1666 + $0x18] sm:$0xf]
        %v1674 = vld [vmem:[%s1666 + $0x1c] sm:$0xf]
        %v1675 = vld [vmem:[%s1666 + $0x20] sm:$0xf]
        %v1676 = vld [vmem:[%s1666 + $0x24] sm:$0xf]
        %v1677 = vld [vmem:[%s1666 + $0x28] sm:$0xf]
        %v1678 = vld [vmem:[%s1666 + $0x2c] sm:$0xf]
        %v1679 = vld [vmem:[%s1666 + $0x30] sm:$0xf]
        %v1680 = vld [vmem:[%s1666 + $0x34] sm:$0xf]
        %v1681 = vld [vmem:[%s1666 + $0x38] sm:$0xf]
        %v1682 = vld [vmem:[%s1666 + $0x3c] sm:$0xf]
        %v1684 = vunpack.c.l.b16 %v1665
        %v1685 = vpack.c.b16 %v1522, %v1684
        %v1686 = vrot.slane %v1685, 1
        %v1687 = vrot.slane %v1528, 1
        %v1688 = vsel %vm868, %v1686, %v1687
        %v1689 = vrot.slane %v1529, 1
        %v1690 = vsel %vm868, %v1687, %v1689
        %v1710 = vunpack.c.l.b16 %v1667
        %v1711 = vunpack.c.l.b16 %v1668
        %v1712 = vunpack.c.l.b16 %v1669
        %v1713 = vunpack.c.l.b16 %v1670
        %v1714 = vunpack.c.l.b16 %v1671
        %v1715 = vunpack.c.l.b16 %v1672
        %v1716 = vunpack.c.l.b16 %v1673
        %v1717 = vunpack.c.l.b16 %v1674
        %v1718 = vunpack.c.l.b16 %v1675
        %v1719 = vunpack.c.l.b16 %v1676
        %v1720 = vunpack.c.l.b16 %v1677
        %v1721 = vunpack.c.l.b16 %v1678
        %v1722 = vunpack.c.l.b16 %v1679
        %v1723 = vunpack.c.l.b16 %v1680
        %v1724 = vunpack.c.l.b16 %v1681
        %v1725 = vunpack.c.l.b16 %v1682
        %v1726 = vpack.c.b16 %v1711, %v1710
        %v1727 = vpack.c.b16 %v1713, %v1712
        %v1728 = vpack.c.b16 %v1715, %v1714
        %v1729 = vpack.c.b16 %v1717, %v1716
        %v1730 = vpack.c.b16 %v1719, %v1718
        %v1731 = vpack.c.b16 %v1721, %v1720
        %v1732 = vpack.c.b16 %v1723, %v1722
        %v1733 = vpack.c.b16 %v1725, %v1724
        %1742 = vmatprep.subr.bf16.mxu0 0
        %1743 = vmatpush1.bf16.msra.mxu0 %v1726
        %1744 = vmatprep.subr.bf16.mxu0 0
        %1745 = vmatpush1.bf16.msra.mxu0 %v1727
        %1746 = vmatprep.subr.bf16.mxu0 0
        %1747 = vmatpush1.bf16.msra.mxu0 %v1728
        %1748 = vmatprep.subr.bf16.mxu0 0
        %1749 = vmatpush1.bf16.msra.mxu0 %v1729
        %1750 = vmatprep.subr.bf16.mxu0 0
        %1751 = vmatpush1.bf16.msra.mxu0 %v1730
        %1752 = vmatprep.subr.bf16.mxu0 0
        %1753 = vmatpush1.bf16.msra.mxu0 %v1731
        %1754 = vmatprep.subr.bf16.mxu0 0
        %1755 = vmatpush1.bf16.msra.mxu0 %v1732
        %1756 = vmatprep.subr.bf16.mxu0 0
        %1757 = vmatpush1.bf16.msra.mxu0 %v1733
        %1758 = vmatprep.subr.bf16.mxu0 0
        %1759 = vmatpush1.bf16.msra.mxu0 0
        %1760 = vmatprep.subr.bf16.mxu0 0
        %1761 = vmatpush1.bf16.msra.mxu0 0
        %1762 = vmatprep.subr.bf16.mxu0 0
        %1763 = vmatpush1.bf16.msra.mxu0 0
        %1764 = vmatprep.subr.bf16.mxu0 0
        %1765 = vmatpush1.bf16.msra.mxu0 0
        %1766 = vmatprep.subr.bf16.mxu0 0
        %1767 = vmatpush1.bf16.msra.mxu0 0
        %1768 = vmatprep.subr.bf16.mxu0 0
        %1769 = vmatpush1.bf16.msra.mxu0 0
        %1770 = vmatprep.subr.bf16.mxu0 0
        %1771 = vmatpush1.bf16.msra.mxu0 0
        %1772 = vmatprep.subr.bf16.mxu0 0
        %1773 = vmatpush1.bf16.msra.mxu0 0
        %1774 = vmatprep.mubr.bf16.mxu0 0
        %1775 = vmatmul.mubr.bf16.gmra.mrb[0].mxu0 %v1688
        %v1776 = vpop.f32.mrb[0].mxu0
        %v1777 = vadd.f32 0.0, %v1776
        %v1778 = vpop.f32.mrb[0].mxu0
        %v1779 = vpop.f32.mrb[0].mxu0
        %v1780 = vadd.f32 0.0, %v1779
        %v1781 = vpop.f32.mrb[0].mxu0
        %1782 = vmatprep.mubr.bf16.mxu0 0
        %1783 = vmatmul.mubr.bf16.gmra.mrb[0].mxu0 %v1690
        %v1784 = vpop.f32.mrb[0].mxu0
        %v1785 = vadd.f32 0.0, %v1784
        %v1786 = vpop.f32.mrb[0].mxu0
        %v1787 = vpop.f32.mrb[0].mxu0
        %v1788 = vadd.f32 0.0, %v1787
        %v1789 = vpop.f32.mrb[0].mxu0
        %1790 = vmatprep.mubr.bf16.mxu0 0
        %1791 = vmatmul.mubr.bf16.gmra.mrb[0].mxu0 %v1689
        %v1792 = vpop.f32.mrb[0].mxu0
        %v1793 = vadd.f32 0.0, %v1792
        %v1794 = vpop.f32.mrb[0].mxu0
        %v1795 = vpop.f32.mrb[0].mxu0
        %v1796 = vpop.f32.mrb[0].mxu0
        %1797 = vdwg.mxu0
        %v1798 = vadd.f32 %v1660, %v1777
        %v1799 = vadd.f32 %v1661, %v1780
        %v1800 = vadd.f32 %v1662, %v1785
        %v1801 = vadd.f32 %v1663, %v1788
        %v1802 = vadd.f32 %v1664, %v1793
        %s1803 = scalar_lea.vmem %s2, 1
        %v1804 = vld [vmem:[%s1803] sm:$0x1]
        %v1806 = vlaneseq
        %v1807 = vshrl.u32 %v1806, 7
        %v1808 = vsub.s32 0, %v1807
        %v1809 = vrot.slane %v1804, %v1808
        %v1811 = vmul.f32 %v1798, %v1809
        %v1812 = vmul.f32 %v1799, %v1809
        %v1813 = vmul.f32 %v1800, %v1809
        %v1814 = vmul.f32 %v1801, %v1809
        %v1815 = vmul.f32 %v1802, %v1809
        %s1816 = scalar_lea.vmem %s3, 1
        %v1817 = vld [vmem:[%s1816] sm:$0x1]
        %v1819 = vlaneseq
        %v1820 = vshrl.u32 %v1819, 7
        %v1821 = vsub.s32 0, %v1820
        %v1822 = vrot.slane %v1817, %v1821
        %v1824 = vadd.f32 %v1811, %v1822
        %v1825 = vadd.f32 %v1812, %v1822
        %v1826 = vadd.f32 %v1813, %v1822
        %v1827 = vadd.f32 %v1814, %v1822
        %v1828 = vadd.f32 %v1815, %v1822
        %v1829 = vtanh.pop %v1824
        %v1830 = vtanh.pop %v1825
        %v1831 = vtanh.pop %v1826
        %v1832 = vtanh.pop %v1827
        %v1833 = vtanh.pop %v1828
        %v1834 = vsel %vm1020, %v1829, 0.0
        %v1835 = vsel %vm1021, %v1830, 0.0
        %v1836 = vsel %vm1022, %v1831, 0.0
        %v1837 = vsel %vm1023, %v1832, 0.0
        %v1838 = vsel %vm1024, %v1833, 0.0
        %v1839 = vpack.c.bf16 %v1835, %v1834
        %v1840 = vpack.c.bf16 %v1837, %v1836
        %v1841 = vpack.c.bf16 %v1838, %v1838
        %v1845 = vunpack.c.l.b16 %v1839
        %v1846 = vunpack.c.h.b16 %v1839
        %v1847 = vunpack.c.l.b16 %v1840
        %v1848 = vunpack.c.h.b16 %v1840
        %v1849 = vunpack.c.l.b16 %v1841
        %v1850 = vpack.c.b16 %v1845, %v1845
        %v1851 = vpack.c.b16 %v1846, %v1846
        %v1852 = vpack.c.b16 %v1847, %v1847
        %v1853 = vpack.c.b16 %v1848, %v1848
        %v1854 = vpack.c.b16 %v1849, %v1849
        %1860 = vst [vmem:[#allocation2 + $0x4] sm:$0xf] %v1850
        %1861 = vst [vmem:[#allocation2 + $0x8] sm:$0xf] %v1851
        %1862 = vst [vmem:[#allocation2 + $0xc] sm:$0xf] %v1852
        %1863 = vst [vmem:[#allocation2 + $0x10] sm:$0xf] %v1853
        %1864 = vst [vmem:[#allocation2 + $0x14] sm:$0xf] %v1854
        %v1865 = vld [vmem:[#allocation2] sm:$0x8]
        %v1866 = vld [vmem:[#allocation2 + $0x4] sm:$0xf]
        %v1867 = vld [vmem:[#allocation2 + $0x8] sm:$0xf]
        %v1868 = vld [vmem:[#allocation2 + $0xc] sm:$0xf]
        %v1869 = vld [vmem:[#allocation2 + $0x10] sm:$0xf]
        %v1870 = vld [vmem:[#allocation2 + $0x14] sm:$0x7]
        %s1871 = scalar_lea.vmem [#allocation5], 640
        %v1872 = vld [vmem:[%s1871] sm:$0xf]
        %v1873 = vld [vmem:[%s1871 + $0x4] sm:$0xf]
        %v1874 = vld [vmem:[%s1871 + $0x8] sm:$0xf]
        %v1875 = vld [vmem:[%s1871 + $0xc] sm:$0xf]
        %v1876 = vld [vmem:[%s1871 + $0x10] sm:$0xf]
        %v1877 = vld [vmem:[%s1871 + $0x14] sm:$0xf]
        %v1878 = vld [vmem:[%s1871 + $0x18] sm:$0xf]
        %v1879 = vld [vmem:[%s1871 + $0x1c] sm:$0xf]
        %v1880 = vld [vmem:[%s1871 + $0x20] sm:$0xf]
        %v1881 = vld [vmem:[%s1871 + $0x24] sm:$0xf]
        %v1882 = vld [vmem:[%s1871 + $0x28] sm:$0xf]
        %v1883 = vld [vmem:[%s1871 + $0x2c] sm:$0xf]
        %v1884 = vld [vmem:[%s1871 + $0x30] sm:$0xf]
        %v1885 = vld [vmem:[%s1871 + $0x34] sm:$0xf]
        %v1886 = vld [vmem:[%s1871 + $0x38] sm:$0xf]
        %v1887 = vld [vmem:[%s1871 + $0x3c] sm:$0xf]
        %v1888 = vld [vmem:[#allocation2 + $0x14] sm:$0xf]
        %s1889 = scalar_lea.vmem [#allocation5], 704
        %v1890 = vld [vmem:[%s1889] sm:$0xf]
        %v1891 = vld [vmem:[%s1889 + $0x4] sm:$0xf]
        %v1892 = vld [vmem:[%s1889 + $0x8] sm:$0xf]
        %v1893 = vld [vmem:[%s1889 + $0xc] sm:$0xf]
        %v1894 = vld [vmem:[%s1889 + $0x10] sm:$0xf]
        %v1895 = vld [vmem:[%s1889 + $0x14] sm:$0xf]
        %v1896 = vld [vmem:[%s1889 + $0x18] sm:$0xf]
        %v1897 = vld [vmem:[%s1889 + $0x1c] sm:$0xf]
        %v1898 = vld [vmem:[%s1889 + $0x20] sm:$0xf]
        %v1899 = vld [vmem:[%s1889 + $0x24] sm:$0xf]
        %v1900 = vld [vmem:[%s1889 + $0x28] sm:$0xf]
        %v1901 = vld [vmem:[%s1889 + $0x2c] sm:$0xf]
        %v1902 = vld [vmem:[%s1889 + $0x30] sm:$0xf]
        %v1903 = vld [vmem:[%s1889 + $0x34] sm:$0xf]
        %v1904 = vld [vmem:[%s1889 + $0x38] sm:$0xf]
        %v1905 = vld [vmem:[%s1889 + $0x3c] sm:$0xf]
        %v1912 = vunpack.c.l.b16 %v1865
        %v1913 = vunpack.c.l.b16 %v1866
        %v1914 = vunpack.c.l.b16 %v1867
        %v1915 = vunpack.c.l.b16 %v1868
        %v1916 = vunpack.c.l.b16 %v1869
        %v1917 = vunpack.c.l.b16 %v1888
        %v1918 = vpack.c.b16 %v1913, %v1912
        %v1919 = vpack.c.b16 %v1915, %v1914
        %v1920 = vpack.c.b16 %v1917, %v1916
        %v1922 = vshrl.u32 %v1918, 16
        %v1924 = vrot.slane %v1922, 3
        %v1925 = vshll.u32 %v1918, 16
        %v1927 = vrot.slane %v1925, 4
        %v1928 = vor.u32 %v1924, %v1927
        %v1930 = vshrl.u32 %v1919, 16
        %v1932 = vrot.slane %v1930, 3
        %v1933 = vshll.u32 %v1919, 16
        %v1935 = vrot.slane %v1933, 4
        %v1936 = vor.u32 %v1932, %v1935
        %v1937 = vsel %vm291, %v1928, %v1936
        %v1939 = vshrl.u32 %v1920, 16
        %v1941 = vrot.slane %v1939, 3
        %v1942 = vshll.u32 %v1920, 16
        %v1944 = vrot.slane %v1942, 4
        %v1945 = vor.u32 %v1941, %v1944
        %v1946 = vsel %vm291, %v1936, %v1945
        %v1966 = vunpack.c.l.b16 %v1890
        %v1967 = vunpack.c.l.b16 %v1891
        %v1968 = vunpack.c.l.b16 %v1892
        %v1969 = vunpack.c.l.b16 %v1893
        %v1970 = vunpack.c.l.b16 %v1894
        %v1971 = vunpack.c.l.b16 %v1895
        %v1972 = vunpack.c.l.b16 %v1896
        %v1973 = vunpack.c.l.b16 %v1897
        %v1974 = vunpack.c.l.b16 %v1898
        %v1975 = vunpack.c.l.b16 %v1899
        %v1976 = vunpack.c.l.b16 %v1900
        %v1977 = vunpack.c.l.b16 %v1901
        %v1978 = vunpack.c.l.b16 %v1902
        %v1979 = vunpack.c.l.b16 %v1903
        %v1980 = vunpack.c.l.b16 %v1904
        %v1981 = vunpack.c.l.b16 %v1905
        %v1982 = vpack.c.b16 %v1967, %v1966
        %v1983 = vpack.c.b16 %v1969, %v1968
        %v1984 = vpack.c.b16 %v1971, %v1970
        %v1985 = vpack.c.b16 %v1973, %v1972
        %v1986 = vpack.c.b16 %v1975, %v1974
        %v1987 = vpack.c.b16 %v1977, %v1976
        %v1988 = vpack.c.b16 %v1979, %v1978
        %v1989 = vpack.c.b16 %v1981, %v1980
        %1998 = vmatprep.subr.bf16.mxu0 0
        %1999 = vmatpush1.bf16.msra.mxu0 %v1982
        %2000 = vmatprep.subr.bf16.mxu0 0
        %2001 = vmatpush1.bf16.msra.mxu0 %v1983
        %2002 = vmatprep.subr.bf16.mxu0 0
        %2003 = vmatpush1.bf16.msra.mxu0 %v1984
        %2004 = vmatprep.subr.bf16.mxu0 0
        %2005 = vmatpush1.bf16.msra.mxu0 %v1985
        %2006 = vmatprep.subr.bf16.mxu0 0
        %2007 = vmatpush1.bf16.msra.mxu0 %v1986
        %2008 = vmatprep.subr.bf16.mxu0 0
        %2009 = vmatpush1.bf16.msra.mxu0 %v1987
        %2010 = vmatprep.subr.bf16.mxu0 0
        %2011 = vmatpush1.bf16.msra.mxu0 %v1988
        %2012 = vmatprep.subr.bf16.mxu0 0
        %2013 = vmatpush1.bf16.msra.mxu0 %v1989
        %2014 = vmatprep.subr.bf16.mxu0 0
        %2015 = vmatpush1.bf16.msra.mxu0 0
        %2016 = vmatprep.subr.bf16.mxu0 0
        %2017 = vmatpush1.bf16.msra.mxu0 0
        %2018 = vmatprep.subr.bf16.mxu0 0
        %2019 = vmatpush1.bf16.msra.mxu0 0
        %2020 = vmatprep.subr.bf16.mxu0 0
        %2021 = vmatpush1.bf16.msra.mxu0 0
        %2022 = vmatprep.subr.bf16.mxu0 0
        %2023 = vmatpush1.bf16.msra.mxu0 0
        %2024 = vmatprep.subr.bf16.mxu0 0
        %2025 = vmatpush1.bf16.msra.mxu0 0
        %2026 = vmatprep.subr.bf16.mxu0 0
        %2027 = vmatpush1.bf16.msra.mxu0 0
        %2028 = vmatprep.subr.bf16.mxu0 0
        %2029 = vmatpush1.bf16.msra.mxu0 0
        %2030 = vmatprep.mubr.bf16.mxu0 0
        %2031 = vmatmul.mubr.bf16.gmra.mrb[0].mxu0 %v1937
        %v2032 = vpop.f32.mrb[0].mxu0
        %v2033 = vadd.f32 0.0, %v2032
        %v2034 = vpop.f32.mrb[0].mxu0
        %v2035 = vpop.f32.mrb[0].mxu0
        %v2036 = vadd.f32 0.0, %v2035
        %v2037 = vpop.f32.mrb[0].mxu0
        %2038 = vmatprep.mubr.bf16.mxu0 0
        %2039 = vmatmul.mubr.bf16.gmra.mrb[0].mxu0 %v1946
        %v2040 = vpop.f32.mrb[0].mxu0
        %v2041 = vadd.f32 0.0, %v2040
        %v2042 = vpop.f32.mrb[0].mxu0
        %v2043 = vpop.f32.mrb[0].mxu0
        %v2044 = vadd.f32 0.0, %v2043
        %v2045 = vpop.f32.mrb[0].mxu0
        %2046 = vmatprep.mubr.bf16.mxu0 0
        %2047 = vmatmul.mubr.bf16.gmra.mrb[0].mxu0 %v1945
        %v2048 = vpop.f32.mrb[0].mxu0
        %v2049 = vadd.f32 0.0, %v2048
        %v2050 = vpop.f32.mrb[0].mxu0
        %v2051 = vpop.f32.mrb[0].mxu0
        %v2052 = vpop.f32.mrb[0].mxu0
        %2053 = vdwg.mxu0
        %v2055 = vunpack.c.l.b16 %v1870
        %v2056 = vpack.c.b16 %v2055, %v1916
        %v2057 = vrot.slane %v1918, 3
        %v2058 = vrot.slane %v1919, 3
        %v2059 = vsel %vm428, %v2057, %v2058
        %v2060 = vrot.slane %v2056, 3
        %v2061 = vsel %vm428, %v2058, %v2060
        %v2081 = vunpack.c.l.b16 %v1872
        %v2082 = vunpack.c.l.b16 %v1873
        %v2083 = vunpack.c.l.b16 %v1874
        %v2084 = vunpack.c.l.b16 %v1875
        %v2085 = vunpack.c.l.b16 %v1876
        %v2086 = vunpack.c.l.b16 %v1877
        %v2087 = vunpack.c.l.b16 %v1878
        %v2088 = vunpack.c.l.b16 %v1879
        %v2089 = vunpack.c.l.b16 %v1880
        %v2090 = vunpack.c.l.b16 %v1881
        %v2091 = vunpack.c.l.b16 %v1882
        %v2092 = vunpack.c.l.b16 %v1883
        %v2093 = vunpack.c.l.b16 %v1884
        %v2094 = vunpack.c.l.b16 %v1885
        %v2095 = vunpack.c.l.b16 %v1886
        %v2096 = vunpack.c.l.b16 %v1887
        %v2097 = vpack.c.b16 %v2082, %v2081
        %v2098 = vpack.c.b16 %v2084, %v2083
        %v2099 = vpack.c.b16 %v2086, %v2085
        %v2100 = vpack.c.b16 %v2088, %v2087
        %v2101 = vpack.c.b16 %v2090, %v2089
        %v2102 = vpack.c.b16 %v2092, %v2091
        %v2103 = vpack.c.b16 %v2094, %v2093
        %v2104 = vpack.c.b16 %v2096, %v2095
        %2113 = vmatprep.subr.bf16.mxu0 0
        %2114 = vmatpush1.bf16.msra.mxu0 %v2097
        %2115 = vmatprep.subr.bf16.mxu0 0
        %2116 = vmatpush1.bf16.msra.mxu0 %v2098
        %2117 = vmatprep.subr.bf16.mxu0 0
        %2118 = vmatpush1.bf16.msra.mxu0 %v2099
        %2119 = vmatprep.subr.bf16.mxu0 0
        %2120 = vmatpush1.bf16.msra.mxu0 %v2100
        %2121 = vmatprep.subr.bf16.mxu0 0
        %2122 = vmatpush1.bf16.msra.mxu0 %v2101
        %2123 = vmatprep.subr.bf16.mxu0 0
        %2124 = vmatpush1.bf16.msra.mxu0 %v2102
        %2125 = vmatprep.subr.bf16.mxu0 0
        %2126 = vmatpush1.bf16.msra.mxu0 %v2103
        %2127 = vmatprep.subr.bf16.mxu0 0
        %2128 = vmatpush1.bf16.msra.mxu0 %v2104
        %2129 = vmatprep.subr.bf16.mxu0 0
        %2130 = vmatpush1.bf16.msra.mxu0 0
        %2131 = vmatprep.subr.bf16.mxu0 0
        %2132 = vmatpush1.bf16.msra.mxu0 0
        %2133 = vmatprep.subr.bf16.mxu0 0
        %2134 = vmatpush1.bf16.msra.mxu0 0
        %2135 = vmatprep.subr.bf16.mxu0 0
        %2136 = vmatpush1.bf16.msra.mxu0 0
        %2137 = vmatprep.subr.bf16.mxu0 0
        %2138 = vmatpush1.bf16.msra.mxu0 0
        %2139 = vmatprep.subr.bf16.mxu0 0
        %2140 = vmatpush1.bf16.msra.mxu0 0
        %2141 = vmatprep.subr.bf16.mxu0 0
        %2142 = vmatpush1.bf16.msra.mxu0 0
        %2143 = vmatprep.subr.bf16.mxu0 0
        %2144 = vmatpush1.bf16.msra.mxu0 0
        %2145 = vmatprep.mubr.bf16.mxu0 0
        %2146 = vmatmul.mubr.bf16.gmra.mrb[0].mxu0 %v2059
        %v2147 = vpop.f32.mrb[0].mxu0
        %v2148 = vadd.f32 %v2033, %v2147
        %v2149 = vpop.f32.mrb[0].mxu0
        %v2150 = vpop.f32.mrb[0].mxu0
        %v2151 = vadd.f32 %v2036, %v2150
        %v2152 = vpop.f32.mrb[0].mxu0
        %2153 = vmatprep.mubr.bf16.mxu0 0
        %2154 = vmatmul.mubr.bf16.gmra.mrb[0].mxu0 %v2061
        %v2155 = vpop.f32.mrb[0].mxu0
        %v2156 = vadd.f32 %v2041, %v2155
        %v2157 = vpop.f32.mrb[0].mxu0
        %v2158 = vpop.f32.mrb[0].mxu0
        %v2159 = vadd.f32 %v2044, %v2158
        %v2160 = vpop.f32.mrb[0].mxu0
        %2161 = vmatprep.mubr.bf16.mxu0 0
        %2162 = vmatmul.mubr.bf16.gmra.mrb[0].mxu0 %v2060
        %v2163 = vpop.f32.mrb[0].mxu0
        %v2164 = vadd.f32 %v2049, %v2163
        %v2165 = vpop.f32.mrb[0].mxu0
        %v2166 = vpop.f32.mrb[0].mxu0
        %v2167 = vpop.f32.mrb[0].mxu0
        %2168 = vdwg.mxu0
        %s2169 = scalar_lea.vmem [#allocation5], 768
        %v2170 = vld [vmem:[%s2169] sm:$0xf]
        %v2171 = vld [vmem:[%s2169 + $0x4] sm:$0xf]
        %v2172 = vld [vmem:[%s2169 + $0x8] sm:$0xf]
        %v2173 = vld [vmem:[%s2169 + $0xc] sm:$0xf]
        %v2174 = vld [vmem:[%s2169 + $0x10] sm:$0xf]
        %v2175 = vld [vmem:[%s2169 + $0x14] sm:$0xf]
        %v2176 = vld [vmem:[%s2169 + $0x18] sm:$0xf]
        %v2177 = vld [vmem:[%s2169 + $0x1c] sm:$0xf]
        %v2178 = vld [vmem:[%s2169 + $0x20] sm:$0xf]
        %v2179 = vld [vmem:[%s2169 + $0x24] sm:$0xf]
        %v2180 = vld [vmem:[%s2169 + $0x28] sm:$0xf]
        %v2181 = vld [vmem:[%s2169 + $0x2c] sm:$0xf]
        %v2182 = vld [vmem:[%s2169 + $0x30] sm:$0xf]
        %v2183 = vld [vmem:[%s2169 + $0x34] sm:$0xf]
        %v2184 = vld [vmem:[%s2169 + $0x38] sm:$0xf]
        %v2185 = vld [vmem:[%s2169 + $0x3c] sm:$0xf]
        %v2186 = vpack.c.b16 %v1914, %v1913
        %v2187 = vpack.c.b16 %v1916, %v1915
        %v2188 = vpack.c.b16 %v1917, %v1917
        %v2208 = vunpack.c.l.b16 %v2170
        %v2209 = vunpack.c.l.b16 %v2171
        %v2210 = vunpack.c.l.b16 %v2172
        %v2211 = vunpack.c.l.b16 %v2173
        %v2212 = vunpack.c.l.b16 %v2174
        %v2213 = vunpack.c.l.b16 %v2175
        %v2214 = vunpack.c.l.b16 %v2176
        %v2215 = vunpack.c.l.b16 %v2177
        %v2216 = vunpack.c.l.b16 %v2178
        %v2217 = vunpack.c.l.b16 %v2179
        %v2218 = vunpack.c.l.b16 %v2180
        %v2219 = vunpack.c.l.b16 %v2181
        %v2220 = vunpack.c.l.b16 %v2182
        %v2221 = vunpack.c.l.b16 %v2183
        %v2222 = vunpack.c.l.b16 %v2184
        %v2223 = vunpack.c.l.b16 %v2185
        %v2224 = vpack.c.b16 %v2209, %v2208
        %v2225 = vpack.c.b16 %v2211, %v2210
        %v2226 = vpack.c.b16 %v2213, %v2212
        %v2227 = vpack.c.b16 %v2215, %v2214
        %v2228 = vpack.c.b16 %v2217, %v2216
        %v2229 = vpack.c.b16 %v2219, %v2218
        %v2230 = vpack.c.b16 %v2221, %v2220
        %v2231 = vpack.c.b16 %v2223, %v2222
        %2240 = vmatprep.subr.bf16.mxu0 0
        %2241 = vmatpush1.bf16.msra.mxu0 %v2224
        %2242 = vmatprep.subr.bf16.mxu0 0
        %2243 = vmatpush1.bf16.msra.mxu0 %v2225
        %2244 = vmatprep.subr.bf16.mxu0 0
        %2245 = vmatpush1.bf16.msra.mxu0 %v2226
        %2246 = vmatprep.subr.bf16.mxu0 0
        %2247 = vmatpush1.bf16.msra.mxu0 %v2227
        %2248 = vmatprep.subr.bf16.mxu0 0
        %2249 = vmatpush1.bf16.msra.mxu0 %v2228
        %2250 = vmatprep.subr.bf16.mxu0 0
        %2251 = vmatpush1.bf16.msra.mxu0 %v2229
        %2252 = vmatprep.subr.bf16.mxu0 0
        %2253 = vmatpush1.bf16.msra.mxu0 %v2230
        %2254 = vmatprep.subr.bf16.mxu0 0
        %2255 = vmatpush1.bf16.msra.mxu0 %v2231
        %2256 = vmatprep.subr.bf16.mxu0 0
        %2257 = vmatpush1.bf16.msra.mxu0 0
        %2258 = vmatprep.subr.bf16.mxu0 0
        %2259 = vmatpush1.bf16.msra.mxu0 0
        %2260 = vmatprep.subr.bf16.mxu0 0
        %2261 = vmatpush1.bf16.msra.mxu0 0
        %2262 = vmatprep.subr.bf16.mxu0 0
        %2263 = vmatpush1.bf16.msra.mxu0 0
        %2264 = vmatprep.subr.bf16.mxu0 0
        %2265 = vmatpush1.bf16.msra.mxu0 0
        %2266 = vmatprep.subr.bf16.mxu0 0
        %2267 = vmatpush1.bf16.msra.mxu0 0
        %2268 = vmatprep.subr.bf16.mxu0 0
        %2269 = vmatpush1.bf16.msra.mxu0 0
        %2270 = vmatprep.subr.bf16.mxu0 0
        %2271 = vmatpush1.bf16.msra.mxu0 0
        %2272 = vmatprep.mubr.bf16.mxu0 0
        %2273 = vmatmul.mubr.bf16.gmra.mrb[0].mxu0 %v2186
        %v2274 = vpop.f32.mrb[0].mxu0
        %v2275 = vadd.f32 0.0, %v2274
        %v2276 = vpop.f32.mrb[0].mxu0
        %v2277 = vpop.f32.mrb[0].mxu0
        %v2278 = vadd.f32 0.0, %v2277
        %v2279 = vpop.f32.mrb[0].mxu0
        %2280 = vmatprep.mubr.bf16.mxu0 0
        %2281 = vmatmul.mubr.bf16.gmra.mrb[0].mxu0 %v2187
        %v2282 = vpop.f32.mrb[0].mxu0
        %v2283 = vadd.f32 0.0, %v2282
        %v2284 = vpop.f32.mrb[0].mxu0
        %v2285 = vpop.f32.mrb[0].mxu0
        %v2286 = vadd.f32 0.0, %v2285
        %v2287 = vpop.f32.mrb[0].mxu0
        %2288 = vmatprep.mubr.bf16.mxu0 0
        %2289 = vmatmul.mubr.bf16.gmra.mrb[0].mxu0 %v2188
        %v2290 = vpop.f32.mrb[0].mxu0
        %v2291 = vadd.f32 0.0, %v2290
        %v2292 = vpop.f32.mrb[0].mxu0
        %v2293 = vpop.f32.mrb[0].mxu0
        %v2294 = vpop.f32.mrb[0].mxu0
        %2295 = vdwg.mxu0
        %v2296 = vadd.f32 %v2148, %v2275
        %v2297 = vadd.f32 %v2151, %v2278
        %v2298 = vadd.f32 %v2156, %v2283
        %v2299 = vadd.f32 %v2159, %v2286
        %v2300 = vadd.f32 %v2164, %v2291
        %v2301 = vld [vmem:[#allocation2 + $0x4] sm:$0xf]
        %v2302 = vld [vmem:[#allocation2 + $0x8] sm:$0xf]
        %v2303 = vld [vmem:[#allocation2 + $0xc] sm:$0xf]
        %v2304 = vld [vmem:[#allocation2 + $0x10] sm:$0xf]
        %v2305 = vld [vmem:[#allocation2 + $0x14] sm:$0xf]
        %v2306 = vld [vmem:[#allocation2 + $0x18] sm:$0x1]
        %s2307 = scalar_lea.vmem [#allocation5], 832
        %v2308 = vld [vmem:[%s2307] sm:$0xf]
        %v2309 = vld [vmem:[%s2307 + $0x4] sm:$0xf]
        %v2310 = vld [vmem:[%s2307 + $0x8] sm:$0xf]
        %v2311 = vld [vmem:[%s2307 + $0xc] sm:$0xf]
        %v2312 = vld [vmem:[%s2307 + $0x10] sm:$0xf]
        %v2313 = vld [vmem:[%s2307 + $0x14] sm:$0xf]
        %v2314 = vld [vmem:[%s2307 + $0x18] sm:$0xf]
        %v2315 = vld [vmem:[%s2307 + $0x1c] sm:$0xf]
        %v2316 = vld [vmem:[%s2307 + $0x20] sm:$0xf]
        %v2317 = vld [vmem:[%s2307 + $0x24] sm:$0xf]
        %v2318 = vld [vmem:[%s2307 + $0x28] sm:$0xf]
        %v2319 = vld [vmem:[%s2307 + $0x2c] sm:$0xf]
        %v2320 = vld [vmem:[%s2307 + $0x30] sm:$0xf]
        %v2321 = vld [vmem:[%s2307 + $0x34] sm:$0xf]
        %v2322 = vld [vmem:[%s2307 + $0x38] sm:$0xf]
        %v2323 = vld [vmem:[%s2307 + $0x3c] sm:$0xf]
        %v2330 = vunpack.c.l.b16 %v2301
        %v2331 = vunpack.c.l.b16 %v2302
        %v2332 = vunpack.c.l.b16 %v2303
        %v2333 = vunpack.c.l.b16 %v2304
        %v2334 = vunpack.c.l.b16 %v2305
        %v2335 = vunpack.c.l.b16 %v2306
        %v2336 = vpack.c.b16 %v2331, %v2330
        %v2337 = vpack.c.b16 %v2333, %v2332
        %v2338 = vpack.c.b16 %v2335, %v2334
        %v2340 = vshrl.u32 %v2336, 16
        %v2342 = vshll.u32 %v2336, 16
        %v2344 = vrot.slane %v2342, 1
        %v2345 = vor.u32 %v2340, %v2344
        %v2347 = vshll.u32 %v2337, 16
        %v2349 = vrot.slane %v2347, 1
        %v2350 = vsel %vm711, %v2345, %v2349
        %v2351 = vshrl.u32 %v2337, 16
        %v2353 = vor.u32 %v2351, %v2349
        %v2355 = vshll.u32 %v2338, 16
        %v2357 = vrot.slane %v2355, 1
        %v2358 = vsel %vm711, %v2353, %v2357
        %v2359 = vshrl.u32 %v2338, 16
        %v2361 = vor.u32 %v2359, %v2357
        %v2381 = vunpack.c.l.b16 %v2308
        %v2382 = vunpack.c.l.b16 %v2309
        %v2383 = vunpack.c.l.b16 %v2310
        %v2384 = vunpack.c.l.b16 %v2311
        %v2385 = vunpack.c.l.b16 %v2312
        %v2386 = vunpack.c.l.b16 %v2313
        %v2387 = vunpack.c.l.b16 %v2314
        %v2388 = vunpack.c.l.b16 %v2315
        %v2389 = vunpack.c.l.b16 %v2316
        %v2390 = vunpack.c.l.b16 %v2317
        %v2391 = vunpack.c.l.b16 %v2318
        %v2392 = vunpack.c.l.b16 %v2319
        %v2393 = vunpack.c.l.b16 %v2320
        %v2394 = vunpack.c.l.b16 %v2321
        %v2395 = vunpack.c.l.b16 %v2322
        %v2396 = vunpack.c.l.b16 %v2323
        %v2397 = vpack.c.b16 %v2382, %v2381
        %v2398 = vpack.c.b16 %v2384, %v2383
        %v2399 = vpack.c.b16 %v2386, %v2385
        %v2400 = vpack.c.b16 %v2388, %v2387
        %v2401 = vpack.c.b16 %v2390, %v2389
        %v2402 = vpack.c.b16 %v2392, %v2391
        %v2403 = vpack.c.b16 %v2394, %v2393
        %v2404 = vpack.c.b16 %v2396, %v2395
        %2413 = vmatprep.subr.bf16.mxu0 0
        %2414 = vmatpush1.bf16.msra.mxu0 %v2397
        %2415 = vmatprep.subr.bf16.mxu0 0
        %2416 = vmatpush1.bf16.msra.mxu0 %v2398
        %2417 = vmatprep.subr.bf16.mxu0 0
        %2418 = vmatpush1.bf16.msra.mxu0 %v2399
        %2419 = vmatprep.subr.bf16.mxu0 0
        %2420 = vmatpush1.bf16.msra.mxu0 %v2400
        %2421 = vmatprep.subr.bf16.mxu0 0
        %2422 = vmatpush1.bf16.msra.mxu0 %v2401
        %2423 = vmatprep.subr.bf16.mxu0 0
        %2424 = vmatpush1.bf16.msra.mxu0 %v2402
        %2425 = vmatprep.subr.bf16.mxu0 0
        %2426 = vmatpush1.bf16.msra.mxu0 %v2403
        %2427 = vmatprep.subr.bf16.mxu0 0
        %2428 = vmatpush1.bf16.msra.mxu0 %v2404
        %2429 = vmatprep.subr.bf16.mxu0 0
        %2430 = vmatpush1.bf16.msra.mxu0 0
        %2431 = vmatprep.subr.bf16.mxu0 0
        %2432 = vmatpush1.bf16.msra.mxu0 0
        %2433 = vmatprep.subr.bf16.mxu0 0
        %2434 = vmatpush1.bf16.msra.mxu0 0
        %2435 = vmatprep.subr.bf16.mxu0 0
        %2436 = vmatpush1.bf16.msra.mxu0 0
        %2437 = vmatprep.subr.bf16.mxu0 0
        %2438 = vmatpush1.bf16.msra.mxu0 0
        %2439 = vmatprep.subr.bf16.mxu0 0
        %2440 = vmatpush1.bf16.msra.mxu0 0
        %2441 = vmatprep.subr.bf16.mxu0 0
        %2442 = vmatpush1.bf16.msra.mxu0 0
        %2443 = vmatprep.subr.bf16.mxu0 0
        %2444 = vmatpush1.bf16.msra.mxu0 0
        %2445 = vmatprep.mubr.bf16.mxu0 0
        %2446 = vmatmul.mubr.bf16.gmra.mrb[0].mxu0 %v2350
        %v2447 = vpop.f32.mrb[0].mxu0
        %v2448 = vadd.f32 0.0, %v2447
        %v2449 = vpop.f32.mrb[0].mxu0
        %v2450 = vpop.f32.mrb[0].mxu0
        %v2451 = vadd.f32 0.0, %v2450
        %v2452 = vpop.f32.mrb[0].mxu0
        %2453 = vmatprep.mubr.bf16.mxu0 0
        %2454 = vmatmul.mubr.bf16.gmra.mrb[0].mxu0 %v2358
        %v2455 = vpop.f32.mrb[0].mxu0
        %v2456 = vadd.f32 0.0, %v2455
        %v2457 = vpop.f32.mrb[0].mxu0
        %v2458 = vpop.f32.mrb[0].mxu0
        %v2459 = vadd.f32 0.0, %v2458
        %v2460 = vpop.f32.mrb[0].mxu0
        %2461 = vmatprep.mubr.bf16.mxu0 0
        %2462 = vmatmul.mubr.bf16.gmra.mrb[0].mxu0 %v2361
        %v2463 = vpop.f32.mrb[0].mxu0
        %v2464 = vadd.f32 0.0, %v2463
        %v2465 = vpop.f32.mrb[0].mxu0
        %v2466 = vpop.f32.mrb[0].mxu0
        %v2467 = vpop.f32.mrb[0].mxu0
        %2468 = vdwg.mxu0
        %v2469 = vadd.f32 %v2296, %v2448
        %v2470 = vadd.f32 %v2297, %v2451
        %v2471 = vadd.f32 %v2298, %v2456
        %v2472 = vadd.f32 %v2299, %v2459
        %v2473 = vadd.f32 %v2300, %v2464
        %v2474 = vld [vmem:[#allocation2 + $0x4] sm:$0xe]
        %s2475 = scalar_lea.vmem [#allocation5], 896
        %v2476 = vld [vmem:[%s2475] sm:$0xf]
        %v2477 = vld [vmem:[%s2475 + $0x4] sm:$0xf]
        %v2478 = vld [vmem:[%s2475 + $0x8] sm:$0xf]
        %v2479 = vld [vmem:[%s2475 + $0xc] sm:$0xf]
        %v2480 = vld [vmem:[%s2475 + $0x10] sm:$0xf]
        %v2481 = vld [vmem:[%s2475 + $0x14] sm:$0xf]
        %v2482 = vld [vmem:[%s2475 + $0x18] sm:$0xf]
        %v2483 = vld [vmem:[%s2475 + $0x1c] sm:$0xf]
        %v2484 = vld [vmem:[%s2475 + $0x20] sm:$0xf]
        %v2485 = vld [vmem:[%s2475 + $0x24] sm:$0xf]
        %v2486 = vld [vmem:[%s2475 + $0x28] sm:$0xf]
        %v2487 = vld [vmem:[%s2475 + $0x2c] sm:$0xf]
        %v2488 = vld [vmem:[%s2475 + $0x30] sm:$0xf]
        %v2489 = vld [vmem:[%s2475 + $0x34] sm:$0xf]
        %v2490 = vld [vmem:[%s2475 + $0x38] sm:$0xf]
        %v2491 = vld [vmem:[%s2475 + $0x3c] sm:$0xf]
        %v2493 = vunpack.c.l.b16 %v2474
        %v2494 = vpack.c.b16 %v2331, %v2493
        %v2495 = vrot.slane %v2494, 1
        %v2496 = vrot.slane %v2337, 1
        %v2497 = vsel %vm868, %v2495, %v2496
        %v2498 = vrot.slane %v2338, 1
        %v2499 = vsel %vm868, %v2496, %v2498
        %v2519 = vunpack.c.l.b16 %v2476
        %v2520 = vunpack.c.l.b16 %v2477
        %v2521 = vunpack.c.l.b16 %v2478
        %v2522 = vunpack.c.l.b16 %v2479
        %v2523 = vunpack.c.l.b16 %v2480
        %v2524 = vunpack.c.l.b16 %v2481
        %v2525 = vunpack.c.l.b16 %v2482
        %v2526 = vunpack.c.l.b16 %v2483
        %v2527 = vunpack.c.l.b16 %v2484
        %v2528 = vunpack.c.l.b16 %v2485
        %v2529 = vunpack.c.l.b16 %v2486
        %v2530 = vunpack.c.l.b16 %v2487
        %v2531 = vunpack.c.l.b16 %v2488
        %v2532 = vunpack.c.l.b16 %v2489
        %v2533 = vunpack.c.l.b16 %v2490
        %v2534 = vunpack.c.l.b16 %v2491
        %v2535 = vpack.c.b16 %v2520, %v2519
        %v2536 = vpack.c.b16 %v2522, %v2521
        %v2537 = vpack.c.b16 %v2524, %v2523
        %v2538 = vpack.c.b16 %v2526, %v2525
        %v2539 = vpack.c.b16 %v2528, %v2527
        %v2540 = vpack.c.b16 %v2530, %v2529
        %v2541 = vpack.c.b16 %v2532, %v2531
        %v2542 = vpack.c.b16 %v2534, %v2533
        %2551 = vmatprep.subr.bf16.mxu0 0
        %2552 = vmatpush1.bf16.msra.mxu0 %v2535
        %2553 = vmatprep.subr.bf16.mxu0 0
        %2554 = vmatpush1.bf16.msra.mxu0 %v2536
        %2555 = vmatprep.subr.bf16.mxu0 0
        %2556 = vmatpush1.bf16.msra.mxu0 %v2537
        %2557 = vmatprep.subr.bf16.mxu0 0
        %2558 = vmatpush1.bf16.msra.mxu0 %v2538
        %2559 = vmatprep.subr.bf16.mxu0 0
        %2560 = vmatpush1.bf16.msra.mxu0 %v2539
        %2561 = vmatprep.subr.bf16.mxu0 0
        %2562 = vmatpush1.bf16.msra.mxu0 %v2540
        %2563 = vmatprep.subr.bf16.mxu0 0
        %2564 = vmatpush1.bf16.msra.mxu0 %v2541
        %2565 = vmatprep.subr.bf16.mxu0 0
        %2566 = vmatpush1.bf16.msra.mxu0 %v2542
        %2567 = vmatprep.subr.bf16.mxu0 0
        %2568 = vmatpush1.bf16.msra.mxu0 0
        %2569 = vmatprep.subr.bf16.mxu0 0
        %2570 = vmatpush1.bf16.msra.mxu0 0
        %2571 = vmatprep.subr.bf16.mxu0 0
        %2572 = vmatpush1.bf16.msra.mxu0 0
        %2573 = vmatprep.subr.bf16.mxu0 0
        %2574 = vmatpush1.bf16.msra.mxu0 0
        %2575 = vmatprep.subr.bf16.mxu0 0
        %2576 = vmatpush1.bf16.msra.mxu0 0
        %2577 = vmatprep.subr.bf16.mxu0 0
        %2578 = vmatpush1.bf16.msra.mxu0 0
        %2579 = vmatprep.subr.bf16.mxu0 0
        %2580 = vmatpush1.bf16.msra.mxu0 0
        %2581 = vmatprep.subr.bf16.mxu0 0
        %2582 = vmatpush1.bf16.msra.mxu0 0
        %2583 = vmatprep.mubr.bf16.mxu0 0
        %2584 = vmatmul.mubr.bf16.gmra.mrb[0].mxu0 %v2497
        %v2585 = vpop.f32.mrb[0].mxu0
        %v2586 = vadd.f32 0.0, %v2585
        %v2587 = vpop.f32.mrb[0].mxu0
        %v2588 = vpop.f32.mrb[0].mxu0
        %v2589 = vadd.f32 0.0, %v2588
        %v2590 = vpop.f32.mrb[0].mxu0
        %2591 = vmatprep.mubr.bf16.mxu0 0
        %2592 = vmatmul.mubr.bf16.gmra.mrb[0].mxu0 %v2499
        %v2593 = vpop.f32.mrb[0].mxu0
        %v2594 = vadd.f32 0.0, %v2593
        %v2595 = vpop.f32.mrb[0].mxu0
        %v2596 = vpop.f32.mrb[0].mxu0
        %v2597 = vadd.f32 0.0, %v2596
        %v2598 = vpop.f32.mrb[0].mxu0
        %2599 = vmatprep.mubr.bf16.mxu0 0
        %2600 = vmatmul.mubr.bf16.gmra.mrb[0].mxu0 %v2498
        %v2601 = vpop.f32.mrb[0].mxu0
        %v2602 = vadd.f32 0.0, %v2601
        %v2603 = vpop.f32.mrb[0].mxu0
        %v2604 = vpop.f32.mrb[0].mxu0
        %v2605 = vpop.f32.mrb[0].mxu0
        %2606 = vdwg.mxu0
        %v2607 = vadd.f32 %v2469, %v2586
        %v2608 = vadd.f32 %v2470, %v2589
        %v2609 = vadd.f32 %v2471, %v2594
        %v2610 = vadd.f32 %v2472, %v2597
        %v2611 = vadd.f32 %v2473, %v2602
        %s2612 = scalar_lea.vmem %s2, 2
        %v2613 = vld [vmem:[%s2612] sm:$0x1]
        %v2615 = vlaneseq
        %v2616 = vshrl.u32 %v2615, 7
        %v2617 = vsub.s32 0, %v2616
        %v2618 = vrot.slane %v2613, %v2617
        %v2620 = vmul.f32 %v2607, %v2618
        %v2621 = vmul.f32 %v2608, %v2618
        %v2622 = vmul.f32 %v2609, %v2618
        %v2623 = vmul.f32 %v2610, %v2618
        %v2624 = vmul.f32 %v2611, %v2618
        %s2625 = scalar_lea.vmem %s3, 2
        %v2626 = vld [vmem:[%s2625] sm:$0x1]
        %v2628 = vlaneseq
        %v2629 = vshrl.u32 %v2628, 7
        %v2630 = vsub.s32 0, %v2629
        %v2631 = vrot.slane %v2626, %v2630
        %v2633 = vadd.f32 %v2620, %v2631
        %v2634 = vadd.f32 %v2621, %v2631
        %v2635 = vadd.f32 %v2622, %v2631
        %v2636 = vadd.f32 %v2623, %v2631
        %v2637 = vadd.f32 %v2624, %v2631
        %v2638 = vtanh.pop %v2633
        %v2639 = vtanh.pop %v2634
        %v2640 = vtanh.pop %v2635
        %v2641 = vtanh.pop %v2636
        %v2642 = vtanh.pop %v2637
        %v2643 = vsel %vm1020, %v2638, 0.0
        %v2644 = vsel %vm1021, %v2639, 0.0
        %v2645 = vsel %vm1022, %v2640, 0.0
        %v2646 = vsel %vm1023, %v2641, 0.0
        %v2647 = vsel %vm1024, %v2642, 0.0
        %v2648 = vpack.c.bf16 %v2644, %v2643
        %v2649 = vpack.c.bf16 %v2646, %v2645
        %v2650 = vpack.c.bf16 %v2647, %v2647
        %v2654 = vunpack.c.l.b16 %v2648
        %v2655 = vunpack.c.h.b16 %v2648
        %v2656 = vunpack.c.l.b16 %v2649
        %v2657 = vunpack.c.h.b16 %v2649
        %v2658 = vunpack.c.l.b16 %v2650
        %v2659 = vpack.c.b16 %v2654, %v2654
        %v2660 = vpack.c.b16 %v2655, %v2655
        %v2661 = vpack.c.b16 %v2656, %v2656
        %v2662 = vpack.c.b16 %v2657, %v2657
        %v2663 = vpack.c.b16 %v2658, %v2658
        %2669 = vst [vmem:[#allocation3 + $0x4] sm:$0xf] %v2659
        %2670 = vst [vmem:[#allocation3 + $0x8] sm:$0xf] %v2660
        %2671 = vst [vmem:[#allocation3 + $0xc] sm:$0xf] %v2661
        %2672 = vst [vmem:[#allocation3 + $0x10] sm:$0xf] %v2662
        %2673 = vst [vmem:[#allocation3 + $0x14] sm:$0xf] %v2663
        %v2674 = vld [vmem:[#allocation3] sm:$0x8]
        %v2675 = vld [vmem:[#allocation3 + $0x4] sm:$0xf]
        %v2676 = vld [vmem:[#allocation3 + $0x8] sm:$0xf]
        %v2677 = vld [vmem:[#allocation3 + $0xc] sm:$0xf]
        %v2678 = vld [vmem:[#allocation3 + $0x10] sm:$0xf]
        %v2679 = vld [vmem:[#allocation3 + $0x14] sm:$0x7]
        %s2680 = scalar_lea.vmem [#allocation5], 960
        %v2681 = vld [vmem:[%s2680] sm:$0xf]
        %v2682 = vld [vmem:[%s2680 + $0x4] sm:$0xf]
        %v2683 = vld [vmem:[%s2680 + $0x8] sm:$0xf]
        %v2684 = vld [vmem:[%s2680 + $0xc] sm:$0xf]
        %v2685 = vld [vmem:[%s2680 + $0x10] sm:$0xf]
        %v2686 = vld [vmem:[%s2680 + $0x14] sm:$0xf]
        %v2687 = vld [vmem:[%s2680 + $0x18] sm:$0xf]
        %v2688 = vld [vmem:[%s2680 + $0x1c] sm:$0xf]
        %v2689 = vld [vmem:[%s2680 + $0x20] sm:$0xf]
        %v2690 = vld [vmem:[%s2680 + $0x24] sm:$0xf]
        %v2691 = vld [vmem:[%s2680 + $0x28] sm:$0xf]
        %v2692 = vld [vmem:[%s2680 + $0x2c] sm:$0xf]
        %v2693 = vld [vmem:[%s2680 + $0x30] sm:$0xf]
        %v2694 = vld [vmem:[%s2680 + $0x34] sm:$0xf]
        %v2695 = vld [vmem:[%s2680 + $0x38] sm:$0xf]
        %v2696 = vld [vmem:[%s2680 + $0x3c] sm:$0xf]
        %v2697 = vld [vmem:[#allocation3 + $0x14] sm:$0xf]
        %s2698 = scalar_lea.vmem [#allocation5], 1024
        %v2699 = vld [vmem:[%s2698] sm:$0xf]
        %v2700 = vld [vmem:[%s2698 + $0x4] sm:$0xf]
        %v2701 = vld [vmem:[%s2698 + $0x8] sm:$0xf]
        %v2702 = vld [vmem:[%s2698 + $0xc] sm:$0xf]
        %v2703 = vld [vmem:[%s2698 + $0x10] sm:$0xf]
        %v2704 = vld [vmem:[%s2698 + $0x14] sm:$0xf]
        %v2705 = vld [vmem:[%s2698 + $0x18] sm:$0xf]
        %v2706 = vld [vmem:[%s2698 + $0x1c] sm:$0xf]
        %v2707 = vld [vmem:[%s2698 + $0x20] sm:$0xf]
        %v2708 = vld [vmem:[%s2698 + $0x24] sm:$0xf]
        %v2709 = vld [vmem:[%s2698 + $0x28] sm:$0xf]
        %v2710 = vld [vmem:[%s2698 + $0x2c] sm:$0xf]
        %v2711 = vld [vmem:[%s2698 + $0x30] sm:$0xf]
        %v2712 = vld [vmem:[%s2698 + $0x34] sm:$0xf]
        %v2713 = vld [vmem:[%s2698 + $0x38] sm:$0xf]
        %v2714 = vld [vmem:[%s2698 + $0x3c] sm:$0xf]
        %v2721 = vunpack.c.l.b16 %v2674
        %v2722 = vunpack.c.l.b16 %v2675
        %v2723 = vunpack.c.l.b16 %v2676
        %v2724 = vunpack.c.l.b16 %v2677
        %v2725 = vunpack.c.l.b16 %v2678
        %v2726 = vunpack.c.l.b16 %v2697
        %v2727 = vpack.c.b16 %v2722, %v2721
        %v2728 = vpack.c.b16 %v2724, %v2723
        %v2729 = vpack.c.b16 %v2726, %v2725
        %v2731 = vshrl.u32 %v2727, 16
        %v2733 = vrot.slane %v2731, 3
        %v2734 = vshll.u32 %v2727, 16
        %v2736 = vrot.slane %v2734, 4
        %v2737 = vor.u32 %v2733, %v2736
        %v2739 = vshrl.u32 %v2728, 16
        %v2741 = vrot.slane %v2739, 3
        %v2742 = vshll.u32 %v2728, 16
        %v2744 = vrot.slane %v2742, 4
        %v2745 = vor.u32 %v2741, %v2744
        %v2746 = vsel %vm291, %v2737, %v2745
        %v2748 = vshrl.u32 %v2729, 16
        %v2750 = vrot.slane %v2748, 3
        %v2751 = vshll.u32 %v2729, 16
        %v2753 = vrot.slane %v2751, 4
        %v2754 = vor.u32 %v2750, %v2753
        %v2755 = vsel %vm291, %v2745, %v2754
        %v2775 = vunpack.c.l.b16 %v2699
        %v2776 = vunpack.c.l.b16 %v2700
        %v2777 = vunpack.c.l.b16 %v2701
        %v2778 = vunpack.c.l.b16 %v2702
        %v2779 = vunpack.c.l.b16 %v2703
        %v2780 = vunpack.c.l.b16 %v2704
        %v2781 = vunpack.c.l.b16 %v2705
        %v2782 = vunpack.c.l.b16 %v2706
        %v2783 = vunpack.c.l.b16 %v2707
        %v2784 = vunpack.c.l.b16 %v2708
        %v2785 = vunpack.c.l.b16 %v2709
        %v2786 = vunpack.c.l.b16 %v2710
        %v2787 = vunpack.c.l.b16 %v2711
        %v2788 = vunpack.c.l.b16 %v2712
        %v2789 = vunpack.c.l.b16 %v2713
        %v2790 = vunpack.c.l.b16 %v2714
        %v2791 = vpack.c.b16 %v2776, %v2775
        %v2792 = vpack.c.b16 %v2778, %v2777
        %v2793 = vpack.c.b16 %v2780, %v2779
        %v2794 = vpack.c.b16 %v2782, %v2781
        %v2795 = vpack.c.b16 %v2784, %v2783
        %v2796 = vpack.c.b16 %v2786, %v2785
        %v2797 = vpack.c.b16 %v2788, %v2787
        %v2798 = vpack.c.b16 %v2790, %v2789
        %2807 = vmatprep.subr.bf16.mxu0 0
        %2808 = vmatpush1.bf16.msra.mxu0 %v2791
        %2809 = vmatprep.subr.bf16.mxu0 0
        %2810 = vmatpush1.bf16.msra.mxu0 %v2792
        %2811 = vmatprep.subr.bf16.mxu0 0
        %2812 = vmatpush1.bf16.msra.mxu0 %v2793
        %2813 = vmatprep.subr.bf16.mxu0 0
        %2814 = vmatpush1.bf16.msra.mxu0 %v2794
        %2815 = vmatprep.subr.bf16.mxu0 0
        %2816 = vmatpush1.bf16.msra.mxu0 %v2795
        %2817 = vmatprep.subr.bf16.mxu0 0
        %2818 = vmatpush1.bf16.msra.mxu0 %v2796
        %2819 = vmatprep.subr.bf16.mxu0 0
        %2820 = vmatpush1.bf16.msra.mxu0 %v2797
        %2821 = vmatprep.subr.bf16.mxu0 0
        %2822 = vmatpush1.bf16.msra.mxu0 %v2798
        %2823 = vmatprep.subr.bf16.mxu0 0
        %2824 = vmatpush1.bf16.msra.mxu0 0
        %2825 = vmatprep.subr.bf16.mxu0 0
        %2826 = vmatpush1.bf16.msra.mxu0 0
        %2827 = vmatprep.subr.bf16.mxu0 0
        %2828 = vmatpush1.bf16.msra.mxu0 0
        %2829 = vmatprep.subr.bf16.mxu0 0
        %2830 = vmatpush1.bf16.msra.mxu0 0
        %2831 = vmatprep.subr.bf16.mxu0 0
        %2832 = vmatpush1.bf16.msra.mxu0 0
        %2833 = vmatprep.subr.bf16.mxu0 0
        %2834 = vmatpush1.bf16.msra.mxu0 0
        %2835 = vmatprep.subr.bf16.mxu0 0
        %2836 = vmatpush1.bf16.msra.mxu0 0
        %2837 = vmatprep.subr.bf16.mxu0 0
        %2838 = vmatpush1.bf16.msra.mxu0 0
        %2839 = vmatprep.mubr.bf16.mxu0 0
        %2840 = vmatmul.mubr.bf16.gmra.mrb[0].mxu0 %v2746
        %v2841 = vpop.f32.mrb[0].mxu0
        %v2842 = vadd.f32 0.0, %v2841
        %v2843 = vpop.f32.mrb[0].mxu0
        %v2844 = vpop.f32.mrb[0].mxu0
        %v2845 = vadd.f32 0.0, %v2844
        %v2846 = vpop.f32.mrb[0].mxu0
        %2847 = vmatprep.mubr.bf16.mxu0 0
        %2848 = vmatmul.mubr.bf16.gmra.mrb[0].mxu0 %v2755
        %v2849 = vpop.f32.mrb[0].mxu0
        %v2850 = vadd.f32 0.0, %v2849
        %v2851 = vpop.f32.mrb[0].mxu0
        %v2852 = vpop.f32.mrb[0].mxu0
        %v2853 = vadd.f32 0.0, %v2852
        %v2854 = vpop.f32.mrb[0].mxu0
        %2855 = vmatprep.mubr.bf16.mxu0 0
        %2856 = vmatmul.mubr.bf16.gmra.mrb[0].mxu0 %v2754
        %v2857 = vpop.f32.mrb[0].mxu0
        %v2858 = vadd.f32 0.0, %v2857
        %v2859 = vpop.f32.mrb[0].mxu0
        %v2860 = vpop.f32.mrb[0].mxu0
        %v2861 = vpop.f32.mrb[0].mxu0
        %2862 = vdwg.mxu0
        %v2864 = vunpack.c.l.b16 %v2679
        %v2865 = vpack.c.b16 %v2864, %v2725
        %v2866 = vrot.slane %v2727, 3
        %v2867 = vrot.slane %v2728, 3
        %v2868 = vsel %vm428, %v2866, %v2867
        %v2869 = vrot.slane %v2865, 3
        %v2870 = vsel %vm428, %v2867, %v2869
        %v2890 = vunpack.c.l.b16 %v2681
        %v2891 = vunpack.c.l.b16 %v2682
        %v2892 = vunpack.c.l.b16 %v2683
        %v2893 = vunpack.c.l.b16 %v2684
        %v2894 = vunpack.c.l.b16 %v2685
        %v2895 = vunpack.c.l.b16 %v2686
        %v2896 = vunpack.c.l.b16 %v2687
        %v2897 = vunpack.c.l.b16 %v2688
        %v2898 = vunpack.c.l.b16 %v2689
        %v2899 = vunpack.c.l.b16 %v2690
        %v2900 = vunpack.c.l.b16 %v2691
        %v2901 = vunpack.c.l.b16 %v2692
        %v2902 = vunpack.c.l.b16 %v2693
        %v2903 = vunpack.c.l.b16 %v2694
        %v2904 = vunpack.c.l.b16 %v2695
        %v2905 = vunpack.c.l.b16 %v2696
        %v2906 = vpack.c.b16 %v2891, %v2890
        %v2907 = vpack.c.b16 %v2893, %v2892
        %v2908 = vpack.c.b16 %v2895, %v2894
        %v2909 = vpack.c.b16 %v2897, %v2896
        %v2910 = vpack.c.b16 %v2899, %v2898
        %v2911 = vpack.c.b16 %v2901, %v2900
        %v2912 = vpack.c.b16 %v2903, %v2902
        %v2913 = vpack.c.b16 %v2905, %v2904
        %2922 = vmatprep.subr.bf16.mxu0 0
        %2923 = vmatpush1.bf16.msra.mxu0 %v2906
        %2924 = vmatprep.subr.bf16.mxu0 0
        %2925 = vmatpush1.bf16.msra.mxu0 %v2907
        %2926 = vmatprep.subr.bf16.mxu0 0
        %2927 = vmatpush1.bf16.msra.mxu0 %v2908
        %2928 = vmatprep.subr.bf16.mxu0 0
        %2929 = vmatpush1.bf16.msra.mxu0 %v2909
        %2930 = vmatprep.subr.bf16.mxu0 0
        %2931 = vmatpush1.bf16.msra.mxu0 %v2910
        %2932 = vmatprep.subr.bf16.mxu0 0
        %2933 = vmatpush1.bf16.msra.mxu0 %v2911
        %2934 = vmatprep.subr.bf16.mxu0 0
        %2935 = vmatpush1.bf16.msra.mxu0 %v2912
        %2936 = vmatprep.subr.bf16.mxu0 0
        %2937 = vmatpush1.bf16.msra.mxu0 %v2913
        %2938 = vmatprep.subr.bf16.mxu0 0
        %2939 = vmatpush1.bf16.msra.mxu0 0
        %2940 = vmatprep.subr.bf16.mxu0 0
        %2941 = vmatpush1.bf16.msra.mxu0 0
        %2942 = vmatprep.subr.bf16.mxu0 0
        %2943 = vmatpush1.bf16.msra.mxu0 0
        %2944 = vmatprep.subr.bf16.mxu0 0
        %2945 = vmatpush1.bf16.msra.mxu0 0
        %2946 = vmatprep.subr.bf16.mxu0 0
        %2947 = vmatpush1.bf16.msra.mxu0 0
        %2948 = vmatprep.subr.bf16.mxu0 0
        %2949 = vmatpush1.bf16.msra.mxu0 0
        %2950 = vmatprep.subr.bf16.mxu0 0
        %2951 = vmatpush1.bf16.msra.mxu0 0
        %2952 = vmatprep.subr.bf16.mxu0 0
        %2953 = vmatpush1.bf16.msra.mxu0 0
        %2954 = vmatprep.mubr.bf16.mxu0 0
        %2955 = vmatmul.mubr.bf16.gmra.mrb[0].mxu0 %v2868
        %v2956 = vpop.f32.mrb[0].mxu0
        %v2957 = vadd.f32 %v2842, %v2956
        %v2958 = vpop.f32.mrb[0].mxu0
        %v2959 = vpop.f32.mrb[0].mxu0
        %v2960 = vadd.f32 %v2845, %v2959
        %v2961 = vpop.f32.mrb[0].mxu0
        %2962 = vmatprep.mubr.bf16.mxu0 0
        %2963 = vmatmul.mubr.bf16.gmra.mrb[0].mxu0 %v2870
        %v2964 = vpop.f32.mrb[0].mxu0
        %v2965 = vadd.f32 %v2850, %v2964
        %v2966 = vpop.f32.mrb[0].mxu0
        %v2967 = vpop.f32.mrb[0].mxu0
        %v2968 = vadd.f32 %v2853, %v2967
        %v2969 = vpop.f32.mrb[0].mxu0
        %2970 = vmatprep.mubr.bf16.mxu0 0
        %2971 = vmatmul.mubr.bf16.gmra.mrb[0].mxu0 %v2869
        %v2972 = vpop.f32.mrb[0].mxu0
        %v2973 = vadd.f32 %v2858, %v2972
        %v2974 = vpop.f32.mrb[0].mxu0
        %v2975 = vpop.f32.mrb[0].mxu0
        %v2976 = vpop.f32.mrb[0].mxu0
        %2977 = vdwg.mxu0
        %s2978 = scalar_lea.vmem [#allocation5], 1088
        %v2979 = vld [vmem:[%s2978] sm:$0xf]
        %v2980 = vld [vmem:[%s2978 + $0x4] sm:$0xf]
        %v2981 = vld [vmem:[%s2978 + $0x8] sm:$0xf]
        %v2982 = vld [vmem:[%s2978 + $0xc] sm:$0xf]
        %v2983 = vld [vmem:[%s2978 + $0x10] sm:$0xf]
        %v2984 = vld [vmem:[%s2978 + $0x14] sm:$0xf]
        %v2985 = vld [vmem:[%s2978 + $0x18] sm:$0xf]
        %v2986 = vld [vmem:[%s2978 + $0x1c] sm:$0xf]
        %v2987 = vld [vmem:[%s2978 + $0x20] sm:$0xf]
        %v2988 = vld [vmem:[%s2978 + $0x24] sm:$0xf]
        %v2989 = vld [vmem:[%s2978 + $0x28] sm:$0xf]
        %v2990 = vld [vmem:[%s2978 + $0x2c] sm:$0xf]
        %v2991 = vld [vmem:[%s2978 + $0x30] sm:$0xf]
        %v2992 = vld [vmem:[%s2978 + $0x34] sm:$0xf]
        %v2993 = vld [vmem:[%s2978 + $0x38] sm:$0xf]
        %v2994 = vld [vmem:[%s2978 + $0x3c] sm:$0xf]
        %v2995 = vpack.c.b16 %v2723, %v2722
        %v2996 = vpack.c.b16 %v2725, %v2724
        %v2997 = vpack.c.b16 %v2726, %v2726
        %v3017 = vunpack.c.l.b16 %v2979
        %v3018 = vunpack.c.l.b16 %v2980
        %v3019 = vunpack.c.l.b16 %v2981
        %v3020 = vunpack.c.l.b16 %v2982
        %v3021 = vunpack.c.l.b16 %v2983
        %v3022 = vunpack.c.l.b16 %v2984
        %v3023 = vunpack.c.l.b16 %v2985
        %v3024 = vunpack.c.l.b16 %v2986
        %v3025 = vunpack.c.l.b16 %v2987
        %v3026 = vunpack.c.l.b16 %v2988
        %v3027 = vunpack.c.l.b16 %v2989
        %v3028 = vunpack.c.l.b16 %v2990
        %v3029 = vunpack.c.l.b16 %v2991
        %v3030 = vunpack.c.l.b16 %v2992
        %v3031 = vunpack.c.l.b16 %v2993
        %v3032 = vunpack.c.l.b16 %v2994
        %v3033 = vpack.c.b16 %v3018, %v3017
        %v3034 = vpack.c.b16 %v3020, %v3019
        %v3035 = vpack.c.b16 %v3022, %v3021
        %v3036 = vpack.c.b16 %v3024, %v3023
        %v3037 = vpack.c.b16 %v3026, %v3025
        %v3038 = vpack.c.b16 %v3028, %v3027
        %v3039 = vpack.c.b16 %v3030, %v3029
        %v3040 = vpack.c.b16 %v3032, %v3031
        %3049 = vmatprep.subr.bf16.mxu0 0
        %3050 = vmatpush1.bf16.msra.mxu0 %v3033
        %3051 = vmatprep.subr.bf16.mxu0 0
        %3052 = vmatpush1.bf16.msra.mxu0 %v3034
        %3053 = vmatprep.subr.bf16.mxu0 0
        %3054 = vmatpush1.bf16.msra.mxu0 %v3035
        %3055 = vmatprep.subr.bf16.mxu0 0
        %3056 = vmatpush1.bf16.msra.mxu0 %v3036
        %3057 = vmatprep.subr.bf16.mxu0 0
        %3058 = vmatpush1.bf16.msra.mxu0 %v3037
        %3059 = vmatprep.subr.bf16.mxu0 0
        %3060 = vmatpush1.bf16.msra.mxu0 %v3038
        %3061 = vmatprep.subr.bf16.mxu0 0
        %3062 = vmatpush1.bf16.msra.mxu0 %v3039
        %3063 = vmatprep.subr.bf16.mxu0 0
        %3064 = vmatpush1.bf16.msra.mxu0 %v3040
        %3065 = vmatprep.subr.bf16.mxu0 0
        %3066 = vmatpush1.bf16.msra.mxu0 0
        %3067 = vmatprep.subr.bf16.mxu0 0
        %3068 = vmatpush1.bf16.msra.mxu0 0
        %3069 = vmatprep.subr.bf16.mxu0 0
        %3070 = vmatpush1.bf16.msra.mxu0 0
        %3071 = vmatprep.subr.bf16.mxu0 0
        %3072 = vmatpush1.bf16.msra.mxu0 0
        %3073 = vmatprep.subr.bf16.mxu0 0
        %3074 = vmatpush1.bf16.msra.mxu0 0
        %3075 = vmatprep.subr.bf16.mxu0 0
        %3076 = vmatpush1.bf16.msra.mxu0 0
        %3077 = vmatprep.subr.bf16.mxu0 0
        %3078 = vmatpush1.bf16.msra.mxu0 0
        %3079 = vmatprep.subr.bf16.mxu0 0
        %3080 = vmatpush1.bf16.msra.mxu0 0
        %3081 = vmatprep.mubr.bf16.mxu0 0
        %3082 = vmatmul.mubr.bf16.gmra.mrb[0].mxu0 %v2995
        %v3083 = vpop.f32.mrb[0].mxu0
        %v3084 = vadd.f32 0.0, %v3083
        %v3085 = vpop.f32.mrb[0].mxu0
        %v3086 = vpop.f32.mrb[0].mxu0
        %v3087 = vadd.f32 0.0, %v3086
        %v3088 = vpop.f32.mrb[0].mxu0
        %3089 = vmatprep.mubr.bf16.mxu0 0
        %3090 = vmatmul.mubr.bf16.gmra.mrb[0].mxu0 %v2996
        %v3091 = vpop.f32.mrb[0].mxu0
        %v3092 = vadd.f32 0.0, %v3091
        %v3093 = vpop.f32.mrb[0].mxu0
        %v3094 = vpop.f32.mrb[0].mxu0
        %v3095 = vadd.f32 0.0, %v3094
        %v3096 = vpop.f32.mrb[0].mxu0
        %3097 = vmatprep.mubr.bf16.mxu0 0
        %3098 = vmatmul.mubr.bf16.gmra.mrb[0].mxu0 %v2997
        %v3099 = vpop.f32.mrb[0].mxu0
        %v3100 = vadd.f32 0.0, %v3099
        %v3101 = vpop.f32.mrb[0].mxu0
        %v3102 = vpop.f32.mrb[0].mxu0
        %v3103 = vpop.f32.mrb[0].mxu0
        %3104 = vdwg.mxu0
        %v3105 = vadd.f32 %v2957, %v3084
        %v3106 = vadd.f32 %v2960, %v3087
        %v3107 = vadd.f32 %v2965, %v3092
        %v3108 = vadd.f32 %v2968, %v3095
        %v3109 = vadd.f32 %v2973, %v3100
        %v3110 = vld [vmem:[#allocation3 + $0x4] sm:$0xf]
        %v3111 = vld [vmem:[#allocation3 + $0x8] sm:$0xf]
        %v3112 = vld [vmem:[#allocation3 + $0xc] sm:$0xf]
        %v3113 = vld [vmem:[#allocation3 + $0x10] sm:$0xf]
        %v3114 = vld [vmem:[#allocation3 + $0x14] sm:$0xf]
        %v3115 = vld [vmem:[#allocation3 + $0x18] sm:$0x1]
        %s3116 = scalar_lea.vmem [#allocation5], 1152
        %v3117 = vld [vmem:[%s3116] sm:$0xf]
        %v3118 = vld [vmem:[%s3116 + $0x4] sm:$0xf]
        %v3119 = vld [vmem:[%s3116 + $0x8] sm:$0xf]
        %v3120 = vld [vmem:[%s3116 + $0xc] sm:$0xf]
        %v3121 = vld [vmem:[%s3116 + $0x10] sm:$0xf]
        %v3122 = vld [vmem:[%s3116 + $0x14] sm:$0xf]
        %v3123 = vld [vmem:[%s3116 + $0x18] sm:$0xf]
        %v3124 = vld [vmem:[%s3116 + $0x1c] sm:$0xf]
        %v3125 = vld [vmem:[%s3116 + $0x20] sm:$0xf]
        %v3126 = vld [vmem:[%s3116 + $0x24] sm:$0xf]
        %v3127 = vld [vmem:[%s3116 + $0x28] sm:$0xf]
        %v3128 = vld [vmem:[%s3116 + $0x2c] sm:$0xf]
        %v3129 = vld [vmem:[%s3116 + $0x30] sm:$0xf]
        %v3130 = vld [vmem:[%s3116 + $0x34] sm:$0xf]
        %v3131 = vld [vmem:[%s3116 + $0x38] sm:$0xf]
        %v3132 = vld [vmem:[%s3116 + $0x3c] sm:$0xf]
        %v3139 = vunpack.c.l.b16 %v3110
        %v3140 = vunpack.c.l.b16 %v3111
        %v3141 = vunpack.c.l.b16 %v3112
        %v3142 = vunpack.c.l.b16 %v3113
        %v3143 = vunpack.c.l.b16 %v3114
        %v3144 = vunpack.c.l.b16 %v3115
        %v3145 = vpack.c.b16 %v3140, %v3139
        %v3146 = vpack.c.b16 %v3142, %v3141
        %v3147 = vpack.c.b16 %v3144, %v3143
        %v3149 = vshrl.u32 %v3145, 16
        %v3151 = vshll.u32 %v3145, 16
        %v3153 = vrot.slane %v3151, 1
        %v3154 = vor.u32 %v3149, %v3153
        %v3156 = vshll.u32 %v3146, 16
        %v3158 = vrot.slane %v3156, 1
        %v3159 = vsel %vm711, %v3154, %v3158
        %v3160 = vshrl.u32 %v3146, 16
        %v3162 = vor.u32 %v3160, %v3158
        %v3164 = vshll.u32 %v3147, 16
        %v3166 = vrot.slane %v3164, 1
        %v3167 = vsel %vm711, %v3162, %v3166
        %v3168 = vshrl.u32 %v3147, 16
        %v3170 = vor.u32 %v3168, %v3166
        %v3190 = vunpack.c.l.b16 %v3117
        %v3191 = vunpack.c.l.b16 %v3118
        %v3192 = vunpack.c.l.b16 %v3119
        %v3193 = vunpack.c.l.b16 %v3120
        %v3194 = vunpack.c.l.b16 %v3121
        %v3195 = vunpack.c.l.b16 %v3122
        %v3196 = vunpack.c.l.b16 %v3123
        %v3197 = vunpack.c.l.b16 %v3124
        %v3198 = vunpack.c.l.b16 %v3125
        %v3199 = vunpack.c.l.b16 %v3126
        %v3200 = vunpack.c.l.b16 %v3127
        %v3201 = vunpack.c.l.b16 %v3128
        %v3202 = vunpack.c.l.b16 %v3129
        %v3203 = vunpack.c.l.b16 %v3130
        %v3204 = vunpack.c.l.b16 %v3131
        %v3205 = vunpack.c.l.b16 %v3132
        %v3206 = vpack.c.b16 %v3191, %v3190
        %v3207 = vpack.c.b16 %v3193, %v3192
        %v3208 = vpack.c.b16 %v3195, %v3194
        %v3209 = vpack.c.b16 %v3197, %v3196
        %v3210 = vpack.c.b16 %v3199, %v3198
        %v3211 = vpack.c.b16 %v3201, %v3200
        %v3212 = vpack.c.b16 %v3203, %v3202
        %v3213 = vpack.c.b16 %v3205, %v3204
        %3222 = vmatprep.subr.bf16.mxu0 0
        %3223 = vmatpush1.bf16.msra.mxu0 %v3206
        %3224 = vmatprep.subr.bf16.mxu0 0
        %3225 = vmatpush1.bf16.msra.mxu0 %v3207
        %3226 = vmatprep.subr.bf16.mxu0 0
        %3227 = vmatpush1.bf16.msra.mxu0 %v3208
        %3228 = vmatprep.subr.bf16.mxu0 0
        %3229 = vmatpush1.bf16.msra.mxu0 %v3209
        %3230 = vmatprep.subr.bf16.mxu0 0
        %3231 = vmatpush1.bf16.msra.mxu0 %v3210
        %3232 = vmatprep.subr.bf16.mxu0 0
        %3233 = vmatpush1.bf16.msra.mxu0 %v3211
        %3234 = vmatprep.subr.bf16.mxu0 0
        %3235 = vmatpush1.bf16.msra.mxu0 %v3212
        %3236 = vmatprep.subr.bf16.mxu0 0
        %3237 = vmatpush1.bf16.msra.mxu0 %v3213
        %3238 = vmatprep.subr.bf16.mxu0 0
        %3239 = vmatpush1.bf16.msra.mxu0 0
        %3240 = vmatprep.subr.bf16.mxu0 0
        %3241 = vmatpush1.bf16.msra.mxu0 0
        %3242 = vmatprep.subr.bf16.mxu0 0
        %3243 = vmatpush1.bf16.msra.mxu0 0
        %3244 = vmatprep.subr.bf16.mxu0 0
        %3245 = vmatpush1.bf16.msra.mxu0 0
        %3246 = vmatprep.subr.bf16.mxu0 0
        %3247 = vmatpush1.bf16.msra.mxu0 0
        %3248 = vmatprep.subr.bf16.mxu0 0
        %3249 = vmatpush1.bf16.msra.mxu0 0
        %3250 = vmatprep.subr.bf16.mxu0 0
        %3251 = vmatpush1.bf16.msra.mxu0 0
        %3252 = vmatprep.subr.bf16.mxu0 0
        %3253 = vmatpush1.bf16.msra.mxu0 0
        %3254 = vmatprep.mubr.bf16.mxu0 0
        %3255 = vmatmul.mubr.bf16.gmra.mrb[0].mxu0 %v3159
        %v3256 = vpop.f32.mrb[0].mxu0
        %v3257 = vadd.f32 0.0, %v3256
        %v3258 = vpop.f32.mrb[0].mxu0
        %v3259 = vpop.f32.mrb[0].mxu0
        %v3260 = vadd.f32 0.0, %v3259
        %v3261 = vpop.f32.mrb[0].mxu0
        %3262 = vmatprep.mubr.bf16.mxu0 0
        %3263 = vmatmul.mubr.bf16.gmra.mrb[0].mxu0 %v3167
        %v3264 = vpop.f32.mrb[0].mxu0
        %v3265 = vadd.f32 0.0, %v3264
        %v3266 = vpop.f32.mrb[0].mxu0
        %v3267 = vpop.f32.mrb[0].mxu0
        %v3268 = vadd.f32 0.0, %v3267
        %v3269 = vpop.f32.mrb[0].mxu0
        %3270 = vmatprep.mubr.bf16.mxu0 0
        %3271 = vmatmul.mubr.bf16.gmra.mrb[0].mxu0 %v3170
        %v3272 = vpop.f32.mrb[0].mxu0
        %v3273 = vadd.f32 0.0, %v3272
        %v3274 = vpop.f32.mrb[0].mxu0
        %v3275 = vpop.f32.mrb[0].mxu0
        %v3276 = vpop.f32.mrb[0].mxu0
        %3277 = vdwg.mxu0
        %v3278 = vadd.f32 %v3105, %v3257
        %v3279 = vadd.f32 %v3106, %v3260
        %v3280 = vadd.f32 %v3107, %v3265
        %v3281 = vadd.f32 %v3108, %v3268
        %v3282 = vadd.f32 %v3109, %v3273
        %v3283 = vld [vmem:[#allocation3 + $0x4] sm:$0xe]
        %s3284 = scalar_lea.vmem [#allocation5], 1216
        %v3285 = vld [vmem:[%s3284] sm:$0xf]
        %v3286 = vld [vmem:[%s3284 + $0x4] sm:$0xf]
        %v3287 = vld [vmem:[%s3284 + $0x8] sm:$0xf]
        %v3288 = vld [vmem:[%s3284 + $0xc] sm:$0xf]
        %v3289 = vld [vmem:[%s3284 + $0x10] sm:$0xf]
        %v3290 = vld [vmem:[%s3284 + $0x14] sm:$0xf]
        %v3291 = vld [vmem:[%s3284 + $0x18] sm:$0xf]
        %v3292 = vld [vmem:[%s3284 + $0x1c] sm:$0xf]
        %v3293 = vld [vmem:[%s3284 + $0x20] sm:$0xf]
        %v3294 = vld [vmem:[%s3284 + $0x24] sm:$0xf]
        %v3295 = vld [vmem:[%s3284 + $0x28] sm:$0xf]
        %v3296 = vld [vmem:[%s3284 + $0x2c] sm:$0xf]
        %v3297 = vld [vmem:[%s3284 + $0x30] sm:$0xf]
        %v3298 = vld [vmem:[%s3284 + $0x34] sm:$0xf]
        %v3299 = vld [vmem:[%s3284 + $0x38] sm:$0xf]
        %v3300 = vld [vmem:[%s3284 + $0x3c] sm:$0xf]
        %v3302 = vunpack.c.l.b16 %v3283
        %v3303 = vpack.c.b16 %v3140, %v3302
        %v3304 = vrot.slane %v3303, 1
        %v3305 = vrot.slane %v3146, 1
        %v3306 = vsel %vm868, %v3304, %v3305
        %v3307 = vrot.slane %v3147, 1
        %v3308 = vsel %vm868, %v3305, %v3307
        %v3328 = vunpack.c.l.b16 %v3285
        %v3329 = vunpack.c.l.b16 %v3286
        %v3330 = vunpack.c.l.b16 %v3287
        %v3331 = vunpack.c.l.b16 %v3288
        %v3332 = vunpack.c.l.b16 %v3289
        %v3333 = vunpack.c.l.b16 %v3290
        %v3334 = vunpack.c.l.b16 %v3291
        %v3335 = vunpack.c.l.b16 %v3292
        %v3336 = vunpack.c.l.b16 %v3293
        %v3337 = vunpack.c.l.b16 %v3294
        %v3338 = vunpack.c.l.b16 %v3295
        %v3339 = vunpack.c.l.b16 %v3296
        %v3340 = vunpack.c.l.b16 %v3297
        %v3341 = vunpack.c.l.b16 %v3298
        %v3342 = vunpack.c.l.b16 %v3299
        %v3343 = vunpack.c.l.b16 %v3300
        %v3344 = vpack.c.b16 %v3329, %v3328
        %v3345 = vpack.c.b16 %v3331, %v3330
        %v3346 = vpack.c.b16 %v3333, %v3332
        %v3347 = vpack.c.b16 %v3335, %v3334
        %v3348 = vpack.c.b16 %v3337, %v3336
        %v3349 = vpack.c.b16 %v3339, %v3338
        %v3350 = vpack.c.b16 %v3341, %v3340
        %v3351 = vpack.c.b16 %v3343, %v3342
        %3360 = vmatprep.subr.bf16.mxu0 0
        %3361 = vmatpush1.bf16.msra.mxu0 %v3344
        %3362 = vmatprep.subr.bf16.mxu0 0
        %3363 = vmatpush1.bf16.msra.mxu0 %v3345
        %3364 = vmatprep.subr.bf16.mxu0 0
        %3365 = vmatpush1.bf16.msra.mxu0 %v3346
        %3366 = vmatprep.subr.bf16.mxu0 0
        %3367 = vmatpush1.bf16.msra.mxu0 %v3347
        %3368 = vmatprep.subr.bf16.mxu0 0
        %3369 = vmatpush1.bf16.msra.mxu0 %v3348
        %3370 = vmatprep.subr.bf16.mxu0 0
        %3371 = vmatpush1.bf16.msra.mxu0 %v3349
        %3372 = vmatprep.subr.bf16.mxu0 0
        %3373 = vmatpush1.bf16.msra.mxu0 %v3350
        %3374 = vmatprep.subr.bf16.mxu0 0
        %3375 = vmatpush1.bf16.msra.mxu0 %v3351
        %3376 = vmatprep.subr.bf16.mxu0 0
        %3377 = vmatpush1.bf16.msra.mxu0 0
        %3378 = vmatprep.subr.bf16.mxu0 0
        %3379 = vmatpush1.bf16.msra.mxu0 0
        %3380 = vmatprep.subr.bf16.mxu0 0
        %3381 = vmatpush1.bf16.msra.mxu0 0
        %3382 = vmatprep.subr.bf16.mxu0 0
        %3383 = vmatpush1.bf16.msra.mxu0 0
        %3384 = vmatprep.subr.bf16.mxu0 0
        %3385 = vmatpush1.bf16.msra.mxu0 0
        %3386 = vmatprep.subr.bf16.mxu0 0
        %3387 = vmatpush1.bf16.msra.mxu0 0
        %3388 = vmatprep.subr.bf16.mxu0 0
        %3389 = vmatpush1.bf16.msra.mxu0 0
        %3390 = vmatprep.subr.bf16.mxu0 0
        %3391 = vmatpush1.bf16.msra.mxu0 0
        %3392 = vmatprep.mubr.bf16.mxu0 0
        %3393 = vmatmul.mubr.bf16.gmra.mrb[0].mxu0 %v3306
        %v3394 = vpop.f32.mrb[0].mxu0
        %v3395 = vadd.f32 0.0, %v3394
        %v3396 = vpop.f32.mrb[0].mxu0
        %v3397 = vpop.f32.mrb[0].mxu0
        %v3398 = vadd.f32 0.0, %v3397
        %v3399 = vpop.f32.mrb[0].mxu0
        %3400 = vmatprep.mubr.bf16.mxu0 0
        %3401 = vmatmul.mubr.bf16.gmra.mrb[0].mxu0 %v3308
        %v3402 = vpop.f32.mrb[0].mxu0
        %v3403 = vadd.f32 0.0, %v3402
        %v3404 = vpop.f32.mrb[0].mxu0
        %v3405 = vpop.f32.mrb[0].mxu0
        %v3406 = vadd.f32 0.0, %v3405
        %v3407 = vpop.f32.mrb[0].mxu0
        %3408 = vmatprep.mubr.bf16.mxu0 0
        %3409 = vmatmul.mubr.bf16.gmra.mrb[0].mxu0 %v3307
        %v3410 = vpop.f32.mrb[0].mxu0
        %v3411 = vadd.f32 0.0, %v3410
        %v3412 = vpop.f32.mrb[0].mxu0
        %v3413 = vpop.f32.mrb[0].mxu0
        %v3414 = vpop.f32.mrb[0].mxu0
        %3415 = vdwg.mxu0
        %v3416 = vadd.f32 %v3278, %v3395
        %v3417 = vadd.f32 %v3279, %v3398
        %v3418 = vadd.f32 %v3280, %v3403
        %v3419 = vadd.f32 %v3281, %v3406
        %v3420 = vadd.f32 %v3282, %v3411
        %s3421 = scalar_lea.vmem %s2, 3
        %v3422 = vld [vmem:[%s3421] sm:$0x1]
        %v3424 = vlaneseq
        %v3425 = vshrl.u32 %v3424, 7
        %v3426 = vsub.s32 0, %v3425
        %v3427 = vrot.slane %v3422, %v3426
        %v3429 = vmul.f32 %v3416, %v3427
        %v3430 = vmul.f32 %v3417, %v3427
        %v3431 = vmul.f32 %v3418, %v3427
        %v3432 = vmul.f32 %v3419, %v3427
        %v3433 = vmul.f32 %v3420, %v3427
        %s3434 = scalar_lea.vmem %s3, 3
        %v3435 = vld [vmem:[%s3434] sm:$0x1]
        %v3437 = vlaneseq
        %v3438 = vshrl.u32 %v3437, 7
        %v3439 = vsub.s32 0, %v3438
        %v3440 = vrot.slane %v3435, %v3439
        %v3442 = vadd.f32 %v3429, %v3440
        %v3443 = vadd.f32 %v3430, %v3440
        %v3444 = vadd.f32 %v3431, %v3440
        %v3445 = vadd.f32 %v3432, %v3440
        %v3446 = vadd.f32 %v3433, %v3440
        %v3447 = vtanh.pop %v3442
        %v3448 = vtanh.pop %v3443
        %v3449 = vtanh.pop %v3444
        %v3450 = vtanh.pop %v3445
        %v3451 = vtanh.pop %v3446
        %v3452 = vsel %vm1020, %v3447, 0.0
        %v3453 = vsel %vm1021, %v3448, 0.0
        %v3454 = vsel %vm1022, %v3449, 0.0
        %v3455 = vsel %vm1023, %v3450, 0.0
        %v3456 = vsel %vm1024, %v3451, 0.0
        %v3457 = vpack.c.bf16 %v3453, %v3452
        %v3458 = vpack.c.bf16 %v3455, %v3454
        %v3459 = vpack.c.bf16 %v3456, %v3456
        %v3463 = vunpack.c.l.b16 %v3457
        %v3464 = vunpack.c.h.b16 %v3457
        %v3465 = vunpack.c.l.b16 %v3458
        %v3466 = vunpack.c.h.b16 %v3458
        %v3467 = vunpack.c.l.b16 %v3459
        %v3468 = vpack.c.b16 %v3463, %v3463
        %v3469 = vpack.c.b16 %v3464, %v3464
        %v3470 = vpack.c.b16 %v3465, %v3465
        %v3471 = vpack.c.b16 %v3466, %v3466
        %v3472 = vpack.c.b16 %v3467, %v3467
        %3478 = vst [vmem:[#allocation2 + $0x4] sm:$0xf] %v3468
        %3479 = vst [vmem:[#allocation2 + $0x8] sm:$0xf] %v3469
        %3480 = vst [vmem:[#allocation2 + $0xc] sm:$0xf] %v3470
        %3481 = vst [vmem:[#allocation2 + $0x10] sm:$0xf] %v3471
        %3482 = vst [vmem:[#allocation2 + $0x14] sm:$0xf] %v3472
        %v3483 = vld [vmem:[#allocation2] sm:$0x8]
        %v3484 = vld [vmem:[#allocation2 + $0x4] sm:$0xf]
        %v3485 = vld [vmem:[#allocation2 + $0x8] sm:$0xf]
        %v3486 = vld [vmem:[#allocation2 + $0xc] sm:$0xf]
        %v3487 = vld [vmem:[#allocation2 + $0x10] sm:$0xf]
        %v3488 = vld [vmem:[#allocation2 + $0x14] sm:$0x7]
        %s3489 = scalar_lea.vmem [#allocation5], 1280
        %v3490 = vld [vmem:[%s3489] sm:$0xf]
        %v3491 = vld [vmem:[%s3489 + $0x4] sm:$0xf]
        %v3492 = vld [vmem:[%s3489 + $0x8] sm:$0xf]
        %v3493 = vld [vmem:[%s3489 + $0xc] sm:$0xf]
        %v3494 = vld [vmem:[%s3489 + $0x10] sm:$0xf]
        %v3495 = vld [vmem:[%s3489 + $0x14] sm:$0xf]
        %v3496 = vld [vmem:[%s3489 + $0x18] sm:$0xf]
        %v3497 = vld [vmem:[%s3489 + $0x1c] sm:$0xf]
        %v3498 = vld [vmem:[%s3489 + $0x20] sm:$0xf]
        %v3499 = vld [vmem:[%s3489 + $0x24] sm:$0xf]
        %v3500 = vld [vmem:[%s3489 + $0x28] sm:$0xf]
        %v3501 = vld [vmem:[%s3489 + $0x2c] sm:$0xf]
        %v3502 = vld [vmem:[%s3489 + $0x30] sm:$0xf]
        %v3503 = vld [vmem:[%s3489 + $0x34] sm:$0xf]
        %v3504 = vld [vmem:[%s3489 + $0x38] sm:$0xf]
        %v3505 = vld [vmem:[%s3489 + $0x3c] sm:$0xf]
        %v3506 = vld [vmem:[#allocation2 + $0x14] sm:$0xf]
        %s3507 = scalar_lea.vmem [#allocation5], 1344
        %v3508 = vld [vmem:[%s3507] sm:$0xf]
        %v3509 = vld [vmem:[%s3507 + $0x4] sm:$0xf]
        %v3510 = vld [vmem:[%s3507 + $0x8] sm:$0xf]
        %v3511 = vld [vmem:[%s3507 + $0xc] sm:$0xf]
        %v3512 = vld [vmem:[%s3507 + $0x10] sm:$0xf]
        %v3513 = vld [vmem:[%s3507 + $0x14] sm:$0xf]
        %v3514 = vld [vmem:[%s3507 + $0x18] sm:$0xf]
        %v3515 = vld [vmem:[%s3507 + $0x1c] sm:$0xf]
        %v3516 = vld [vmem:[%s3507 + $0x20] sm:$0xf]
        %v3517 = vld [vmem:[%s3507 + $0x24] sm:$0xf]
        %v3518 = vld [vmem:[%s3507 + $0x28] sm:$0xf]
        %v3519 = vld [vmem:[%s3507 + $0x2c] sm:$0xf]
        %v3520 = vld [vmem:[%s3507 + $0x30] sm:$0xf]
        %v3521 = vld [vmem:[%s3507 + $0x34] sm:$0xf]
        %v3522 = vld [vmem:[%s3507 + $0x38] sm:$0xf]
        %v3523 = vld [vmem:[%s3507 + $0x3c] sm:$0xf]
        %v3530 = vunpack.c.l.b16 %v3483
        %v3531 = vunpack.c.l.b16 %v3484
        %v3532 = vunpack.c.l.b16 %v3485
        %v3533 = vunpack.c.l.b16 %v3486
        %v3534 = vunpack.c.l.b16 %v3487
        %v3535 = vunpack.c.l.b16 %v3506
        %v3536 = vpack.c.b16 %v3531, %v3530
        %v3537 = vpack.c.b16 %v3533, %v3532
        %v3538 = vpack.c.b16 %v3535, %v3534
        %v3540 = vshrl.u32 %v3536, 16
        %v3542 = vrot.slane %v3540, 3
        %v3543 = vshll.u32 %v3536, 16
        %v3545 = vrot.slane %v3543, 4
        %v3546 = vor.u32 %v3542, %v3545
        %v3548 = vshrl.u32 %v3537, 16
        %v3550 = vrot.slane %v3548, 3
        %v3551 = vshll.u32 %v3537, 16
        %v3553 = vrot.slane %v3551, 4
        %v3554 = vor.u32 %v3550, %v3553
        %v3555 = vsel %vm291, %v3546, %v3554
        %v3557 = vshrl.u32 %v3538, 16
        %v3559 = vrot.slane %v3557, 3
        %v3560 = vshll.u32 %v3538, 16
        %v3562 = vrot.slane %v3560, 4
        %v3563 = vor.u32 %v3559, %v3562
        %v3564 = vsel %vm291, %v3554, %v3563
        %v3584 = vunpack.c.l.b16 %v3508
        %v3585 = vunpack.c.l.b16 %v3509
        %v3586 = vunpack.c.l.b16 %v3510
        %v3587 = vunpack.c.l.b16 %v3511
        %v3588 = vunpack.c.l.b16 %v3512
        %v3589 = vunpack.c.l.b16 %v3513
        %v3590 = vunpack.c.l.b16 %v3514
        %v3591 = vunpack.c.l.b16 %v3515
        %v3592 = vunpack.c.l.b16 %v3516
        %v3593 = vunpack.c.l.b16 %v3517
        %v3594 = vunpack.c.l.b16 %v3518
        %v3595 = vunpack.c.l.b16 %v3519
        %v3596 = vunpack.c.l.b16 %v3520
        %v3597 = vunpack.c.l.b16 %v3521
        %v3598 = vunpack.c.l.b16 %v3522
        %v3599 = vunpack.c.l.b16 %v3523
        %v3600 = vpack.c.b16 %v3585, %v3584
        %v3601 = vpack.c.b16 %v3587, %v3586
        %v3602 = vpack.c.b16 %v3589, %v3588
        %v3603 = vpack.c.b16 %v3591, %v3590
        %v3604 = vpack.c.b16 %v3593, %v3592
        %v3605 = vpack.c.b16 %v3595, %v3594
        %v3606 = vpack.c.b16 %v3597, %v3596
        %v3607 = vpack.c.b16 %v3599, %v3598
        %3616 = vmatprep.subr.bf16.mxu0 0
        %3617 = vmatpush1.bf16.msra.mxu0 %v3600
        %3618 = vmatprep.subr.bf16.mxu0 0
        %3619 = vmatpush1.bf16.msra.mxu0 %v3601
        %3620 = vmatprep.subr.bf16.mxu0 0
        %3621 = vmatpush1.bf16.msra.mxu0 %v3602
        %3622 = vmatprep.subr.bf16.mxu0 0
        %3623 = vmatpush1.bf16.msra.mxu0 %v3603
        %3624 = vmatprep.subr.bf16.mxu0 0
        %3625 = vmatpush1.bf16.msra.mxu0 %v3604
        %3626 = vmatprep.subr.bf16.mxu0 0
        %3627 = vmatpush1.bf16.msra.mxu0 %v3605
        %3628 = vmatprep.subr.bf16.mxu0 0
        %3629 = vmatpush1.bf16.msra.mxu0 %v3606
        %3630 = vmatprep.subr.bf16.mxu0 0
        %3631 = vmatpush1.bf16.msra.mxu0 %v3607
        %3632 = vmatprep.subr.bf16.mxu0 0
        %3633 = vmatpush1.bf16.msra.mxu0 0
        %3634 = vmatprep.subr.bf16.mxu0 0
        %3635 = vmatpush1.bf16.msra.mxu0 0
        %3636 = vmatprep.subr.bf16.mxu0 0
        %3637 = vmatpush1.bf16.msra.mxu0 0
        %3638 = vmatprep.subr.bf16.mxu0 0
        %3639 = vmatpush1.bf16.msra.mxu0 0
        %3640 = vmatprep.subr.bf16.mxu0 0
        %3641 = vmatpush1.bf16.msra.mxu0 0
        %3642 = vmatprep.subr.bf16.mxu0 0
        %3643 = vmatpush1.bf16.msra.mxu0 0
        %3644 = vmatprep.subr.bf16.mxu0 0
        %3645 = vmatpush1.bf16.msra.mxu0 0
        %3646 = vmatprep.subr.bf16.mxu0 0
        %3647 = vmatpush1.bf16.msra.mxu0 0
        %3648 = vmatprep.mubr.bf16.mxu0 0
        %3649 = vmatmul.mubr.bf16.gmra.mrb[0].mxu0 %v3555
        %v3650 = vpop.f32.mrb[0].mxu0
        %v3651 = vpop.f32.mrb[0].mxu0
        %v3652 = vpop.f32.mrb[0].mxu0
        %v3653 = vadd.f32 0.0, %v3652
        %v3654 = vpop.f32.mrb[0].mxu0
        %3655 = vmatprep.mubr.bf16.mxu0 0
        %3656 = vmatmul.mubr.bf16.gmra.mrb[0].mxu0 %v3564
        %v3657 = vpop.f32.mrb[0].mxu0
        %v3658 = vadd.f32 0.0, %v3657
        %v3659 = vpop.f32.mrb[0].mxu0
        %v3660 = vpop.f32.mrb[0].mxu0
        %v3661 = vadd.f32 0.0, %v3660
        %v3662 = vpop.f32.mrb[0].mxu0
        %3663 = vmatprep.mubr.bf16.mxu0 0
        %3664 = vmatmul.mubr.bf16.gmra.mrb[0].mxu0 %v3563
        %v3665 = vpop.f32.mrb[0].mxu0
        %v3666 = vpop.f32.mrb[0].mxu0
        %v3667 = vpop.f32.mrb[0].mxu0
        %v3668 = vpop.f32.mrb[0].mxu0
        %3669 = vdwg.mxu0
        %v3671 = vunpack.c.l.b16 %v3488
        %v3672 = vpack.c.b16 %v3671, %v3534
        %v3673 = vrot.slane %v3536, 3
        %v3674 = vrot.slane %v3537, 3
        %v3675 = vsel %vm428, %v3673, %v3674
        %v3676 = vrot.slane %v3672, 3
        %v3677 = vsel %vm428, %v3674, %v3676
        %v3697 = vunpack.c.l.b16 %v3490
        %v3698 = vunpack.c.l.b16 %v3491
        %v3699 = vunpack.c.l.b16 %v3492
        %v3700 = vunpack.c.l.b16 %v3493
        %v3701 = vunpack.c.l.b16 %v3494
        %v3702 = vunpack.c.l.b16 %v3495
        %v3703 = vunpack.c.l.b16 %v3496
        %v3704 = vunpack.c.l.b16 %v3497
        %v3705 = vunpack.c.l.b16 %v3498
        %v3706 = vunpack.c.l.b16 %v3499
        %v3707 = vunpack.c.l.b16 %v3500
        %v3708 = vunpack.c.l.b16 %v3501
        %v3709 = vunpack.c.l.b16 %v3502
        %v3710 = vunpack.c.l.b16 %v3503
        %v3711 = vunpack.c.l.b16 %v3504
        %v3712 = vunpack.c.l.b16 %v3505
        %v3713 = vpack.c.b16 %v3698, %v3697
        %v3714 = vpack.c.b16 %v3700, %v3699
        %v3715 = vpack.c.b16 %v3702, %v3701
        %v3716 = vpack.c.b16 %v3704, %v3703
        %v3717 = vpack.c.b16 %v3706, %v3705
        %v3718 = vpack.c.b16 %v3708, %v3707
        %v3719 = vpack.c.b16 %v3710, %v3709
        %v3720 = vpack.c.b16 %v3712, %v3711
        %3729 = vmatprep.subr.bf16.mxu0 0
        %3730 = vmatpush1.bf16.msra.mxu0 %v3713
        %3731 = vmatprep.subr.bf16.mxu0 0
        %3732 = vmatpush1.bf16.msra.mxu0 %v3714
        %3733 = vmatprep.subr.bf16.mxu0 0
        %3734 = vmatpush1.bf16.msra.mxu0 %v3715
        %3735 = vmatprep.subr.bf16.mxu0 0
        %3736 = vmatpush1.bf16.msra.mxu0 %v3716
        %3737 = vmatprep.subr.bf16.mxu0 0
        %3738 = vmatpush1.bf16.msra.mxu0 %v3717
        %3739 = vmatprep.subr.bf16.mxu0 0
        %3740 = vmatpush1.bf16.msra.mxu0 %v3718
        %3741 = vmatprep.subr.bf16.mxu0 0
        %3742 = vmatpush1.bf16.msra.mxu0 %v3719
        %3743 = vmatprep.subr.bf16.mxu0 0
        %3744 = vmatpush1.bf16.msra.mxu0 %v3720
        %3745 = vmatprep.subr.bf16.mxu0 0
        %3746 = vmatpush1.bf16.msra.mxu0 0
        %3747 = vmatprep.subr.bf16.mxu0 0
        %3748 = vmatpush1.bf16.msra.mxu0 0
        %3749 = vmatprep.subr.bf16.mxu0 0
        %3750 = vmatpush1.bf16.msra.mxu0 0
        %3751 = vmatprep.subr.bf16.mxu0 0
        %3752 = vmatpush1.bf16.msra.mxu0 0
        %3753 = vmatprep.subr.bf16.mxu0 0
        %3754 = vmatpush1.bf16.msra.mxu0 0
        %3755 = vmatprep.subr.bf16.mxu0 0
        %3756 = vmatpush1.bf16.msra.mxu0 0
        %3757 = vmatprep.subr.bf16.mxu0 0
        %3758 = vmatpush1.bf16.msra.mxu0 0
        %3759 = vmatprep.subr.bf16.mxu0 0
        %3760 = vmatpush1.bf16.msra.mxu0 0
        %3761 = vmatprep.mubr.bf16.mxu0 0
        %3762 = vmatmul.mubr.bf16.gmra.mrb[0].mxu0 %v3675
        %v3763 = vpop.f32.mrb[0].mxu0
        %v3764 = vpop.f32.mrb[0].mxu0
        %v3765 = vpop.f32.mrb[0].mxu0
        %v3766 = vadd.f32 %v3653, %v3765
        %v3767 = vpop.f32.mrb[0].mxu0
        %3768 = vmatprep.mubr.bf16.mxu0 0
        %3769 = vmatmul.mubr.bf16.gmra.mrb[0].mxu0 %v3677
        %v3770 = vpop.f32.mrb[0].mxu0
        %v3771 = vadd.f32 %v3658, %v3770
        %v3772 = vpop.f32.mrb[0].mxu0
        %v3773 = vpop.f32.mrb[0].mxu0
        %v3774 = vadd.f32 %v3661, %v3773
        %v3775 = vpop.f32.mrb[0].mxu0
        %3776 = vmatprep.mubr.bf16.mxu0 0
        %3777 = vmatmul.mubr.bf16.gmra.mrb[0].mxu0 %v3676
        %v3778 = vpop.f32.mrb[0].mxu0
        %v3779 = vpop.f32.mrb[0].mxu0
        %v3780 = vpop.f32.mrb[0].mxu0
        %v3781 = vpop.f32.mrb[0].mxu0
        %3782 = vdwg.mxu0
        %s3783 = scalar_lea.vmem [#allocation5], 1408
        %v3784 = vld [vmem:[%s3783] sm:$0xf]
        %v3785 = vld [vmem:[%s3783 + $0x4] sm:$0xf]
        %v3786 = vld [vmem:[%s3783 + $0x8] sm:$0xf]
        %v3787 = vld [vmem:[%s3783 + $0xc] sm:$0xf]
        %v3788 = vld [vmem:[%s3783 + $0x10] sm:$0xf]
        %v3789 = vld [vmem:[%s3783 + $0x14] sm:$0xf]
        %v3790 = vld [vmem:[%s3783 + $0x18] sm:$0xf]
        %v3791 = vld [vmem:[%s3783 + $0x1c] sm:$0xf]
        %v3792 = vld [vmem:[%s3783 + $0x20] sm:$0xf]
        %v3793 = vld [vmem:[%s3783 + $0x24] sm:$0xf]
        %v3794 = vld [vmem:[%s3783 + $0x28] sm:$0xf]
        %v3795 = vld [vmem:[%s3783 + $0x2c] sm:$0xf]
        %v3796 = vld [vmem:[%s3783 + $0x30] sm:$0xf]
        %v3797 = vld [vmem:[%s3783 + $0x34] sm:$0xf]
        %v3798 = vld [vmem:[%s3783 + $0x38] sm:$0xf]
        %v3799 = vld [vmem:[%s3783 + $0x3c] sm:$0xf]
        %v3800 = vpack.c.b16 %v3532, %v3531
        %v3801 = vpack.c.b16 %v3534, %v3533
        %v3802 = vpack.c.b16 %v3535, %v3535
        %v3822 = vunpack.c.l.b16 %v3784
        %v3823 = vunpack.c.l.b16 %v3785
        %v3824 = vunpack.c.l.b16 %v3786
        %v3825 = vunpack.c.l.b16 %v3787
        %v3826 = vunpack.c.l.b16 %v3788
        %v3827 = vunpack.c.l.b16 %v3789
        %v3828 = vunpack.c.l.b16 %v3790
        %v3829 = vunpack.c.l.b16 %v3791
        %v3830 = vunpack.c.l.b16 %v3792
        %v3831 = vunpack.c.l.b16 %v3793
        %v3832 = vunpack.c.l.b16 %v3794
        %v3833 = vunpack.c.l.b16 %v3795
        %v3834 = vunpack.c.l.b16 %v3796
        %v3835 = vunpack.c.l.b16 %v3797
        %v3836 = vunpack.c.l.b16 %v3798
        %v3837 = vunpack.c.l.b16 %v3799
        %v3838 = vpack.c.b16 %v3823, %v3822
        %v3839 = vpack.c.b16 %v3825, %v3824
        %v3840 = vpack.c.b16 %v3827, %v3826
        %v3841 = vpack.c.b16 %v3829, %v3828
        %v3842 = vpack.c.b16 %v3831, %v3830
        %v3843 = vpack.c.b16 %v3833, %v3832
        %v3844 = vpack.c.b16 %v3835, %v3834
        %v3845 = vpack.c.b16 %v3837, %v3836
        %3854 = vmatprep.subr.bf16.mxu0 0
        %3855 = vmatpush1.bf16.msra.mxu0 %v3838
        %3856 = vmatprep.subr.bf16.mxu0 0
        %3857 = vmatpush1.bf16.msra.mxu0 %v3839
        %3858 = vmatprep.subr.bf16.mxu0 0
        %3859 = vmatpush1.bf16.msra.mxu0 %v3840
        %3860 = vmatprep.subr.bf16.mxu0 0
        %3861 = vmatpush1.bf16.msra.mxu0 %v3841
        %3862 = vmatprep.subr.bf16.mxu0 0
        %3863 = vmatpush1.bf16.msra.mxu0 %v3842
        %3864 = vmatprep.subr.bf16.mxu0 0
        %3865 = vmatpush1.bf16.msra.mxu0 %v3843
        %3866 = vmatprep.subr.bf16.mxu0 0
        %3867 = vmatpush1.bf16.msra.mxu0 %v3844
        %3868 = vmatprep.subr.bf16.mxu0 0
        %3869 = vmatpush1.bf16.msra.mxu0 %v3845
        %3870 = vmatprep.subr.bf16.mxu0 0
        %3871 = vmatpush1.bf16.msra.mxu0 0
        %3872 = vmatprep.subr.bf16.mxu0 0
        %3873 = vmatpush1.bf16.msra.mxu0 0
        %3874 = vmatprep.subr.bf16.mxu0 0
        %3875 = vmatpush1.bf16.msra.mxu0 0
        %3876 = vmatprep.subr.bf16.mxu0 0
        %3877 = vmatpush1.bf16.msra.mxu0 0
        %3878 = vmatprep.subr.bf16.mxu0 0
        %3879 = vmatpush1.bf16.msra.mxu0 0
        %3880 = vmatprep.subr.bf16.mxu0 0
        %3881 = vmatpush1.bf16.msra.mxu0 0
        %3882 = vmatprep.subr.bf16.mxu0 0
        %3883 = vmatpush1.bf16.msra.mxu0 0
        %3884 = vmatprep.subr.bf16.mxu0 0
        %3885 = vmatpush1.bf16.msra.mxu0 0
        %3886 = vmatprep.mubr.bf16.mxu0 0
        %3887 = vmatmul.mubr.bf16.gmra.mrb[0].mxu0 %v3800
        %v3888 = vpop.f32.mrb[0].mxu0
        %v3889 = vpop.f32.mrb[0].mxu0
        %v3890 = vpop.f32.mrb[0].mxu0
        %v3891 = vadd.f32 0.0, %v3890
        %v3892 = vpop.f32.mrb[0].mxu0
        %3893 = vmatprep.mubr.bf16.mxu0 0
        %3894 = vmatmul.mubr.bf16.gmra.mrb[0].mxu0 %v3801
        %v3895 = vpop.f32.mrb[0].mxu0
        %v3896 = vadd.f32 0.0, %v3895
        %v3897 = vpop.f32.mrb[0].mxu0
        %v3898 = vpop.f32.mrb[0].mxu0
        %v3899 = vadd.f32 0.0, %v3898
        %v3900 = vpop.f32.mrb[0].mxu0
        %3901 = vmatprep.mubr.bf16.mxu0 0
        %3902 = vmatmul.mubr.bf16.gmra.mrb[0].mxu0 %v3802
        %v3903 = vpop.f32.mrb[0].mxu0
        %v3904 = vpop.f32.mrb[0].mxu0
        %v3905 = vpop.f32.mrb[0].mxu0
        %v3906 = vpop.f32.mrb[0].mxu0
        %3907 = vdwg.mxu0
        %v3908 = vadd.f32 %v3766, %v3891
        %v3909 = vadd.f32 %v3771, %v3896
        %v3910 = vadd.f32 %v3774, %v3899
        %v3911 = vld [vmem:[#allocation2 + $0x4] sm:$0xf]
        %v3912 = vld [vmem:[#allocation2 + $0x8] sm:$0xf]
        %v3913 = vld [vmem:[#allocation2 + $0xc] sm:$0xf]
        %v3914 = vld [vmem:[#allocation2 + $0x10] sm:$0xf]
        %v3915 = vld [vmem:[#allocation2 + $0x14] sm:$0xf]
        %v3916 = vld [vmem:[#allocation2 + $0x18] sm:$0x1]
        %s3917 = scalar_lea.vmem [#allocation5], 1472
        %v3918 = vld [vmem:[%s3917] sm:$0xf]
        %v3919 = vld [vmem:[%s3917 + $0x4] sm:$0xf]
        %v3920 = vld [vmem:[%s3917 + $0x8] sm:$0xf]
        %v3921 = vld [vmem:[%s3917 + $0xc] sm:$0xf]
        %v3922 = vld [vmem:[%s3917 + $0x10] sm:$0xf]
        %v3923 = vld [vmem:[%s3917 + $0x14] sm:$0xf]
        %v3924 = vld [vmem:[%s3917 + $0x18] sm:$0xf]
        %v3925 = vld [vmem:[%s3917 + $0x1c] sm:$0xf]
        %v3926 = vld [vmem:[%s3917 + $0x20] sm:$0xf]
        %v3927 = vld [vmem:[%s3917 + $0x24] sm:$0xf]
        %v3928 = vld [vmem:[%s3917 + $0x28] sm:$0xf]
        %v3929 = vld [vmem:[%s3917 + $0x2c] sm:$0xf]
        %v3930 = vld [vmem:[%s3917 + $0x30] sm:$0xf]
        %v3931 = vld [vmem:[%s3917 + $0x34] sm:$0xf]
        %v3932 = vld [vmem:[%s3917 + $0x38] sm:$0xf]
        %v3933 = vld [vmem:[%s3917 + $0x3c] sm:$0xf]
        %v3940 = vunpack.c.l.b16 %v3911
        %v3941 = vunpack.c.l.b16 %v3912
        %v3942 = vunpack.c.l.b16 %v3913
        %v3943 = vunpack.c.l.b16 %v3914
        %v3944 = vunpack.c.l.b16 %v3915
        %v3945 = vunpack.c.l.b16 %v3916
        %v3946 = vpack.c.b16 %v3941, %v3940
        %v3947 = vpack.c.b16 %v3943, %v3942
        %v3948 = vpack.c.b16 %v3945, %v3944
        %v3950 = vshrl.u32 %v3946, 16
        %v3952 = vshll.u32 %v3946, 16
        %v3954 = vrot.slane %v3952, 1
        %v3955 = vor.u32 %v3950, %v3954
        %v3957 = vshll.u32 %v3947, 16
        %v3959 = vrot.slane %v3957, 1
        %v3960 = vsel %vm711, %v3955, %v3959
        %v3961 = vshrl.u32 %v3947, 16
        %v3963 = vor.u32 %v3961, %v3959
        %v3965 = vshll.u32 %v3948, 16
        %v3967 = vrot.slane %v3965, 1
        %v3968 = vsel %vm711, %v3963, %v3967
        %v3969 = vshrl.u32 %v3948, 16
        %v3971 = vor.u32 %v3969, %v3967
        %v3991 = vunpack.c.l.b16 %v3918
        %v3992 = vunpack.c.l.b16 %v3919
        %v3993 = vunpack.c.l.b16 %v3920
        %v3994 = vunpack.c.l.b16 %v3921
        %v3995 = vunpack.c.l.b16 %v3922
        %v3996 = vunpack.c.l.b16 %v3923
        %v3997 = vunpack.c.l.b16 %v3924
        %v3998 = vunpack.c.l.b16 %v3925
        %v3999 = vunpack.c.l.b16 %v3926
        %v4000 = vunpack.c.l.b16 %v3927
        %v4001 = vunpack.c.l.b16 %v3928
        %v4002 = vunpack.c.l.b16 %v3929
        %v4003 = vunpack.c.l.b16 %v3930
        %v4004 = vunpack.c.l.b16 %v3931
        %v4005 = vunpack.c.l.b16 %v3932
        %v4006 = vunpack.c.l.b16 %v3933
        %v4007 = vpack.c.b16 %v3992, %v3991
        %v4008 = vpack.c.b16 %v3994, %v3993
        %v4009 = vpack.c.b16 %v3996, %v3995
        %v4010 = vpack.c.b16 %v3998, %v3997
        %v4011 = vpack.c.b16 %v4000, %v3999
        %v4012 = vpack.c.b16 %v4002, %v4001
        %v4013 = vpack.c.b16 %v4004, %v4003
        %v4014 = vpack.c.b16 %v4006, %v4005
        %4023 = vmatprep.subr.bf16.mxu0 0
        %4024 = vmatpush1.bf16.msra.mxu0 %v4007
        %4025 = vmatprep.subr.bf16.mxu0 0
        %4026 = vmatpush1.bf16.msra.mxu0 %v4008
        %4027 = vmatprep.subr.bf16.mxu0 0
        %4028 = vmatpush1.bf16.msra.mxu0 %v4009
        %4029 = vmatprep.subr.bf16.mxu0 0
        %4030 = vmatpush1.bf16.msra.mxu0 %v4010
        %4031 = vmatprep.subr.bf16.mxu0 0
        %4032 = vmatpush1.bf16.msra.mxu0 %v4011
        %4033 = vmatprep.subr.bf16.mxu0 0
        %4034 = vmatpush1.bf16.msra.mxu0 %v4012
        %4035 = vmatprep.subr.bf16.mxu0 0
        %4036 = vmatpush1.bf16.msra.mxu0 %v4013
        %4037 = vmatprep.subr.bf16.mxu0 0
        %4038 = vmatpush1.bf16.msra.mxu0 %v4014
        %4039 = vmatprep.subr.bf16.mxu0 0
        %4040 = vmatpush1.bf16.msra.mxu0 0
        %4041 = vmatprep.subr.bf16.mxu0 0
        %4042 = vmatpush1.bf16.msra.mxu0 0
        %4043 = vmatprep.subr.bf16.mxu0 0
        %4044 = vmatpush1.bf16.msra.mxu0 0
        %4045 = vmatprep.subr.bf16.mxu0 0
        %4046 = vmatpush1.bf16.msra.mxu0 0
        %4047 = vmatprep.subr.bf16.mxu0 0
        %4048 = vmatpush1.bf16.msra.mxu0 0
        %4049 = vmatprep.subr.bf16.mxu0 0
        %4050 = vmatpush1.bf16.msra.mxu0 0
        %4051 = vmatprep.subr.bf16.mxu0 0
        %4052 = vmatpush1.bf16.msra.mxu0 0
        %4053 = vmatprep.subr.bf16.mxu0 0
        %4054 = vmatpush1.bf16.msra.mxu0 0
        %4055 = vmatprep.mubr.bf16.mxu0 0
        %4056 = vmatmul.mubr.bf16.gmra.mrb[0].mxu0 %v3960
        %v4057 = vpop.f32.mrb[0].mxu0
        %v4058 = vpop.f32.mrb[0].mxu0
        %v4059 = vpop.f32.mrb[0].mxu0
        %v4060 = vadd.f32 0.0, %v4059
        %v4061 = vpop.f32.mrb[0].mxu0
        %4062 = vmatprep.mubr.bf16.mxu0 0
        %4063 = vmatmul.mubr.bf16.gmra.mrb[0].mxu0 %v3968
        %v4064 = vpop.f32.mrb[0].mxu0
        %v4065 = vadd.f32 0.0, %v4064
        %v4066 = vpop.f32.mrb[0].mxu0
        %v4067 = vpop.f32.mrb[0].mxu0
        %v4068 = vadd.f32 0.0, %v4067
        %v4069 = vpop.f32.mrb[0].mxu0
        %4070 = vmatprep.mubr.bf16.mxu0 0
        %4071 = vmatmul.mubr.bf16.gmra.mrb[0].mxu0 %v3971
        %v4072 = vpop.f32.mrb[0].mxu0
        %v4073 = vpop.f32.mrb[0].mxu0
        %v4074 = vpop.f32.mrb[0].mxu0
        %v4075 = vpop.f32.mrb[0].mxu0
        %4076 = vdwg.mxu0
        %v4077 = vadd.f32 %v3908, %v4060
        %v4078 = vadd.f32 %v3909, %v4065
        %v4079 = vadd.f32 %v3910, %v4068
        %v4080 = vld [vmem:[#allocation2 + $0x4] sm:$0xe]
        %s4081 = scalar_lea.vmem [#allocation5], 1536
        %v4082 = vld [vmem:[%s4081] sm:$0xf]
        %v4083 = vld [vmem:[%s4081 + $0x4] sm:$0xf]
        %v4084 = vld [vmem:[%s4081 + $0x8] sm:$0xf]
        %v4085 = vld [vmem:[%s4081 + $0xc] sm:$0xf]
        %v4086 = vld [vmem:[%s4081 + $0x10] sm:$0xf]
        %v4087 = vld [vmem:[%s4081 + $0x14] sm:$0xf]
        %v4088 = vld [vmem:[%s4081 + $0x18] sm:$0xf]
        %v4089 = vld [vmem:[%s4081 + $0x1c] sm:$0xf]
        %v4090 = vld [vmem:[%s4081 + $0x20] sm:$0xf]
        %v4091 = vld [vmem:[%s4081 + $0x24] sm:$0xf]
        %v4092 = vld [vmem:[%s4081 + $0x28] sm:$0xf]
        %v4093 = vld [vmem:[%s4081 + $0x2c] sm:$0xf]
        %v4094 = vld [vmem:[%s4081 + $0x30] sm:$0xf]
        %v4095 = vld [vmem:[%s4081 + $0x34] sm:$0xf]
        %v4096 = vld [vmem:[%s4081 + $0x38] sm:$0xf]
        %v4097 = vld [vmem:[%s4081 + $0x3c] sm:$0xf]
        %v4099 = vunpack.c.l.b16 %v4080
        %v4100 = vpack.c.b16 %v3941, %v4099
        %v4101 = vrot.slane %v4100, 1
        %v4102 = vrot.slane %v3947, 1
        %v4103 = vsel %vm868, %v4101, %v4102
        %v4104 = vrot.slane %v3948, 1
        %v4105 = vsel %vm868, %v4102, %v4104
        %v4125 = vunpack.c.l.b16 %v4082
        %v4126 = vunpack.c.l.b16 %v4083
        %v4127 = vunpack.c.l.b16 %v4084
        %v4128 = vunpack.c.l.b16 %v4085
        %v4129 = vunpack.c.l.b16 %v4086
        %v4130 = vunpack.c.l.b16 %v4087
        %v4131 = vunpack.c.l.b16 %v4088
        %v4132 = vunpack.c.l.b16 %v4089
        %v4133 = vunpack.c.l.b16 %v4090
        %v4134 = vunpack.c.l.b16 %v4091
        %v4135 = vunpack.c.l.b16 %v4092
        %v4136 = vunpack.c.l.b16 %v4093
        %v4137 = vunpack.c.l.b16 %v4094
        %v4138 = vunpack.c.l.b16 %v4095
        %v4139 = vunpack.c.l.b16 %v4096
        %v4140 = vunpack.c.l.b16 %v4097
        %v4141 = vpack.c.b16 %v4126, %v4125
        %v4142 = vpack.c.b16 %v4128, %v4127
        %v4143 = vpack.c.b16 %v4130, %v4129
        %v4144 = vpack.c.b16 %v4132, %v4131
        %v4145 = vpack.c.b16 %v4134, %v4133
        %v4146 = vpack.c.b16 %v4136, %v4135
        %v4147 = vpack.c.b16 %v4138, %v4137
        %v4148 = vpack.c.b16 %v4140, %v4139
        %4157 = vmatprep.subr.bf16.mxu0 0
        %4158 = vmatpush1.bf16.msra.mxu0 %v4141
        %4159 = vmatprep.subr.bf16.mxu0 0
        %4160 = vmatpush1.bf16.msra.mxu0 %v4142
        %4161 = vmatprep.subr.bf16.mxu0 0
        %4162 = vmatpush1.bf16.msra.mxu0 %v4143
        %4163 = vmatprep.subr.bf16.mxu0 0
        %4164 = vmatpush1.bf16.msra.mxu0 %v4144
        %4165 = vmatprep.subr.bf16.mxu0 0
        %4166 = vmatpush1.bf16.msra.mxu0 %v4145
        %4167 = vmatprep.subr.bf16.mxu0 0
        %4168 = vmatpush1.bf16.msra.mxu0 %v4146
        %4169 = vmatprep.subr.bf16.mxu0 0
        %4170 = vmatpush1.bf16.msra.mxu0 %v4147
        %4171 = vmatprep.subr.bf16.mxu0 0
        %4172 = vmatpush1.bf16.msra.mxu0 %v4148
        %4173 = vmatprep.subr.bf16.mxu0 0
        %4174 = vmatpush1.bf16.msra.mxu0 0
        %4175 = vmatprep.subr.bf16.mxu0 0
        %4176 = vmatpush1.bf16.msra.mxu0 0
        %4177 = vmatprep.subr.bf16.mxu0 0
        %4178 = vmatpush1.bf16.msra.mxu0 0
        %4179 = vmatprep.subr.bf16.mxu0 0
        %4180 = vmatpush1.bf16.msra.mxu0 0
        %4181 = vmatprep.subr.bf16.mxu0 0
        %4182 = vmatpush1.bf16.msra.mxu0 0
        %4183 = vmatprep.subr.bf16.mxu0 0
        %4184 = vmatpush1.bf16.msra.mxu0 0
        %4185 = vmatprep.subr.bf16.mxu0 0
        %4186 = vmatpush1.bf16.msra.mxu0 0
        %4187 = vmatprep.subr.bf16.mxu0 0
        %4188 = vmatpush1.bf16.msra.mxu0 0
        %4189 = vmatprep.mubr.bf16.mxu0 0
        %4190 = vmatmul.mubr.bf16.gmra.mrb[0].mxu0 %v4103
        %v4191 = vpop.f32.mrb[0].mxu0
        %v4192 = vpop.f32.mrb[0].mxu0
        %v4193 = vpop.f32.mrb[0].mxu0
        %v4194 = vadd.f32 0.0, %v4193
        %v4195 = vpop.f32.mrb[0].mxu0
        %4196 = vmatprep.mubr.bf16.mxu0 0
        %4197 = vmatmul.mubr.bf16.gmra.mrb[0].mxu0 %v4105
        %v4198 = vpop.f32.mrb[0].mxu0
        %v4199 = vadd.f32 0.0, %v4198
        %v4200 = vpop.f32.mrb[0].mxu0
        %v4201 = vpop.f32.mrb[0].mxu0
        %v4202 = vadd.f32 0.0, %v4201
        %v4203 = vpop.f32.mrb[0].mxu0
        %4204 = vmatprep.mubr.bf16.mxu0 0
        %4205 = vmatmul.mubr.bf16.gmra.mrb[0].mxu0 %v4104
        %v4206 = vpop.f32.mrb[0].mxu0
        %v4207 = vpop.f32.mrb[0].mxu0
        %v4208 = vpop.f32.mrb[0].mxu0
        %v4209 = vpop.f32.mrb[0].mxu0
        %4210 = vdwg.mxu0
        %v4211 = vadd.f32 %v4077, %v4194
        %v4212 = vadd.f32 %v4078, %v4199
        %v4213 = vadd.f32 %v4079, %v4202
        %s4214 = scalar_lea.vmem %s2, 4
        %v4215 = vld [vmem:[%s4214] sm:$0x1]
        %v4217 = vlaneseq
        %v4218 = vshrl.u32 %v4217, 7
        %v4219 = vsub.s32 0, %v4218
        %v4220 = vrot.slane %v4215, %v4219
        %v4222 = vmul.f32 %v4211, %v4220
        %v4223 = vmul.f32 %v4212, %v4220
        %v4224 = vmul.f32 %v4213, %v4220
        %s4225 = scalar_lea.vmem %s3, 4
        %v4226 = vld [vmem:[%s4225] sm:$0x1]
        %v4228 = vlaneseq
        %v4229 = vshrl.u32 %v4228, 7
        %v4230 = vsub.s32 0, %v4229
        %v4231 = vrot.slane %v4226, %v4230
        %v4233 = vadd.f32 %v4222, %v4231
        %v4234 = vadd.f32 %v4223, %v4231
        %v4235 = vadd.f32 %v4224, %v4231
        %4236 = vst [vmem:[%s178 - $0x4] sm:$0xf0] %v4233
        %4237 = vst [vmem:[%s178 + $0x4] sm:$0xff] %v4234
        %4238 = vst [vmem:[%s178 + $0xc] sm:$0xf] %v4235
        %s4239 = sand.u32 %s104, 1
        %s4240 = scalar_lea.sflag [#allocation7], %s4239
        %s4241 = sand.u32 %s104, 1
        %s4242 = smul.addr %s4241, 16
        %s4243 = scalar_lea.vmem [#allocation8], %s4242
        // Predicated region
        $region41: #{tpu_custom_call.1} parent=31 // pred_check
          %p4244 = pneg %p114
        $region42: #{tpu_custom_call.1} parent=31 // pred_check_branch
          %4246 = sbr.rel (%p4244) target = $region44
        $region43: #{tpu_custom_call.1} parent=31 // pred_region
          %s4247 = smul.u32 2, %s24
          %s4249 = ssub.s32 256, 256
          %4250 = vsyncadd %s4240, %s4249
          %s4251 = smul.addr %s23, 6
          %s4252 = sadd.s32 %s4247, %s4251
          %s4253 = smul.addr %s4252, 128
          %s4254 = scalar_lea.hbm %s4, %s4253
          %s4255 = sshll.u32 %s4243, 4
          %s4256 = int_to_ptr.vmem [resolvable:$true] %s4255
          %4261 = dma.vmem_to_hbm [thread:$0]  %s4256, 256, %s4254, %s4240, 128, 128, 8
        $region44: #{tpu_custom_call.1} parent=31 // pred_fallthru
          _
      $region32: #{tpu_custom_call.1} parent=5 // pred_fallthru
        _
      %p4262 = scmp.le.s32.totalorder 2, %s14
      // Predicated region
      $region45: #{tpu_custom_call.1} parent=5 // pred_check
        %p4263 = pneg %p4262
      $region46: #{tpu_custom_call.1} parent=5 // pred_check_branch
        %4265 = sbr.rel (%p4263) target = $region48
      $region47: #{tpu_custom_call.1} parent=5 // pred_region
        %s4266 = ssub.s32 %s14, 2
        // Predicated region
        $region49: #{tpu_custom_call.1} parent=47 // pred_check
          %p4267 = pneg %p120
        $region50: #{tpu_custom_call.1} parent=47 // pred_check_branch
          %4269 = sbr.rel (%p4267) target = $region52
        $region51: #{tpu_custom_call.1} parent=47 // pred_region
          %s4270 = sand.u32 %s105, 1
          %s4271 = scalar_lea.sflag [#allocation7], %s4270
          %s4272 = sand.u32 %s105, 1
          %s4273 = smul.addr %s4272, 16
          %s4274 = scalar_lea.vmem [#allocation8], %s4273
          %4275 = dma.done %s4271, 256
        $region52: #{tpu_custom_call.1} parent=47 // pred_fallthru
          _
      $region48: #{tpu_custom_call.1} parent=5 // pred_fallthru
        _
    $region6: #{tpu_custom_call.1} parent=1 // loop_footer
      %s18 = sadd.s32 1, %s14
    $region7: #{tpu_custom_call.1} parent=1 // loop_footer_branch
      %13 = sbr.rel target = $region3
    $region8: #{tpu_custom_call.1} parent=1 // loop_exit
      _
    %4276 = vsyncpa [#allocation6], 1
    %s4277 = scalar_lea.sflag [#allocation6], 1
    %4278 = vsyncpa %s4277, 1
    %4279 = vsyncpa [#allocation7], 1
    %s4280 = scalar_lea.sflag [#allocation7], 1
    %4281 = vsyncpa %s4280, 1
  %4282 = vsyncmov [#allocation4]
  %s4283 = vpop.sfrf %4282
  %p4284 = scmp.eq.s32.totalorder %s4283, 0
  %p4285 = pneg %p4284
  %4287 = shalt.err (%p4285)

</llo_original>
